<compile_context>
chip_gen: v6e
topology: v6e:2x2x1
jax: 0.10.0
libtpu: 0.0.40
codegen_flags: <defaults>
</compile_context>

<pallas_src>
import functools

import jax
import jax.numpy as jnp
from jax import lax
from jax.experimental import pallas as pl
from jax.experimental.pallas import tpu as pltpu
import numpy as np

_BN_EPS = 1e-5


# --------------------------------------------------------------------------
# Fused kernel: whole dual_path_doubleconv forward for one batch element
# --------------------------------------------------------------------------
def _fused_kernel(x_ref, convw_ref, convb_ref, wf_ref, bf_ref, ws_ref, bs_ref,
                  o_ref, pad_ref, col_ref, *, H, W, t):
    # x_ref:     (1, C, H*W)        input activation, lane-dense
    # convw_ref: (4, C, 9*C)        BN-folded im2col weights [conv1, conv2, cr1, cr2]
    # convb_ref: (4, C, 1)          BN-folded biases
    # wf_ref:    (C, 2*C)           1x1 fuse conv weight (acts on [path1; path2])
    # bf_ref:    (C, 1)
    # ws_ref:    (C, C)             1x1 self conv weight
    # bs_ref:    (C, 1)
    # o_ref:     (1, C, H*W)
    # pad_ref:   VMEM (C, H*W + 2*margin) flat zero-margined activation buffer
    # col_ref:   VMEM (9*C, H*W)          im2col matrix
    C = x_ref.shape[1]
    HW = H * W
    margin = (pad_ref.shape[1] - HW) // 2     # lane-aligned halo margin (>= W+1)

    # Zero the flat pad buffer once; the interior is rewritten every conv step,
    # the margins stay zero for the whole kernel.
    pad_ref[...] = jnp.zeros_like(pad_ref)

    # Column masks for the horizontal (dx = +/-1) taps; computed once, reused 8x.
    col_idx = lax.broadcasted_iota(jnp.int32, (1, HW), 1) % W
    mask_l = (col_idx >= 1).astype(jnp.float32)        # dx = -1 invalid at w == 0
    mask_r = (col_idx <= W - 2).astype(jnp.float32)    # dx = +1 invalid at w == W-1
    masks = {-1: mask_l, 0: None, 1: mask_r}

    def conv_bn_relu(act, idx):
        # act: (C, H*W) lane-dense activation; idx: static weight slot.
        pad_ref[:, margin:margin + HW] = act           # lane-aligned interior store
        for k in range(9):                             # build im2col (9*C, H*W)
            dym1, dxm1 = k // 3 - 1, k % 3 - 1
            off = margin + dym1 * W + dxm1             # static lane offset
            tap = pad_ref[:, off:off + HW]
            m = masks[dxm1]
            if m is not None:
                tap = tap * m
            col_ref[k * C:(k + 1) * C, :] = tap
        y = jnp.dot(convw_ref[idx], col_ref[...],      # single K = 9*C matmul
                    preferred_element_type=jnp.float32) + convb_ref[idx]
        return jnp.maximum(y, 0.0)

    x0 = x_ref[0]                                      # (C, H*W)

    # path 1: conv1 -> conv2
    h1 = conv_bn_relu(x0, 0)
    p1 = conv_bn_relu(h1, 1)

    # path 2: RecurrentConvLayer(cr1) then RecurrentConvLayer(cr2), t steps each
    q = x0
    for _ in range(t):
        q = conv_bn_relu(q, 2)
    for _ in range(t):
        q = conv_bn_relu(q, 3)
    p2 = q

    # fuse: relu(1x1(concat([p1, p2], channel))) + 1x1_self(x)
    # TODO(synk): reference `torch.concat(x_path1, x_path2)` is an invalid call;
    # interpreted as channel concat (matches _1conv's 2*out_channels input).
    col_ref[0:C, :] = p1
    col_ref[C:2 * C, :] = p2                           # (2C, H*W) slab -> one matmul
    y = jnp.dot(wf_ref[...], col_ref[0:2 * C, :],
                preferred_element_type=jnp.float32) + bf_ref[...]
    y = jnp.maximum(y, 0.0)
    s = jnp.dot(ws_ref[...], x0, preferred_element_type=jnp.float32) + bs_ref[...]
    o_ref[0] = y + s


def dual_path_doubleconv_forward(x_nchw, kp, *, t=3):
    """x_nchw: (N, C, H, W) f32 (PyTorch layout). kp: packed kernel params."""
    N, C, H, W = x_nchw.shape
    HW = H * W
    margin = ((W + 1 + 127) // 128) * 128     # lane-aligned halo margin
    x_flat = x_nchw.reshape(N, C, HW)         # lane-dense (last dim multiple of 128)

    kernel = functools.partial(_fused_kernel, H=H, W=W, t=t)
    out_flat = pl.pallas_call(
        kernel,
        out_shape=jax.ShapeDtypeStruct((N, C, HW), jnp.float32),
        grid=(N,),
        in_specs=[
            pl.BlockSpec((1, C, HW), lambda n: (n, 0, 0)),
            pl.BlockSpec((4, C, 9 * C), lambda n: (0, 0, 0)),
            pl.BlockSpec((4, C, 1), lambda n: (0, 0, 0)),
            pl.BlockSpec((C, 2 * C), lambda n: (0, 0)),
            pl.BlockSpec((C, 1), lambda n: (0, 0)),
            pl.BlockSpec((C, C), lambda n: (0, 0)),
            pl.BlockSpec((C, 1), lambda n: (0, 0)),
        ],
        out_specs=pl.BlockSpec((1, C, HW), lambda n: (n, 0, 0)),
        scratch_shapes=[
            pltpu.VMEM((C, HW + 2 * margin), jnp.float32),   # flat padded activation
            pltpu.VMEM((9 * C, HW), jnp.float32),            # im2col matrix
        ],
        compiler_params=pltpu.CompilerParams(dimension_semantics=("parallel",)),
    )(x_flat, kp["convw"], kp["convb"], kp["wf"], kp["bf"], kp["ws"], kp["bs"])
    # TODO(synk): for large H/W/C, add an H-strip grid axis (halo=1 row) and set
    # vmem_limit_bytes explicitly instead of one whole image per grid step.
    return out_flat.reshape(N, C, H, W)


# --------------------------------------------------------------------------
# Parameters: raw (PyTorch-style) params + host-side packing for the kernel
# --------------------------------------------------------------------------
def init_params(key, cin, cmid, cout):
    kit = iter(jax.random.split(key, 40))     # generous: 26 draws needed
    nrm = lambda shp: 0.1 * jax.random.normal(next(kit), shp, jnp.float32)
    unif = lambda shp: jax.random.uniform(next(kit), shp, jnp.float32, 0.5, 1.5)
    bn = lambda c: {"gamma": unif((c,)), "beta": nrm((c,)),
                    "mean": nrm((c,)), "var": unif((c,))}
    return {
        # conv1: 3x3 (cin->cmid, no bias) + BN
        "conv1_w": nrm((cmid, cin, 3, 3)), "bn1": bn(cmid),
        # conv2: 3x3 (cmid->cout, no bias) + BN
        "conv2_w": nrm((cout, cmid, 3, 3)), "bn2": bn(cout),
        # cr_conv1: 3x3 (cin->cmid, bias) + BN, applied t times
        "cr1_w": nrm((cmid, cin, 3, 3)), "cr1_b": nrm((cmid,)), "bn_cr1": bn(cmid),
        # cr_conv2: 3x3 (cmid->cout, bias) + BN, applied t times
        "cr2_w": nrm((cout, cmid, 3, 3)), "cr2_b": nrm((cout,)), "bn_cr2": bn(cout),
        # _1conv: 1x1 (2*cout -> cout, bias)
        "w1": nrm((cout, 2 * cout)), "b1": nrm((cout,)),
        # _1xselfconv: 1x1 (cin -> cout, bias)
        "wself": nrm((cout, cin)), "bself": nrm((cout,)),
    }


def _fold_bn(gamma, beta, mean, var, conv_bias=None):
    s = gamma / jnp.sqrt(var + _BN_EPS)
    b = beta - mean * s
    if conv_bias is not None:
        b = b + conv_bias * s
    return s, b


def _im2col_weight(w_oihw):
    # (O, I, 3, 3) -> (O, 9*I), column order (dy, dx, ci) matching the kernel taps.
    o = w_oihw.shape[0]
    return jnp.transpose(w_oihw, (0, 2, 3, 1)).reshape(o, -1)


def pack_params(p):
    def fold_conv(w_oihw, bnd, conv_b=None):
        s, b = _fold_bn(bnd["gamma"], bnd["beta"], bnd["mean"], bnd["var"], conv_b)
        return _im2col_weight(w_oihw) * s[:, None], b[:, None]

    w1f, b1f = fold_conv(p["conv1_w"], p["bn1"])
    w2f, b2f = fold_conv(p["conv2_w"], p["bn2"])
    wr1f, br1f = fold_conv(p["cr1_w"], p["bn_cr1"], p["cr1_b"])
    wr2f, br2f = fold_conv(p["cr2_w"], p["bn_cr2"], p["cr2_b"])
    assert w1f.shape == w2f.shape == wr1f.shape == wr2f.shape, \
        "RecurrentConvLayer reuse requires in == mid == out channels"
    return {
        "convw": jnp.stack([w1f, w2f, wr1f, wr2f]),   # (4, C, 9*C)
        "convb": jnp.stack([b1f, b2f, br1f, br2f]),   # (4, C, 1)
        "wf": p["w1"], "bf": p["b1"][:, None],
        "ws": p["wself"], "bs": p["bself"][:, None],
    }


# --------------------------------------------------------------------------
# Pure-JAX reference (unfolded BN, lax.conv) for verification
# --------------------------------------------------------------------------
def _ref_conv_bn_relu(x, w_oihw, bnd, conv_b=None):
    y = lax.conv_general_dilated(x, w_oihw, (1, 1), "SAME",
                                 dimension_numbers=("NCHW", "OIHW", "NCHW"))
    if conv_b is not None:
        y = y + conv_b[None, :, None, None]
    s = (bnd["gamma"] / jnp.sqrt(bnd["var"] + _BN_EPS))
    y = (y - bnd["mean"][None, :, None, None]) * s[None, :, None, None] \
        + bnd["beta"][None, :, None, None]
    return jnp.maximum(y, 0.0)


def _ref_forward(x, p, t=3):
    h = _ref_conv_bn_relu(x, p["conv1_w"], p["bn1"])
    p1 = _ref_conv_bn_relu(h, p["conv2_w"], p["bn2"])
    q = x
    for _ in range(t):
        q = _ref_conv_bn_relu(q, p["cr1_w"], p["bn_cr1"], p["cr1_b"])
    for _ in range(t):
        q = _ref_conv_bn_relu(q, p["cr2_w"], p["bn_cr2"], p["cr2_b"])
    cat = jnp.concatenate([p1, q], axis=1)
    y = jnp.einsum("oc,nchw->nohw", p["w1"], cat) + p["b1"][None, :, None, None]
    y = jnp.maximum(y, 0.0)
    return y + jnp.einsum("oc,nchw->nohw", p["wself"], x) \
             + p["bself"][None, :, None, None]


if __name__ == "__main__":
    # in_channels == mid_channels == out_channels (required by RecurrentConvLayer reuse)
    N, C, H, W = 2, 4, 16, 16
    key = jax.random.PRNGKey(0)
    kx, kp = jax.random.split(key)
    x = jax.random.normal(kx, (N, C, H, W), jnp.float32)   # NCHW (PyTorch layout)

    raw = init_params(kp, C, C, C)
    packed = pack_params(raw)

    out = dual_path_doubleconv_forward(x, packed)
    out = jax.block_until_ready(out)

    ref = _ref_forward(x, raw)
    np.testing.assert_allclose(np.asarray(out), np.asarray(ref), rtol=1e-4, atol=1e-4)
    assert out.shape == (N, C, H, W)
    print("KERNEL_OK")
</pallas_src>

<mosaic_0001>
module attributes {stable_mosaic.version = 11 : i64} {
  func.func @_fused_kernel(%arg0: i32, %arg1: memref<1x4x256xf32, #tpu.memory_space<vmem>>, %arg2: memref<4x4x36xf32, #tpu.memory_space<vmem>>, %arg3: memref<4x4x1xf32, #tpu.memory_space<vmem>>, %arg4: memref<4x8xf32, #tpu.memory_space<vmem>>, %arg5: memref<4x1xf32, #tpu.memory_space<vmem>>, %arg6: memref<4x4xf32, #tpu.memory_space<vmem>>, %arg7: memref<4x1xf32, #tpu.memory_space<vmem>>, %arg8: memref<1x4x256xf32, #tpu.memory_space<vmem>>, %arg9: memref<4x512xf32, #tpu.memory_space<vmem>>, %arg10: memref<36x256xf32, #tpu.memory_space<vmem>>) attributes {dimension_semantics = [#tpu.dimension_semantics<parallel>], iteration_bounds = array<i64: 2>, scalar_prefetch = 0 : i64, scratch_operands = 2 : i64, tpu.core_type = #tpu.core_type<tc>, window_params = [{transform_indices = @transform_0, window_bounds = array<i64: 1, 4, 256>}, {pipeline_mode = #tpu.pipeline_mode<synchronous>, transform_indices = @transform_1, window_bounds = array<i64: 4, 4, 36>}, {pipeline_mode = #tpu.pipeline_mode<synchronous>, transform_indices = @transform_2, window_bounds = array<i64: 4, 4, 1>}, {pipeline_mode = #tpu.pipeline_mode<synchronous>, transform_indices = @transform_3, window_bounds = array<i64: 4, 8>}, {pipeline_mode = #tpu.pipeline_mode<synchronous>, transform_indices = @transform_4, window_bounds = array<i64: 4, 1>}, {pipeline_mode = #tpu.pipeline_mode<synchronous>, transform_indices = @transform_5, window_bounds = array<i64: 4, 4>}, {pipeline_mode = #tpu.pipeline_mode<synchronous>, transform_indices = @transform_6, window_bounds = array<i64: 4, 1>}, {transform_indices = @transform_7, window_bounds = array<i64: 1, 4, 256>}]} {
    %cst = arith.constant 0.000000e+00 : f32
    %0 = vector.broadcast %cst : f32 to vector<4x512xf32>
    %c0 = arith.constant 0 : index
    %c0_0 = arith.constant 0 : index
    %1 = vector.load %arg9[%c0, %c0_0] : memref<4x512xf32, #tpu.memory_space<vmem>>, vector<4x512xf32>
    tpu.vector_store %arg9[%c0, %c0_0], %0 {strides = array<i32>} : memref<4x512xf32, #tpu.memory_space<vmem>>, vector<4x512xf32>,
    %2 = tpu.iota {dimensions = array<i32: 1>} : vector<1x256xi32>
    %c16_i32 = arith.constant 16 : i32
    %c0_i32 = arith.constant 0 : i32
    %3 = arith.cmpi eq, %c16_i32, %c0_i32 : i32
    %c1_i32 = arith.constant 1 : i32
    %4 = arith.select %3, %c1_i32, %c16_i32 : i32
    %5 = vector.broadcast %4 : i32 to vector<1x256xi32>
    %6 = arith.remsi %2, %5 : vector<1x256xi32>
    %c0_i32_1 = arith.constant 0 : i32
    %7 = vector.broadcast %c0_i32_1 : i32 to vector<1x256xi32>
    %8 = arith.cmpi ne, %6, %7 : vector<1x256xi32>
    %c0_i32_2 = arith.constant 0 : i32
    %9 = vector.broadcast %c0_i32_2 : i32 to vector<1x256xi32>
    %10 = arith.cmpi slt, %6, %9 : vector<1x256xi32>
    %c0_i32_3 = arith.constant 0 : i32
    %11 = arith.cmpi slt, %4, %c0_i32_3 : i32
    %12 = vector.broadcast %11 : i1 to vector<1x256xi1>
    %13 = vector.broadcast %12 : vector<1x256xi1> to vector<1x256xi1>
    %14 = arith.xori %10, %13 : vector<1x256xi1>
    %15 = arith.andi %14, %8 : vector<1x256xi1>
    %16 = vector.broadcast %4 : i32 to vector<1x256xi32>
    %17 = arith.addi %6, %16 : vector<1x256xi32>
    %18 = arith.select %15, %17, %6 : vector<1x256xi1>, vector<1x256xi32>
    %c1_i32_4 = arith.constant 1 : i32
    %19 = vector.broadcast %c1_i32_4 : i32 to vector<1x256xi32>
    %20 = arith.cmpi sge, %18, %19 : vector<1x256xi32>
    %21 = arith.extui %20 : vector<1x256xi1> to vector<1x256xi32>
    %22 = arith.sitofp %21 : vector<1x256xi32> to vector<1x256xf32>
    %c14_i32 = arith.constant 14 : i32
    %23 = vector.broadcast %c14_i32 : i32 to vector<1x256xi32>
    %24 = arith.cmpi sle, %18, %23 : vector<1x256xi32>
    %25 = arith.extui %24 : vector<1x256xi1> to vector<1x256xi32>
    %26 = arith.sitofp %25 : vector<1x256xi32> to vector<1x256xf32>
    %c0_5 = arith.constant 0 : index
    %c0_6 = arith.constant 0 : index
    %c0_7 = arith.constant 0 : index
    %27 = vector.load %arg1[%c0_5, %c0_6, %c0_7] : memref<1x4x256xf32, #tpu.memory_space<vmem>>, vector<1x4x256xf32>
    %28 = vector.shape_cast %27 : vector<1x4x256xf32> to vector<4x256xf32>
    %c0_8 = arith.constant 0 : index
    %c128 = arith.constant 128 : index
    %29 = vector.load %arg9[%c0_8, %c128] : memref<4x512xf32, #tpu.memory_space<vmem>>, vector<4x256xf32>
    tpu.vector_store %arg9[%c0_8, %c128], %28 {strides = array<i32>} : memref<4x512xf32, #tpu.memory_space<vmem>>, vector<4x256xf32>,
    %c0_9 = arith.constant 0 : index
    %c111 = arith.constant 111 : index
    %30 = vector.load %arg9[%c0_9, %c111] : memref<4x512xf32, #tpu.memory_space<vmem>>, vector<4x256xf32>
    %31 = vector.broadcast %22 : vector<1x256xf32> to vector<4x256xf32>
    %32 = arith.mulf %30, %31 : vector<4x256xf32>
    %c0_10 = arith.constant 0 : index
    %c0_11 = arith.constant 0 : index
    %33 = vector.load %arg10[%c0_10, %c0_11] : memref<36x256xf32, #tpu.memory_space<vmem>>, vector<4x256xf32>
    tpu.vector_store %arg10[%c0_10, %c0_11], %32 {strides = array<i32>} : memref<36x256xf32, #tpu.memory_space<vmem>>, vector<4x256xf32>,
    %c0_12 = arith.constant 0 : index
    %c112 = arith.constant 112 : index
    %34 = vector.load %arg9[%c0_12, %c112] : memref<4x512xf32, #tpu.memory_space<vmem>>, vector<4x256xf32>
    %c4 = arith.constant 4 : index
    %c0_13 = arith.constant 0 : index
    %35 = vector.load %arg10[%c4, %c0_13] : memref<36x256xf32, #tpu.memory_space<vmem>>, vector<4x256xf32>
    tpu.vector_store %arg10[%c4, %c0_13], %34 {strides = array<i32>} : memref<36x256xf32, #tpu.memory_space<vmem>>, vector<4x256xf32>,
    %c0_14 = arith.constant 0 : index
    %c113 = arith.constant 113 : index
    %36 = vector.load %arg9[%c0_14, %c113] : memref<4x512xf32, #tpu.memory_space<vmem>>, vector<4x256xf32>
    %37 = vector.broadcast %26 : vector<1x256xf32> to vector<4x256xf32>
    %38 = arith.mulf %36, %37 : vector<4x256xf32>
    %c8 = arith.constant 8 : index
    %c0_15 = arith.constant 0 : index
    %39 = vector.load %arg10[%c8, %c0_15] : memref<36x256xf32, #tpu.memory_space<vmem>>, vector<4x256xf32>
    tpu.vector_store %arg10[%c8, %c0_15], %38 {strides = array<i32>} : memref<36x256xf32, #tpu.memory_space<vmem>>, vector<4x256xf32>,
    %c0_16 = arith.constant 0 : index
    %c127 = arith.constant 127 : index
    %40 = vector.load %arg9[%c0_16, %c127] : memref<4x512xf32, #tpu.memory_space<vmem>>, vector<4x256xf32>
    %41 = vector.broadcast %22 : vector<1x256xf32> to vector<4x256xf32>
    %42 = arith.mulf %40, %41 : vector<4x256xf32>
    %c12 = arith.constant 12 : index
    %c0_17 = arith.constant 0 : index
    %43 = vector.load %arg10[%c12, %c0_17] : memref<36x256xf32, #tpu.memory_space<vmem>>, vector<4x256xf32>
    tpu.vector_store %arg10[%c12, %c0_17], %42 {strides = array<i32>} : memref<36x256xf32, #tpu.memory_space<vmem>>, vector<4x256xf32>,
    %c0_18 = arith.constant 0 : index
    %c128_19 = arith.constant 128 : index
    %44 = vector.load %arg9[%c0_18, %c128_19] : memref<4x512xf32, #tpu.memory_space<vmem>>, vector<4x256xf32>
    %c16 = arith.constant 16 : index
    %c0_20 = arith.constant 0 : index
    %45 = vector.load %arg10[%c16, %c0_20] : memref<36x256xf32, #tpu.memory_space<vmem>>, vector<4x256xf32>
    tpu.vector_store %arg10[%c16, %c0_20], %44 {strides = array<i32>} : memref<36x256xf32, #tpu.memory_space<vmem>>, vector<4x256xf32>,
    %c0_21 = arith.constant 0 : index
    %c129 = arith.constant 129 : index
    %46 = vector.load %arg9[%c0_21, %c129] : memref<4x512xf32, #tpu.memory_space<vmem>>, vector<4x256xf32>
    %47 = vector.broadcast %26 : vector<1x256xf32> to vector<4x256xf32>
    %48 = arith.mulf %46, %47 : vector<4x256xf32>
    %c20 = arith.constant 20 : index
    %c0_22 = arith.constant 0 : index
    %49 = vector.load %arg10[%c20, %c0_22] : memref<36x256xf32, #tpu.memory_space<vmem>>, vector<4x256xf32>
    tpu.vector_store %arg10[%c20, %c0_22], %48 {strides = array<i32>} : memref<36x256xf32, #tpu.memory_space<vmem>>, vector<4x256xf32>,
    %c0_23 = arith.constant 0 : index
    %c143 = arith.constant 143 : index
    %50 = vector.load %arg9[%c0_23, %c143] : memref<4x512xf32, #tpu.memory_space<vmem>>, vector<4x256xf32>
    %51 = vector.broadcast %22 : vector<1x256xf32> to vector<4x256xf32>
    %52 = arith.mulf %50, %51 : vector<4x256xf32>
    %c24 = arith.constant 24 : index
    %c0_24 = arith.constant 0 : index
    %53 = vector.load %arg10[%c24, %c0_24] : memref<36x256xf32, #tpu.memory_space<vmem>>, vector<4x256xf32>
    tpu.vector_store %arg10[%c24, %c0_24], %52 {strides = array<i32>} : memref<36x256xf32, #tpu.memory_space<vmem>>, vector<4x256xf32>,
    %c0_25 = arith.constant 0 : index
    %c144 = arith.constant 144 : index
    %54 = vector.load %arg9[%c0_25, %c144] : memref<4x512xf32, #tpu.memory_space<vmem>>, vector<4x256xf32>
    %c28 = arith.constant 28 : index
    %c0_26 = arith.constant 0 : index
    %55 = vector.load %arg10[%c28, %c0_26] : memref<36x256xf32, #tpu.memory_space<vmem>>, vector<4x256xf32>
    tpu.vector_store %arg10[%c28, %c0_26], %54 {strides = array<i32>} : memref<36x256xf32, #tpu.memory_space<vmem>>, vector<4x256xf32>,
    %c0_27 = arith.constant 0 : index
    %c145 = arith.constant 145 : index
    %56 = vector.load %arg9[%c0_27, %c145] : memref<4x512xf32, #tpu.memory_space<vmem>>, vector<4x256xf32>
    %57 = vector.broadcast %26 : vector<1x256xf32> to vector<4x256xf32>
    %58 = arith.mulf %56, %57 : vector<4x256xf32>
    %c32 = arith.constant 32 : index
    %c0_28 = arith.constant 0 : index
    %59 = vector.load %arg10[%c32, %c0_28] : memref<36x256xf32, #tpu.memory_space<vmem>>, vector<4x256xf32>
    tpu.vector_store %arg10[%c32, %c0_28], %58 {strides = array<i32>} : memref<36x256xf32, #tpu.memory_space<vmem>>, vector<4x256xf32>,
    %c0_29 = arith.constant 0 : index
    %c0_30 = arith.constant 0 : index
    %c0_31 = arith.constant 0 : index
    %60 = vector.load %arg2[%c0_29, %c0_30, %c0_31] : memref<4x4x36xf32, #tpu.memory_space<vmem>>, vector<1x4x36xf32>
    %61 = vector.shape_cast %60 : vector<1x4x36xf32> to vector<4x36xf32>
    %c0_32 = arith.constant 0 : index
    %c0_33 = arith.constant 0 : index
    %62 = vector.load %arg10[%c0_32, %c0_33] : memref<36x256xf32, #tpu.memory_space<vmem>>, vector<36x256xf32>
    %cst_34 = arith.constant dense<0.000000e+00> : vector<4x256xf32>
    %63 = tpu.matmul %61, %62, %cst_34 {dimension_numbers = #tpu.dot_dimension_numbers<[1], [0], [0], [1], [0, 0, 1, 1], [], []>} : vector<4x36xf32>, vector<36x256xf32>, vector<4x256xf32> -> vector<4x256xf32>
    %c0_35 = arith.constant 0 : index
    %c0_36 = arith.constant 0 : index
    %c0_37 = arith.constant 0 : index
    %64 = vector.load %arg3[%c0_35, %c0_36, %c0_37] : memref<4x4x1xf32, #tpu.memory_space<vmem>>, vector<1x4x1xf32>
    %65 = vector.shape_cast %64 : vector<1x4x1xf32> to vector<4x1xf32>
    %66 = vector.broadcast %65 : vector<4x1xf32> to vector<4x256xf32>
    %67 = arith.addf %63, %66 : vector<4x256xf32>
    %cst_38 = arith.constant 0.000000e+00 : f32
    %68 = vector.broadcast %cst_38 : f32 to vector<4x256xf32>
    %69 = arith.maximumf %67, %68 : vector<4x256xf32>
    %c0_39 = arith.constant 0 : index
    %c128_40 = arith.constant 128 : index
    %70 = vector.load %arg9[%c0_39, %c128_40] : memref<4x512xf32, #tpu.memory_space<vmem>>, vector<4x256xf32>
    tpu.vector_store %arg9[%c0_39, %c128_40], %69 {strides = array<i32>} : memref<4x512xf32, #tpu.memory_space<vmem>>, vector<4x256xf32>,
    %c0_41 = arith.constant 0 : index
    %c111_42 = arith.constant 111 : index
    %71 = vector.load %arg9[%c0_41, %c111_42] : memref<4x512xf32, #tpu.memory_space<vmem>>, vector<4x256xf32>
    %72 = vector.broadcast %22 : vector<1x256xf32> to vector<4x256xf32>
    %73 = arith.mulf %71, %72 : vector<4x256xf32>
    %c0_43 = arith.constant 0 : index
    %c0_44 = arith.constant 0 : index
    %74 = vector.load %arg10[%c0_43, %c0_44] : memref<36x256xf32, #tpu.memory_space<vmem>>, vector<4x256xf32>
    tpu.vector_store %arg10[%c0_43, %c0_44], %73 {strides = array<i32>} : memref<36x256xf32, #tpu.memory_space<vmem>>, vector<4x256xf32>,
    %c0_45 = arith.constant 0 : index
    %c112_46 = arith.constant 112 : index
    %75 = vector.load %arg9[%c0_45, %c112_46] : memref<4x512xf32, #tpu.memory_space<vmem>>, vector<4x256xf32>
    %c4_47 = arith.constant 4 : index
    %c0_48 = arith.constant 0 : index
    %76 = vector.load %arg10[%c4_47, %c0_48] : memref<36x256xf32, #tpu.memory_space<vmem>>, vector<4x256xf32>
    tpu.vector_store %arg10[%c4_47, %c0_48], %75 {strides = array<i32>} : memref<36x256xf32, #tpu.memory_space<vmem>>, vector<4x256xf32>,
    %c0_49 = arith.constant 0 : index
    %c113_50 = arith.constant 113 : index
    %77 = vector.load %arg9[%c0_49, %c113_50] : memref<4x512xf32, #tpu.memory_space<vmem>>, vector<4x256xf32>
    %78 = vector.broadcast %26 : vector<1x256xf32> to vector<4x256xf32>
    %79 = arith.mulf %77, %78 : vector<4x256xf32>
    %c8_51 = arith.constant 8 : index
    %c0_52 = arith.constant 0 : index
    %80 = vector.load %arg10[%c8_51, %c0_52] : memref<36x256xf32, #tpu.memory_space<vmem>>, vector<4x256xf32>
    tpu.vector_store %arg10[%c8_51, %c0_52], %79 {strides = array<i32>} : memref<36x256xf32, #tpu.memory_space<vmem>>, vector<4x256xf32>,
    %c0_53 = arith.constant 0 : index
    %c127_54 = arith.constant 127 : index
    %81 = vector.load %arg9[%c0_53, %c127_54] : memref<4x512xf32, #tpu.memory_space<vmem>>, vector<4x256xf32>
    %82 = vector.broadcast %22 : vector<1x256xf32> to vector<4x256xf32>
    %83 = arith.mulf %81, %82 : vector<4x256xf32>
    %c12_55 = arith.constant 12 : index
    %c0_56 = arith.constant 0 : index
    %84 = vector.load %arg10[%c12_55, %c0_56] : memref<36x256xf32, #tpu.memory_space<vmem>>, vector<4x256xf32>
    tpu.vector_store %arg10[%c12_55, %c0_56], %83 {strides = array<i32>} : memref<36x256xf32, #tpu.memory_space<vmem>>, vector<4x256xf32>,
    %c0_57 = arith.constant 0 : index
    %c128_58 = arith.constant 128 : index
    %85 = vector.load %arg9[%c0_57, %c128_58] : memref<4x512xf32, #tpu.memory_space<vmem>>, vector<4x256xf32>
    %c16_59 = arith.constant 16 : index
    %c0_60 = arith.constant 0 : index
    %86 = vector.load %arg10[%c16_59, %c0_60] : memref<36x256xf32, #tpu.memory_space<vmem>>, vector<4x256xf32>
    tpu.vector_store %arg10[%c16_59, %c0_60], %85 {strides = array<i32>} : memref<36x256xf32, #tpu.memory_space<vmem>>, vector<4x256xf32>,
    %c0_61 = arith.constant 0 : index
    %c129_62 = arith.constant 129 : index
    %87 = vector.load %arg9[%c0_61, %c129_62] : memref<4x512xf32, #tpu.memory_space<vmem>>, vector<4x256xf32>
    %88 = vector.broadcast %26 : vector<1x256xf32> to vector<4x256xf32>
    %89 = arith.mulf %87, %88 : vector<4x256xf32>
    %c20_63 = arith.constant 20 : index
    %c0_64 = arith.constant 0 : index
    %90 = vector.load %arg10[%c20_63, %c0_64] : memref<36x256xf32, #tpu.memory_space<vmem>>, vector<4x256xf32>
    tpu.vector_store %arg10[%c20_63, %c0_64], %89 {strides = array<i32>} : memref<36x256xf32, #tpu.memory_space<vmem>>, vector<4x256xf32>,
    %c0_65 = arith.constant 0 : index
    %c143_66 = arith.constant 143 : index
    %91 = vector.load %arg9[%c0_65, %c143_66] : memref<4x512xf32, #tpu.memory_space<vmem>>, vector<4x256xf32>
    %92 = vector.broadcast %22 : vector<1x256xf32> to vector<4x256xf32>
    %93 = arith.mulf %91, %92 : vector<4x256xf32>
    %c24_67 = arith.constant 24 : index
    %c0_68 = arith.constant 0 : index
    %94 = vector.load %arg10[%c24_67, %c0_68] : memref<36x256xf32, #tpu.memory_space<vmem>>, vector<4x256xf32>
    tpu.vector_store %arg10[%c24_67, %c0_68], %93 {strides = array<i32>} : memref<36x256xf32, #tpu.memory_space<vmem>>, vector<4x256xf32>,
    %c0_69 = arith.constant 0 : index
    %c144_70 = arith.constant 144 : index
    %95 = vector.load %arg9[%c0_69, %c144_70] : memref<4x512xf32, #tpu.memory_space<vmem>>, vector<4x256xf32>
    %c28_71 = arith.constant 28 : index
    %c0_72 = arith.constant 0 : index
    %96 = vector.load %arg10[%c28_71, %c0_72] : memref<36x256xf32, #tpu.memory_space<vmem>>, vector<4x256xf32>
    tpu.vector_store %arg10[%c28_71, %c0_72], %95 {strides = array<i32>} : memref<36x256xf32, #tpu.memory_space<vmem>>, vector<4x256xf32>,
    %c0_73 = arith.constant 0 : index
    %c145_74 = arith.constant 145 : index
    %97 = vector.load %arg9[%c0_73, %c145_74] : memref<4x512xf32, #tpu.memory_space<vmem>>, vector<4x256xf32>
    %98 = vector.broadcast %26 : vector<1x256xf32> to vector<4x256xf32>
    %99 = arith.mulf %97, %98 : vector<4x256xf32>
    %c32_75 = arith.constant 32 : index
    %c0_76 = arith.constant 0 : index
    %100 = vector.load %arg10[%c32_75, %c0_76] : memref<36x256xf32, #tpu.memory_space<vmem>>, vector<4x256xf32>
    tpu.vector_store %arg10[%c32_75, %c0_76], %99 {strides = array<i32>} : memref<36x256xf32, #tpu.memory_space<vmem>>, vector<4x256xf32>,
    %c1 = arith.constant 1 : index
    %c0_77 = arith.constant 0 : index
    %c0_78 = arith.constant 0 : index
    %101 = vector.load %arg2[%c1, %c0_77, %c0_78] : memref<4x4x36xf32, #tpu.memory_space<vmem>>, vector<1x4x36xf32>
    %102 = vector.shape_cast %101 : vector<1x4x36xf32> to vector<4x36xf32>
    %c0_79 = arith.constant 0 : index
    %c0_80 = arith.constant 0 : index
    %103 = vector.load %arg10[%c0_79, %c0_80] : memref<36x256xf32, #tpu.memory_space<vmem>>, vector<36x256xf32>
    %cst_81 = arith.constant dense<0.000000e+00> : vector<4x256xf32>
    %104 = tpu.matmul %102, %103, %cst_81 {dimension_numbers = #tpu.dot_dimension_numbers<[1], [0], [0], [1], [0, 0, 1, 1], [], []>} : vector<4x36xf32>, vector<36x256xf32>, vector<4x256xf32> -> vector<4x256xf32>
    %c1_82 = arith.constant 1 : index
    %c0_83 = arith.constant 0 : index
    %c0_84 = arith.constant 0 : index
    %105 = vector.load %arg3[%c1_82, %c0_83, %c0_84] : memref<4x4x1xf32, #tpu.memory_space<vmem>>, vector<1x4x1xf32>
    %106 = vector.shape_cast %105 : vector<1x4x1xf32> to vector<4x1xf32>
    %107 = vector.broadcast %106 : vector<4x1xf32> to vector<4x256xf32>
    %108 = arith.addf %104, %107 : vector<4x256xf32>
    %cst_85 = arith.constant 0.000000e+00 : f32
    %109 = vector.broadcast %cst_85 : f32 to vector<4x256xf32>
    %110 = arith.maximumf %108, %109 : vector<4x256xf32>
    %c0_86 = arith.constant 0 : index
    %c128_87 = arith.constant 128 : index
    %111 = vector.load %arg9[%c0_86, %c128_87] : memref<4x512xf32, #tpu.memory_space<vmem>>, vector<4x256xf32>
    tpu.vector_store %arg9[%c0_86, %c128_87], %28 {strides = array<i32>} : memref<4x512xf32, #tpu.memory_space<vmem>>, vector<4x256xf32>,
    %c0_88 = arith.constant 0 : index
    %c111_89 = arith.constant 111 : index
    %112 = vector.load %arg9[%c0_88, %c111_89] : memref<4x512xf32, #tpu.memory_space<vmem>>, vector<4x256xf32>
    %113 = vector.broadcast %22 : vector<1x256xf32> to vector<4x256xf32>
    %114 = arith.mulf %112, %113 : vector<4x256xf32>
    %c0_90 = arith.constant 0 : index
    %c0_91 = arith.constant 0 : index
    %115 = vector.load %arg10[%c0_90, %c0_91] : memref<36x256xf32, #tpu.memory_space<vmem>>, vector<4x256xf32>
    tpu.vector_store %arg10[%c0_90, %c0_91], %114 {strides = array<i32>} : memref<36x256xf32, #tpu.memory_space<vmem>>, vector<4x256xf32>,
    %c0_92 = arith.constant 0 : index
    %c112_93 = arith.constant 112 : index
    %116 = vector.load %arg9[%c0_92, %c112_93] : memref<4x512xf32, #tpu.memory_space<vmem>>, vector<4x256xf32>
    %c4_94 = arith.constant 4 : index
    %c0_95 = arith.constant 0 : index
    %117 = vector.load %arg10[%c4_94, %c0_95] : memref<36x256xf32, #tpu.memory_space<vmem>>, vector<4x256xf32>
    tpu.vector_store %arg10[%c4_94, %c0_95], %116 {strides = array<i32>} : memref<36x256xf32, #tpu.memory_space<vmem>>, vector<4x256xf32>,
    %c0_96 = arith.constant 0 : index
    %c113_97 = arith.constant 113 : index
    %118 = vector.load %arg9[%c0_96, %c113_97] : memref<4x512xf32, #tpu.memory_space<vmem>>, vector<4x256xf32>
    %119 = vector.broadcast %26 : vector<1x256xf32> to vector<4x256xf32>
    %120 = arith.mulf %118, %119 : vector<4x256xf32>
    %c8_98 = arith.constant 8 : index
    %c0_99 = arith.constant 0 : index
    %121 = vector.load %arg10[%c8_98, %c0_99] : memref<36x256xf32, #tpu.memory_space<vmem>>, vector<4x256xf32>
    tpu.vector_store %arg10[%c8_98, %c0_99], %120 {strides = array<i32>} : memref<36x256xf32, #tpu.memory_space<vmem>>, vector<4x256xf32>,
    %c0_100 = arith.constant 0 : index
    %c127_101 = arith.constant 127 : index
    %122 = vector.load %arg9[%c0_100, %c127_101] : memref<4x512xf32, #tpu.memory_space<vmem>>, vector<4x256xf32>
    %123 = vector.broadcast %22 : vector<1x256xf32> to vector<4x256xf32>
    %124 = arith.mulf %122, %123 : vector<4x256xf32>
    %c12_102 = arith.constant 12 : index
    %c0_103 = arith.constant 0 : index
    %125 = vector.load %arg10[%c12_102, %c0_103] : memref<36x256xf32, #tpu.memory_space<vmem>>, vector<4x256xf32>
    tpu.vector_store %arg10[%c12_102, %c0_103], %124 {strides = array<i32>} : memref<36x256xf32, #tpu.memory_space<vmem>>, vector<4x256xf32>,
    %c0_104 = arith.constant 0 : index
    %c128_105 = arith.constant 128 : index
    %126 = vector.load %arg9[%c0_104, %c128_105] : memref<4x512xf32, #tpu.memory_space<vmem>>, vector<4x256xf32>
    %c16_106 = arith.constant 16 : index
    %c0_107 = arith.constant 0 : index
    %127 = vector.load %arg10[%c16_106, %c0_107] : memref<36x256xf32, #tpu.memory_space<vmem>>, vector<4x256xf32>
    tpu.vector_store %arg10[%c16_106, %c0_107], %126 {strides = array<i32>} : memref<36x256xf32, #tpu.memory_space<vmem>>, vector<4x256xf32>,
    %c0_108 = arith.constant 0 : index
    %c129_109 = arith.constant 129 : index
    %128 = vector.load %arg9[%c0_108, %c129_109] : memref<4x512xf32, #tpu.memory_space<vmem>>, vector<4x256xf32>
    %129 = vector.broadcast %26 : vector<1x256xf32> to vector<4x256xf32>
    %130 = arith.mulf %128, %129 : vector<4x256xf32>
    %c20_110 = arith.constant 20 : index
    %c0_111 = arith.constant 0 : index
    %131 = vector.load %arg10[%c20_110, %c0_111] : memref<36x256xf32, #tpu.memory_space<vmem>>, vector<4x256xf32>
    tpu.vector_store %arg10[%c20_110, %c0_111], %130 {strides = array<i32>} : memref<36x256xf32, #tpu.memory_space<vmem>>, vector<4x256xf32>,
    %c0_112 = arith.constant 0 : index
    %c143_113 = arith.constant 143 : index
    %132 = vector.load %arg9[%c0_112, %c143_113] : memref<4x512xf32, #tpu.memory_space<vmem>>, vector<4x256xf32>
    %133 = vector.broadcast %22 : vector<1x256xf32> to vector<4x256xf32>
    %134 = arith.mulf %132, %133 : vector<4x256xf32>
    %c24_114 = arith.constant 24 : index
    %c0_115 = arith.constant 0 : index
    %135 = vector.load %arg10[%c24_114, %c0_115] : memref<36x256xf32, #tpu.memory_space<vmem>>, vector<4x256xf32>
    tpu.vector_store %arg10[%c24_114, %c0_115], %134 {strides = array<i32>} : memref<36x256xf32, #tpu.memory_space<vmem>>, vector<4x256xf32>,
    %c0_116 = arith.constant 0 : index
    %c144_117 = arith.constant 144 : index
    %136 = vector.load %arg9[%c0_116, %c144_117] : memref<4x512xf32, #tpu.memory_space<vmem>>, vector<4x256xf32>
    %c28_118 = arith.constant 28 : index
    %c0_119 = arith.constant 0 : index
    %137 = vector.load %arg10[%c28_118, %c0_119] : memref<36x256xf32, #tpu.memory_space<vmem>>, vector<4x256xf32>
    tpu.vector_store %arg10[%c28_118, %c0_119], %136 {strides = array<i32>} : memref<36x256xf32, #tpu.memory_space<vmem>>, vector<4x256xf32>,
    %c0_120 = arith.constant 0 : index
    %c145_121 = arith.constant 145 : index
    %138 = vector.load %arg9[%c0_120, %c145_121] : memref<4x512xf32, #tpu.memory_space<vmem>>, vector<4x256xf32>
    %139 = vector.broadcast %26 : vector<1x256xf32> to vector<4x256xf32>
    %140 = arith.mulf %138, %139 : vector<4x256xf32>
    %c32_122 = arith.constant 32 : index
    %c0_123 = arith.constant 0 : index
    %141 = vector.load %arg10[%c32_122, %c0_123] : memref<36x256xf32, #tpu.memory_space<vmem>>, vector<4x256xf32>
    tpu.vector_store %arg10[%c32_122, %c0_123], %140 {strides = array<i32>} : memref<36x256xf32, #tpu.memory_space<vmem>>, vector<4x256xf32>,
    %c2 = arith.constant 2 : index
    %c0_124 = arith.constant 0 : index
    %c0_125 = arith.constant 0 : index
    %142 = vector.load %arg2[%c2, %c0_124, %c0_125] : memref<4x4x36xf32, #tpu.memory_space<vmem>>, vector<1x4x36xf32>
    %143 = vector.shape_cast %142 : vector<1x4x36xf32> to vector<4x36xf32>
    %c0_126 = arith.constant 0 : index
    %c0_127 = arith.constant 0 : index
    %144 = vector.load %arg10[%c0_126, %c0_127] : memref<36x256xf32, #tpu.memory_space<vmem>>, vector<36x256xf32>
    %cst_128 = arith.constant dense<0.000000e+00> : vector<4x256xf32>
    %145 = tpu.matmul %143, %144, %cst_128 {dimension_numbers = #tpu.dot_dimension_numbers<[1], [0], [0], [1], [0, 0, 1, 1], [], []>} : vector<4x36xf32>, vector<36x256xf32>, vector<4x256xf32> -> vector<4x256xf32>
    %c2_129 = arith.constant 2 : index
    %c0_130 = arith.constant 0 : index
    %c0_131 = arith.constant 0 : index
    %146 = vector.load %arg3[%c2_129, %c0_130, %c0_131] : memref<4x4x1xf32, #tpu.memory_space<vmem>>, vector<1x4x1xf32>
    %147 = vector.shape_cast %146 : vector<1x4x1xf32> to vector<4x1xf32>
    %148 = vector.broadcast %147 : vector<4x1xf32> to vector<4x256xf32>
    %149 = arith.addf %145, %148 : vector<4x256xf32>
    %cst_132 = arith.constant 0.000000e+00 : f32
    %150 = vector.broadcast %cst_132 : f32 to vector<4x256xf32>
    %151 = arith.maximumf %149, %150 : vector<4x256xf32>
    %c0_133 = arith.constant 0 : index
    %c128_134 = arith.constant 128 : index
    %152 = vector.load %arg9[%c0_133, %c128_134] : memref<4x512xf32, #tpu.memory_space<vmem>>, vector<4x256xf32>
    tpu.vector_store %arg9[%c0_133, %c128_134], %151 {strides = array<i32>} : memref<4x512xf32, #tpu.memory_space<vmem>>, vector<4x256xf32>,
    %c0_135 = arith.constant 0 : index
    %c111_136 = arith.constant 111 : index
    %153 = vector.load %arg9[%c0_135, %c111_136] : memref<4x512xf32, #tpu.memory_space<vmem>>, vector<4x256xf32>
    %154 = vector.broadcast %22 : vector<1x256xf32> to vector<4x256xf32>
    %155 = arith.mulf %153, %154 : vector<4x256xf32>
    %c0_137 = arith.constant 0 : index
    %c0_138 = arith.constant 0 : index
    %156 = vector.load %arg10[%c0_137, %c0_138] : memref<36x256xf32, #tpu.memory_space<vmem>>, vector<4x256xf32>
    tpu.vector_store %arg10[%c0_137, %c0_138], %155 {strides = array<i32>} : memref<36x256xf32, #tpu.memory_space<vmem>>, vector<4x256xf32>,
    %c0_139 = arith.constant 0 : index
    %c112_140 = arith.constant 112 : index
    %157 = vector.load %arg9[%c0_139, %c112_140] : memref<4x512xf32, #tpu.memory_space<vmem>>, vector<4x256xf32>
    %c4_141 = arith.constant 4 : index
    %c0_142 = arith.constant 0 : index
    %158 = vector.load %arg10[%c4_141, %c0_142] : memref<36x256xf32, #tpu.memory_space<vmem>>, vector<4x256xf32>
    tpu.vector_store %arg10[%c4_141, %c0_142], %157 {strides = array<i32>} : memref<36x256xf32, #tpu.memory_space<vmem>>, vector<4x256xf32>,
    %c0_143 = arith.constant 0 : index
    %c113_144 = arith.constant 113 : index
    %159 = vector.load %arg9[%c0_143, %c113_144] : memref<4x512xf32, #tpu.memory_space<vmem>>, vector<4x256xf32>
    %160 = vector.broadcast %26 : vector<1x256xf32> to vector<4x256xf32>
    %161 = arith.mulf %159, %160 : vector<4x256xf32>
    %c8_145 = arith.constant 8 : index
    %c0_146 = arith.constant 0 : index
    %162 = vector.load %arg10[%c8_145, %c0_146] : memref<36x256xf32, #tpu.memory_space<vmem>>, vector<4x256xf32>
    tpu.vector_store %arg10[%c8_145, %c0_146], %161 {strides = array<i32>} : memref<36x256xf32, #tpu.memory_space<vmem>>, vector<4x256xf32>,
    %c0_147 = arith.constant 0 : index
    %c127_148 = arith.constant 127 : index
    %163 = vector.load %arg9[%c0_147, %c127_148] : memref<4x512xf32, #tpu.memory_space<vmem>>, vector<4x256xf32>
    %164 = vector.broadcast %22 : vector<1x256xf32> to vector<4x256xf32>
    %165 = arith.mulf %163, %164 : vector<4x256xf32>
    %c12_149 = arith.constant 12 : index
    %c0_150 = arith.constant 0 : index
    %166 = vector.load %arg10[%c12_149, %c0_150] : memref<36x256xf32, #tpu.memory_space<vmem>>, vector<4x256xf32>
    tpu.vector_store %arg10[%c12_149, %c0_150], %165 {strides = array<i32>} : memref<36x256xf32, #tpu.memory_space<vmem>>, vector<4x256xf32>,
    %c0_151 = arith.constant 0 : index
    %c128_152 = arith.constant 128 : index
    %167 = vector.load %arg9[%c0_151, %c128_152] : memref<4x512xf32, #tpu.memory_space<vmem>>, vector<4x256xf32>
    %c16_153 = arith.constant 16 : index
    %c0_154 = arith.constant 0 : index
    %168 = vector.load %arg10[%c16_153, %c0_154] : memref<36x256xf32, #tpu.memory_space<vmem>>, vector<4x256xf32>
    tpu.vector_store %arg10[%c16_153, %c0_154], %167 {strides = array<i32>} : memref<36x256xf32, #tpu.memory_space<vmem>>, vector<4x256xf32>,
    %c0_155 = arith.constant 0 : index
    %c129_156 = arith.constant 129 : index
    %169 = vector.load %arg9[%c0_155, %c129_156] : memref<4x512xf32, #tpu.memory_space<vmem>>, vector<4x256xf32>
    %170 = vector.broadcast %26 : vector<1x256xf32> to vector<4x256xf32>
    %171 = arith.mulf %169, %170 : vector<4x256xf32>
    %c20_157 = arith.constant 20 : index
    %c0_158 = arith.constant 0 : index
    %172 = vector.load %arg10[%c20_157, %c0_158] : memref<36x256xf32, #tpu.memory_space<vmem>>, vector<4x256xf32>
    tpu.vector_store %arg10[%c20_157, %c0_158], %171 {strides = array<i32>} : memref<36x256xf32, #tpu.memory_space<vmem>>, vector<4x256xf32>,
    %c0_159 = arith.constant 0 : index
    %c143_160 = arith.constant 143 : index
    %173 = vector.load %arg9[%c0_159, %c143_160] : memref<4x512xf32, #tpu.memory_space<vmem>>, vector<4x256xf32>
    %174 = vector.broadcast %22 : vector<1x256xf32> to vector<4x256xf32>
    %175 = arith.mulf %173, %174 : vector<4x256xf32>
    %c24_161 = arith.constant 24 : index
    %c0_162 = arith.constant 0 : index
    %176 = vector.load %arg10[%c24_161, %c0_162] : memref<36x256xf32, #tpu.memory_space<vmem>>, vector<4x256xf32>
    tpu.vector_store %arg10[%c24_161, %c0_162], %175 {strides = array<i32>} : memref<36x256xf32, #tpu.memory_space<vmem>>, vector<4x256xf32>,
    %c0_163 = arith.constant 0 : index
    %c144_164 = arith.constant 144 : index
    %177 = vector.load %arg9[%c0_163, %c144_164] : memref<4x512xf32, #tpu.memory_space<vmem>>, vector<4x256xf32>
    %c28_165 = arith.constant 28 : index
    %c0_166 = arith.constant 0 : index
    %178 = vector.load %arg10[%c28_165, %c0_166] : memref<36x256xf32, #tpu.memory_space<vmem>>, vector<4x256xf32>
    tpu.vector_store %arg10[%c28_165, %c0_166], %177 {strides = array<i32>} : memref<36x256xf32, #tpu.memory_space<vmem>>, vector<4x256xf32>,
    %c0_167 = arith.constant 0 : index
    %c145_168 = arith.constant 145 : index
    %179 = vector.load %arg9[%c0_167, %c145_168] : memref<4x512xf32, #tpu.memory_space<vmem>>, vector<4x256xf32>
    %180 = vector.broadcast %26 : vector<1x256xf32> to vector<4x256xf32>
    %181 = arith.mulf %179, %180 : vector<4x256xf32>
    %c32_169 = arith.constant 32 : index
    %c0_170 = arith.constant 0 : index
    %182 = vector.load %arg10[%c32_169, %c0_170] : memref<36x256xf32, #tpu.memory_space<vmem>>, vector<4x256xf32>
    tpu.vector_store %arg10[%c32_169, %c0_170], %181 {strides = array<i32>} : memref<36x256xf32, #tpu.memory_space<vmem>>, vector<4x256xf32>,
    %c2_171 = arith.constant 2 : index
    %c0_172 = arith.constant 0 : index
    %c0_173 = arith.constant 0 : index
    %183 = vector.load %arg2[%c2_171, %c0_172, %c0_173] : memref<4x4x36xf32, #tpu.memory_space<vmem>>, vector<1x4x36xf32>
    %184 = vector.shape_cast %183 : vector<1x4x36xf32> to vector<4x36xf32>
    %c0_174 = arith.constant 0 : index
    %c0_175 = arith.constant 0 : index
    %185 = vector.load %arg10[%c0_174, %c0_175] : memref<36x256xf32, #tpu.memory_space<vmem>>, vector<36x256xf32>
    %cst_176 = arith.constant dense<0.000000e+00> : vector<4x256xf32>
    %186 = tpu.matmul %184, %185, %cst_176 {dimension_numbers = #tpu.dot_dimension_numbers<[1], [0], [0], [1], [0, 0, 1, 1], [], []>} : vector<4x36xf32>, vector<36x256xf32>, vector<4x256xf32> -> vector<4x256xf32>
    %c2_177 = arith.constant 2 : index
    %c0_178 = arith.constant 0 : index
    %c0_179 = arith.constant 0 : index
    %187 = vector.load %arg3[%c2_177, %c0_178, %c0_179] : memref<4x4x1xf32, #tpu.memory_space<vmem>>, vector<1x4x1xf32>
    %188 = vector.shape_cast %187 : vector<1x4x1xf32> to vector<4x1xf32>
    %189 = vector.broadcast %188 : vector<4x1xf32> to vector<4x256xf32>
    %190 = arith.addf %186, %189 : vector<4x256xf32>
    %cst_180 = arith.constant 0.000000e+00 : f32
    %191 = vector.broadcast %cst_180 : f32 to vector<4x256xf32>
    %192 = arith.maximumf %190, %191 : vector<4x256xf32>
    %c0_181 = arith.constant 0 : index
    %c128_182 = arith.constant 128 : index
    %193 = vector.load %arg9[%c0_181, %c128_182] : memref<4x512xf32, #tpu.memory_space<vmem>>, vector<4x256xf32>
    tpu.vector_store %arg9[%c0_181, %c128_182], %192 {strides = array<i32>} : memref<4x512xf32, #tpu.memory_space<vmem>>, vector<4x256xf32>,
    %c0_183 = arith.constant 0 : index
    %c111_184 = arith.constant 111 : index
    %194 = vector.load %arg9[%c0_183, %c111_184] : memref<4x512xf32, #tpu.memory_space<vmem>>, vector<4x256xf32>
    %195 = vector.broadcast %22 : vector<1x256xf32> to vector<4x256xf32>
    %196 = arith.mulf %194, %195 : vector<4x256xf32>
    %c0_185 = arith.constant 0 : index
    %c0_186 = arith.constant 0 : index
    %197 = vector.load %arg10[%c0_185, %c0_186] : memref<36x256xf32, #tpu.memory_space<vmem>>, vector<4x256xf32>
    tpu.vector_store %arg10[%c0_185, %c0_186], %196 {strides = array<i32>} : memref<36x256xf32, #tpu.memory_space<vmem>>, vector<4x256xf32>,
    %c0_187 = arith.constant 0 : index
    %c112_188 = arith.constant 112 : index
    %198 = vector.load %arg9[%c0_187, %c112_188] : memref<4x512xf32, #tpu.memory_space<vmem>>, vector<4x256xf32>
    %c4_189 = arith.constant 4 : index
    %c0_190 = arith.constant 0 : index
    %199 = vector.load %arg10[%c4_189, %c0_190] : memref<36x256xf32, #tpu.memory_space<vmem>>, vector<4x256xf32>
    tpu.vector_store %arg10[%c4_189, %c0_190], %198 {strides = array<i32>} : memref<36x256xf32, #tpu.memory_space<vmem>>, vector<4x256xf32>,
    %c0_191 = arith.constant 0 : index
    %c113_192 = arith.constant 113 : index
    %200 = vector.load %arg9[%c0_191, %c113_192] : memref<4x512xf32, #tpu.memory_space<vmem>>, vector<4x256xf32>
    %201 = vector.broadcast %26 : vector<1x256xf32> to vector<4x256xf32>
    %202 = arith.mulf %200, %201 : vector<4x256xf32>
    %c8_193 = arith.constant 8 : index
    %c0_194 = arith.constant 0 : index
    %203 = vector.load %arg10[%c8_193, %c0_194] : memref<36x256xf32, #tpu.memory_space<vmem>>, vector<4x256xf32>
    tpu.vector_store %arg10[%c8_193, %c0_194], %202 {strides = array<i32>} : memref<36x256xf32, #tpu.memory_space<vmem>>, vector<4x256xf32>,
    %c0_195 = arith.constant 0 : index
    %c127_196 = arith.constant 127 : index
    %204 = vector.load %arg9[%c0_195, %c127_196] : memref<4x512xf32, #tpu.memory_space<vmem>>, vector<4x256xf32>
    %205 = vector.broadcast %22 : vector<1x256xf32> to vector<4x256xf32>
    %206 = arith.mulf %204, %205 : vector<4x256xf32>
    %c12_197 = arith.constant 12 : index
    %c0_198 = arith.constant 0 : index
    %207 = vector.load %arg10[%c12_197, %c0_198] : memref<36x256xf32, #tpu.memory_space<vmem>>, vector<4x256xf32>
    tpu.vector_store %arg10[%c12_197, %c0_198], %206 {strides = array<i32>} : memref<36x256xf32, #tpu.memory_space<vmem>>, vector<4x256xf32>,
    %c0_199 = arith.constant 0 : index
    %c128_200 = arith.constant 128 : index
    %208 = vector.load %arg9[%c0_199, %c128_200] : memref<4x512xf32, #tpu.memory_space<vmem>>, vector<4x256xf32>
    %c16_201 = arith.constant 16 : index
    %c0_202 = arith.constant 0 : index
    %209 = vector.load %arg10[%c16_201, %c0_202] : memref<36x256xf32, #tpu.memory_space<vmem>>, vector<4x256xf32>
    tpu.vector_store %arg10[%c16_201, %c0_202], %208 {strides = array<i32>} : memref<36x256xf32, #tpu.memory_space<vmem>>, vector<4x256xf32>,
    %c0_203 = arith.constant 0 : index
    %c129_204 = arith.constant 129 : index
    %210 = vector.load %arg9[%c0_203, %c129_204] : memref<4x512xf32, #tpu.memory_space<vmem>>, vector<4x256xf32>
    %211 = vector.broadcast %26 : vector<1x256xf32> to vector<4x256xf32>
    %212 = arith.mulf %210, %211 : vector<4x256xf32>
    %c20_205 = arith.constant 20 : index
    %c0_206 = arith.constant 0 : index
    %213 = vector.load %arg10[%c20_205, %c0_206] : memref<36x256xf32, #tpu.memory_space<vmem>>, vector<4x256xf32>
    tpu.vector_store %arg10[%c20_205, %c0_206], %212 {strides = array<i32>} : memref<36x256xf32, #tpu.memory_space<vmem>>, vector<4x256xf32>,
    %c0_207 = arith.constant 0 : index
    %c143_208 = arith.constant 143 : index
    %214 = vector.load %arg9[%c0_207, %c143_208] : memref<4x512xf32, #tpu.memory_space<vmem>>, vector<4x256xf32>
    %215 = vector.broadcast %22 : vector<1x256xf32> to vector<4x256xf32>
    %216 = arith.mulf %214, %215 : vector<4x256xf32>
    %c24_209 = arith.constant 24 : index
    %c0_210 = arith.constant 0 : index
    %217 = vector.load %arg10[%c24_209, %c0_210] : memref<36x256xf32, #tpu.memory_space<vmem>>, vector<4x256xf32>
    tpu.vector_store %arg10[%c24_209, %c0_210], %216 {strides = array<i32>} : memref<36x256xf32, #tpu.memory_space<vmem>>, vector<4x256xf32>,
    %c0_211 = arith.constant 0 : index
    %c144_212 = arith.constant 144 : index
    %218 = vector.load %arg9[%c0_211, %c144_212] : memref<4x512xf32, #tpu.memory_space<vmem>>, vector<4x256xf32>
    %c28_213 = arith.constant 28 : index
    %c0_214 = arith.constant 0 : index
    %219 = vector.load %arg10[%c28_213, %c0_214] : memref<36x256xf32, #tpu.memory_space<vmem>>, vector<4x256xf32>
    tpu.vector_store %arg10[%c28_213, %c0_214], %218 {strides = array<i32>} : memref<36x256xf32, #tpu.memory_space<vmem>>, vector<4x256xf32>,
    %c0_215 = arith.constant 0 : index
    %c145_216 = arith.constant 145 : index
    %220 = vector.load %arg9[%c0_215, %c145_216] : memref<4x512xf32, #tpu.memory_space<vmem>>, vector<4x256xf32>
    %221 = vector.broadcast %26 : vector<1x256xf32> to vector<4x256xf32>
    %222 = arith.mulf %220, %221 : vector<4x256xf32>
    %c32_217 = arith.constant 32 : index
    %c0_218 = arith.constant 0 : index
    %223 = vector.load %arg10[%c32_217, %c0_218] : memref<36x256xf32, #tpu.memory_space<vmem>>, vector<4x256xf32>
    tpu.vector_store %arg10[%c32_217, %c0_218], %222 {strides = array<i32>} : memref<36x256xf32, #tpu.memory_space<vmem>>, vector<4x256xf32>,
    %c2_219 = arith.constant 2 : index
    %c0_220 = arith.constant 0 : index
    %c0_221 = arith.constant 0 : index
    %224 = vector.load %arg2[%c2_219, %c0_220, %c0_221] : memref<4x4x36xf32, #tpu.memory_space<vmem>>, vector<1x4x36xf32>
    %225 = vector.shape_cast %224 : vector<1x4x36xf32> to vector<4x36xf32>
    %c0_222 = arith.constant 0 : index
    %c0_223 = arith.constant 0 : index
    %226 = vector.load %arg10[%c0_222, %c0_223] : memref<36x256xf32, #tpu.memory_space<vmem>>, vector<36x256xf32>
    %cst_224 = arith.constant dense<0.000000e+00> : vector<4x256xf32>
    %227 = tpu.matmul %225, %226, %cst_224 {dimension_numbers = #tpu.dot_dimension_numbers<[1], [0], [0], [1], [0, 0, 1, 1], [], []>} : vector<4x36xf32>, vector<36x256xf32>, vector<4x256xf32> -> vector<4x256xf32>
    %c2_225 = arith.constant 2 : index
    %c0_226 = arith.constant 0 : index
    %c0_227 = arith.constant 0 : index
    %228 = vector.load %arg3[%c2_225, %c0_226, %c0_227] : memref<4x4x1xf32, #tpu.memory_space<vmem>>, vector<1x4x1xf32>
    %229 = vector.shape_cast %228 : vector<1x4x1xf32> to vector<4x1xf32>
    %230 = vector.broadcast %229 : vector<4x1xf32> to vector<4x256xf32>
    %231 = arith.addf %227, %230 : vector<4x256xf32>
    %cst_228 = arith.constant 0.000000e+00 : f32
    %232 = vector.broadcast %cst_228 : f32 to vector<4x256xf32>
    %233 = arith.maximumf %231, %232 : vector<4x256xf32>
    %c0_229 = arith.constant 0 : index
    %c128_230 = arith.constant 128 : index
    %234 = vector.load %arg9[%c0_229, %c128_230] : memref<4x512xf32, #tpu.memory_space<vmem>>, vector<4x256xf32>
    tpu.vector_store %arg9[%c0_229, %c128_230], %233 {strides = array<i32>} : memref<4x512xf32, #tpu.memory_space<vmem>>, vector<4x256xf32>,
    %c0_231 = arith.constant 0 : index
    %c111_232 = arith.constant 111 : index
    %235 = vector.load %arg9[%c0_231, %c111_232] : memref<4x512xf32, #tpu.memory_space<vmem>>, vector<4x256xf32>
    %236 = vector.broadcast %22 : vector<1x256xf32> to vector<4x256xf32>
    %237 = arith.mulf %235, %236 : vector<4x256xf32>
    %c0_233 = arith.constant 0 : index
    %c0_234 = arith.constant 0 : index
    %238 = vector.load %arg10[%c0_233, %c0_234] : memref<36x256xf32, #tpu.memory_space<vmem>>, vector<4x256xf32>
    tpu.vector_store %arg10[%c0_233, %c0_234], %237 {strides = array<i32>} : memref<36x256xf32, #tpu.memory_space<vmem>>, vector<4x256xf32>,
    %c0_235 = arith.constant 0 : index
    %c112_236 = arith.constant 112 : index
    %239 = vector.load %arg9[%c0_235, %c112_236] : memref<4x512xf32, #tpu.memory_space<vmem>>, vector<4x256xf32>
    %c4_237 = arith.constant 4 : index
    %c0_238 = arith.constant 0 : index
    %240 = vector.load %arg10[%c4_237, %c0_238] : memref<36x256xf32, #tpu.memory_space<vmem>>, vector<4x256xf32>
    tpu.vector_store %arg10[%c4_237, %c0_238], %239 {strides = array<i32>} : memref<36x256xf32, #tpu.memory_space<vmem>>, vector<4x256xf32>,
    %c0_239 = arith.constant 0 : index
    %c113_240 = arith.constant 113 : index
    %241 = vector.load %arg9[%c0_239, %c113_240] : memref<4x512xf32, #tpu.memory_space<vmem>>, vector<4x256xf32>
    %242 = vector.broadcast %26 : vector<1x256xf32> to vector<4x256xf32>
    %243 = arith.mulf %241, %242 : vector<4x256xf32>
    %c8_241 = arith.constant 8 : index
    %c0_242 = arith.constant 0 : index
    %244 = vector.load %arg10[%c8_241, %c0_242] : memref<36x256xf32, #tpu.memory_space<vmem>>, vector<4x256xf32>
    tpu.vector_store %arg10[%c8_241, %c0_242], %243 {strides = array<i32>} : memref<36x256xf32, #tpu.memory_space<vmem>>, vector<4x256xf32>,
    %c0_243 = arith.constant 0 : index
    %c127_244 = arith.constant 127 : index
    %245 = vector.load %arg9[%c0_243, %c127_244] : memref<4x512xf32, #tpu.memory_space<vmem>>, vector<4x256xf32>
    %246 = vector.broadcast %22 : vector<1x256xf32> to vector<4x256xf32>
    %247 = arith.mulf %245, %246 : vector<4x256xf32>
    %c12_245 = arith.constant 12 : index
    %c0_246 = arith.constant 0 : index
    %248 = vector.load %arg10[%c12_245, %c0_246] : memref<36x256xf32, #tpu.memory_space<vmem>>, vector<4x256xf32>
    tpu.vector_store %arg10[%c12_245, %c0_246], %247 {strides = array<i32>} : memref<36x256xf32, #tpu.memory_space<vmem>>, vector<4x256xf32>,
    %c0_247 = arith.constant 0 : index
    %c128_248 = arith.constant 128 : index
    %249 = vector.load %arg9[%c0_247, %c128_248] : memref<4x512xf32, #tpu.memory_space<vmem>>, vector<4x256xf32>
    %c16_249 = arith.constant 16 : index
    %c0_250 = arith.constant 0 : index
    %250 = vector.load %arg10[%c16_249, %c0_250] : memref<36x256xf32, #tpu.memory_space<vmem>>, vector<4x256xf32>
    tpu.vector_store %arg10[%c16_249, %c0_250], %249 {strides = array<i32>} : memref<36x256xf32, #tpu.memory_space<vmem>>, vector<4x256xf32>,
    %c0_251 = arith.constant 0 : index
    %c129_252 = arith.constant 129 : index
    %251 = vector.load %arg9[%c0_251, %c129_252] : memref<4x512xf32, #tpu.memory_space<vmem>>, vector<4x256xf32>
    %252 = vector.broadcast %26 : vector<1x256xf32> to vector<4x256xf32>
    %253 = arith.mulf %251, %252 : vector<4x256xf32>
    %c20_253 = arith.constant 20 : index
    %c0_254 = arith.constant 0 : index
    %254 = vector.load %arg10[%c20_253, %c0_254] : memref<36x256xf32, #tpu.memory_space<vmem>>, vector<4x256xf32>
    tpu.vector_store %arg10[%c20_253, %c0_254], %253 {strides = array<i32>} : memref<36x256xf32, #tpu.memory_space<vmem>>, vector<4x256xf32>,
    %c0_255 = arith.constant 0 : index
    %c143_256 = arith.constant 143 : index
    %255 = vector.load %arg9[%c0_255, %c143_256] : memref<4x512xf32, #tpu.memory_space<vmem>>, vector<4x256xf32>
    %256 = vector.broadcast %22 : vector<1x256xf32> to vector<4x256xf32>
    %257 = arith.mulf %255, %256 : vector<4x256xf32>
    %c24_257 = arith.constant 24 : index
    %c0_258 = arith.constant 0 : index
    %258 = vector.load %arg10[%c24_257, %c0_258] : memref<36x256xf32, #tpu.memory_space<vmem>>, vector<4x256xf32>
    tpu.vector_store %arg10[%c24_257, %c0_258], %257 {strides = array<i32>} : memref<36x256xf32, #tpu.memory_space<vmem>>, vector<4x256xf32>,
    %c0_259 = arith.constant 0 : index
    %c144_260 = arith.constant 144 : index
    %259 = vector.load %arg9[%c0_259, %c144_260] : memref<4x512xf32, #tpu.memory_space<vmem>>, vector<4x256xf32>
    %c28_261 = arith.constant 28 : index
    %c0_262 = arith.constant 0 : index
    %260 = vector.load %arg10[%c28_261, %c0_262] : memref<36x256xf32, #tpu.memory_space<vmem>>, vector<4x256xf32>
    tpu.vector_store %arg10[%c28_261, %c0_262], %259 {strides = array<i32>} : memref<36x256xf32, #tpu.memory_space<vmem>>, vector<4x256xf32>,
    %c0_263 = arith.constant 0 : index
    %c145_264 = arith.constant 145 : index
    %261 = vector.load %arg9[%c0_263, %c145_264] : memref<4x512xf32, #tpu.memory_space<vmem>>, vector<4x256xf32>
    %262 = vector.broadcast %26 : vector<1x256xf32> to vector<4x256xf32>
    %263 = arith.mulf %261, %262 : vector<4x256xf32>
    %c32_265 = arith.constant 32 : index
    %c0_266 = arith.constant 0 : index
    %264 = vector.load %arg10[%c32_265, %c0_266] : memref<36x256xf32, #tpu.memory_space<vmem>>, vector<4x256xf32>
    tpu.vector_store %arg10[%c32_265, %c0_266], %263 {strides = array<i32>} : memref<36x256xf32, #tpu.memory_space<vmem>>, vector<4x256xf32>,
    %c3 = arith.constant 3 : index
    %c0_267 = arith.constant 0 : index
    %c0_268 = arith.constant 0 : index
    %265 = vector.load %arg2[%c3, %c0_267, %c0_268] : memref<4x4x36xf32, #tpu.memory_space<vmem>>, vector<1x4x36xf32>
    %266 = vector.shape_cast %265 : vector<1x4x36xf32> to vector<4x36xf32>
    %c0_269 = arith.constant 0 : index
    %c0_270 = arith.constant 0 : index
    %267 = vector.load %arg10[%c0_269, %c0_270] : memref<36x256xf32, #tpu.memory_space<vmem>>, vector<36x256xf32>
    %cst_271 = arith.constant dense<0.000000e+00> : vector<4x256xf32>
    %268 = tpu.matmul %266, %267, %cst_271 {dimension_numbers = #tpu.dot_dimension_numbers<[1], [0], [0], [1], [0, 0, 1, 1], [], []>} : vector<4x36xf32>, vector<36x256xf32>, vector<4x256xf32> -> vector<4x256xf32>
    %c3_272 = arith.constant 3 : index
    %c0_273 = arith.constant 0 : index
    %c0_274 = arith.constant 0 : index
    %269 = vector.load %arg3[%c3_272, %c0_273, %c0_274] : memref<4x4x1xf32, #tpu.memory_space<vmem>>, vector<1x4x1xf32>
    %270 = vector.shape_cast %269 : vector<1x4x1xf32> to vector<4x1xf32>
    %271 = vector.broadcast %270 : vector<4x1xf32> to vector<4x256xf32>
    %272 = arith.addf %268, %271 : vector<4x256xf32>
    %cst_275 = arith.constant 0.000000e+00 : f32
    %273 = vector.broadcast %cst_275 : f32 to vector<4x256xf32>
    %274 = arith.maximumf %272, %273 : vector<4x256xf32>
    %c0_276 = arith.constant 0 : index
    %c128_277 = arith.constant 128 : index
    %275 = vector.load %arg9[%c0_276, %c128_277] : memref<4x512xf32, #tpu.memory_space<vmem>>, vector<4x256xf32>
    tpu.vector_store %arg9[%c0_276, %c128_277], %274 {strides = array<i32>} : memref<4x512xf32, #tpu.memory_space<vmem>>, vector<4x256xf32>,
    %c0_278 = arith.constant 0 : index
    %c111_279 = arith.constant 111 : index
    %276 = vector.load %arg9[%c0_278, %c111_279] : memref<4x512xf32, #tpu.memory_space<vmem>>, vector<4x256xf32>
    %277 = vector.broadcast %22 : vector<1x256xf32> to vector<4x256xf32>
    %278 = arith.mulf %276, %277 : vector<4x256xf32>
    %c0_280 = arith.constant 0 : index
    %c0_281 = arith.constant 0 : index
    %279 = vector.load %arg10[%c0_280, %c0_281] : memref<36x256xf32, #tpu.memory_space<vmem>>, vector<4x256xf32>
    tpu.vector_store %arg10[%c0_280, %c0_281], %278 {strides = array<i32>} : memref<36x256xf32, #tpu.memory_space<vmem>>, vector<4x256xf32>,
    %c0_282 = arith.constant 0 : index
    %c112_283 = arith.constant 112 : index
    %280 = vector.load %arg9[%c0_282, %c112_283] : memref<4x512xf32, #tpu.memory_space<vmem>>, vector<4x256xf32>
    %c4_284 = arith.constant 4 : index
    %c0_285 = arith.constant 0 : index
    %281 = vector.load %arg10[%c4_284, %c0_285] : memref<36x256xf32, #tpu.memory_space<vmem>>, vector<4x256xf32>
    tpu.vector_store %arg10[%c4_284, %c0_285], %280 {strides = array<i32>} : memref<36x256xf32, #tpu.memory_space<vmem>>, vector<4x256xf32>,
    %c0_286 = arith.constant 0 : index
    %c113_287 = arith.constant 113 : index
    %282 = vector.load %arg9[%c0_286, %c113_287] : memref<4x512xf32, #tpu.memory_space<vmem>>, vector<4x256xf32>
    %283 = vector.broadcast %26 : vector<1x256xf32> to vector<4x256xf32>
    %284 = arith.mulf %282, %283 : vector<4x256xf32>
    %c8_288 = arith.constant 8 : index
    %c0_289 = arith.constant 0 : index
    %285 = vector.load %arg10[%c8_288, %c0_289] : memref<36x256xf32, #tpu.memory_space<vmem>>, vector<4x256xf32>
    tpu.vector_store %arg10[%c8_288, %c0_289], %284 {strides = array<i32>} : memref<36x256xf32, #tpu.memory_space<vmem>>, vector<4x256xf32>,
    %c0_290 = arith.constant 0 : index
    %c127_291 = arith.constant 127 : index
    %286 = vector.load %arg9[%c0_290, %c127_291] : memref<4x512xf32, #tpu.memory_space<vmem>>, vector<4x256xf32>
    %287 = vector.broadcast %22 : vector<1x256xf32> to vector<4x256xf32>
    %288 = arith.mulf %286, %287 : vector<4x256xf32>
    %c12_292 = arith.constant 12 : index
    %c0_293 = arith.constant 0 : index
    %289 = vector.load %arg10[%c12_292, %c0_293] : memref<36x256xf32, #tpu.memory_space<vmem>>, vector<4x256xf32>
    tpu.vector_store %arg10[%c12_292, %c0_293], %288 {strides = array<i32>} : memref<36x256xf32, #tpu.memory_space<vmem>>, vector<4x256xf32>,
    %c0_294 = arith.constant 0 : index
    %c128_295 = arith.constant 128 : index
    %290 = vector.load %arg9[%c0_294, %c128_295] : memref<4x512xf32, #tpu.memory_space<vmem>>, vector<4x256xf32>
    %c16_296 = arith.constant 16 : index
    %c0_297 = arith.constant 0 : index
    %291 = vector.load %arg10[%c16_296, %c0_297] : memref<36x256xf32, #tpu.memory_space<vmem>>, vector<4x256xf32>
    tpu.vector_store %arg10[%c16_296, %c0_297], %290 {strides = array<i32>} : memref<36x256xf32, #tpu.memory_space<vmem>>, vector<4x256xf32>,
    %c0_298 = arith.constant 0 : index
    %c129_299 = arith.constant 129 : index
    %292 = vector.load %arg9[%c0_298, %c129_299] : memref<4x512xf32, #tpu.memory_space<vmem>>, vector<4x256xf32>
    %293 = vector.broadcast %26 : vector<1x256xf32> to vector<4x256xf32>
    %294 = arith.mulf %292, %293 : vector<4x256xf32>
    %c20_300 = arith.constant 20 : index
    %c0_301 = arith.constant 0 : index
    %295 = vector.load %arg10[%c20_300, %c0_301] : memref<36x256xf32, #tpu.memory_space<vmem>>, vector<4x256xf32>
    tpu.vector_store %arg10[%c20_300, %c0_301], %294 {strides = array<i32>} : memref<36x256xf32, #tpu.memory_space<vmem>>, vector<4x256xf32>,
    %c0_302 = arith.constant 0 : index
    %c143_303 = arith.constant 143 : index
    %296 = vector.load %arg9[%c0_302, %c143_303] : memref<4x512xf32, #tpu.memory_space<vmem>>, vector<4x256xf32>
    %297 = vector.broadcast %22 : vector<1x256xf32> to vector<4x256xf32>
    %298 = arith.mulf %296, %297 : vector<4x256xf32>
    %c24_304 = arith.constant 24 : index
    %c0_305 = arith.constant 0 : index
    %299 = vector.load %arg10[%c24_304, %c0_305] : memref<36x256xf32, #tpu.memory_space<vmem>>, vector<4x256xf32>
    tpu.vector_store %arg10[%c24_304, %c0_305], %298 {strides = array<i32>} : memref<36x256xf32, #tpu.memory_space<vmem>>, vector<4x256xf32>,
    %c0_306 = arith.constant 0 : index
    %c144_307 = arith.constant 144 : index
    %300 = vector.load %arg9[%c0_306, %c144_307] : memref<4x512xf32, #tpu.memory_space<vmem>>, vector<4x256xf32>
    %c28_308 = arith.constant 28 : index
    %c0_309 = arith.constant 0 : index
    %301 = vector.load %arg10[%c28_308, %c0_309] : memref<36x256xf32, #tpu.memory_space<vmem>>, vector<4x256xf32>
    tpu.vector_store %arg10[%c28_308, %c0_309], %300 {strides = array<i32>} : memref<36x256xf32, #tpu.memory_space<vmem>>, vector<4x256xf32>,
    %c0_310 = arith.constant 0 : index
    %c145_311 = arith.constant 145 : index
    %302 = vector.load %arg9[%c0_310, %c145_311] : memref<4x512xf32, #tpu.memory_space<vmem>>, vector<4x256xf32>
    %303 = vector.broadcast %26 : vector<1x256xf32> to vector<4x256xf32>
    %304 = arith.mulf %302, %303 : vector<4x256xf32>
    %c32_312 = arith.constant 32 : index
    %c0_313 = arith.constant 0 : index
    %305 = vector.load %arg10[%c32_312, %c0_313] : memref<36x256xf32, #tpu.memory_space<vmem>>, vector<4x256xf32>
    tpu.vector_store %arg10[%c32_312, %c0_313], %304 {strides = array<i32>} : memref<36x256xf32, #tpu.memory_space<vmem>>, vector<4x256xf32>,
    %c3_314 = arith.constant 3 : index
    %c0_315 = arith.constant 0 : index
    %c0_316 = arith.constant 0 : index
    %306 = vector.load %arg2[%c3_314, %c0_315, %c0_316] : memref<4x4x36xf32, #tpu.memory_space<vmem>>, vector<1x4x36xf32>
    %307 = vector.shape_cast %306 : vector<1x4x36xf32> to vector<4x36xf32>
    %c0_317 = arith.constant 0 : index
    %c0_318 = arith.constant 0 : index
    %308 = vector.load %arg10[%c0_317, %c0_318] : memref<36x256xf32, #tpu.memory_space<vmem>>, vector<36x256xf32>
    %cst_319 = arith.constant dense<0.000000e+00> : vector<4x256xf32>
    %309 = tpu.matmul %307, %308, %cst_319 {dimension_numbers = #tpu.dot_dimension_numbers<[1], [0], [0], [1], [0, 0, 1, 1], [], []>} : vector<4x36xf32>, vector<36x256xf32>, vector<4x256xf32> -> vector<4x256xf32>
    %c3_320 = arith.constant 3 : index
    %c0_321 = arith.constant 0 : index
    %c0_322 = arith.constant 0 : index
    %310 = vector.load %arg3[%c3_320, %c0_321, %c0_322] : memref<4x4x1xf32, #tpu.memory_space<vmem>>, vector<1x4x1xf32>
    %311 = vector.shape_cast %310 : vector<1x4x1xf32> to vector<4x1xf32>
    %312 = vector.broadcast %311 : vector<4x1xf32> to vector<4x256xf32>
    %313 = arith.addf %309, %312 : vector<4x256xf32>
    %cst_323 = arith.constant 0.000000e+00 : f32
    %314 = vector.broadcast %cst_323 : f32 to vector<4x256xf32>
    %315 = arith.maximumf %313, %314 : vector<4x256xf32>
    %c0_324 = arith.constant 0 : index
    %c128_325 = arith.constant 128 : index
    %316 = vector.load %arg9[%c0_324, %c128_325] : memref<4x512xf32, #tpu.memory_space<vmem>>, vector<4x256xf32>
    tpu.vector_store %arg9[%c0_324, %c128_325], %315 {strides = array<i32>} : memref<4x512xf32, #tpu.memory_space<vmem>>, vector<4x256xf32>,
    %c0_326 = arith.constant 0 : index
    %c111_327 = arith.constant 111 : index
    %317 = vector.load %arg9[%c0_326, %c111_327] : memref<4x512xf32, #tpu.memory_space<vmem>>, vector<4x256xf32>
    %318 = vector.broadcast %22 : vector<1x256xf32> to vector<4x256xf32>
    %319 = arith.mulf %317, %318 : vector<4x256xf32>
    %c0_328 = arith.constant 0 : index
    %c0_329 = arith.constant 0 : index
    %320 = vector.load %arg10[%c0_328, %c0_329] : memref<36x256xf32, #tpu.memory_space<vmem>>, vector<4x256xf32>
    tpu.vector_store %arg10[%c0_328, %c0_329], %319 {strides = array<i32>} : memref<36x256xf32, #tpu.memory_space<vmem>>, vector<4x256xf32>,
    %c0_330 = arith.constant 0 : index
    %c112_331 = arith.constant 112 : index
    %321 = vector.load %arg9[%c0_330, %c112_331] : memref<4x512xf32, #tpu.memory_space<vmem>>, vector<4x256xf32>
    %c4_332 = arith.constant 4 : index
    %c0_333 = arith.constant 0 : index
    %322 = vector.load %arg10[%c4_332, %c0_333] : memref<36x256xf32, #tpu.memory_space<vmem>>, vector<4x256xf32>
    tpu.vector_store %arg10[%c4_332, %c0_333], %321 {strides = array<i32>} : memref<36x256xf32, #tpu.memory_space<vmem>>, vector<4x256xf32>,
    %c0_334 = arith.constant 0 : index
    %c113_335 = arith.constant 113 : index
    %323 = vector.load %arg9[%c0_334, %c113_335] : memref<4x512xf32, #tpu.memory_space<vmem>>, vector<4x256xf32>
    %324 = vector.broadcast %26 : vector<1x256xf32> to vector<4x256xf32>
    %325 = arith.mulf %323, %324 : vector<4x256xf32>
    %c8_336 = arith.constant 8 : index
    %c0_337 = arith.constant 0 : index
    %326 = vector.load %arg10[%c8_336, %c0_337] : memref<36x256xf32, #tpu.memory_space<vmem>>, vector<4x256xf32>
    tpu.vector_store %arg10[%c8_336, %c0_337], %325 {strides = array<i32>} : memref<36x256xf32, #tpu.memory_space<vmem>>, vector<4x256xf32>,
    %c0_338 = arith.constant 0 : index
    %c127_339 = arith.constant 127 : index
    %327 = vector.load %arg9[%c0_338, %c127_339] : memref<4x512xf32, #tpu.memory_space<vmem>>, vector<4x256xf32>
    %328 = vector.broadcast %22 : vector<1x256xf32> to vector<4x256xf32>
    %329 = arith.mulf %327, %328 : vector<4x256xf32>
    %c12_340 = arith.constant 12 : index
    %c0_341 = arith.constant 0 : index
    %330 = vector.load %arg10[%c12_340, %c0_341] : memref<36x256xf32, #tpu.memory_space<vmem>>, vector<4x256xf32>
    tpu.vector_store %arg10[%c12_340, %c0_341], %329 {strides = array<i32>} : memref<36x256xf32, #tpu.memory_space<vmem>>, vector<4x256xf32>,
    %c0_342 = arith.constant 0 : index
    %c128_343 = arith.constant 128 : index
    %331 = vector.load %arg9[%c0_342, %c128_343] : memref<4x512xf32, #tpu.memory_space<vmem>>, vector<4x256xf32>
    %c16_344 = arith.constant 16 : index
    %c0_345 = arith.constant 0 : index
    %332 = vector.load %arg10[%c16_344, %c0_345] : memref<36x256xf32, #tpu.memory_space<vmem>>, vector<4x256xf32>
    tpu.vector_store %arg10[%c16_344, %c0_345], %331 {strides = array<i32>} : memref<36x256xf32, #tpu.memory_space<vmem>>, vector<4x256xf32>,
    %c0_346 = arith.constant 0 : index
    %c129_347 = arith.constant 129 : index
    %333 = vector.load %arg9[%c0_346, %c129_347] : memref<4x512xf32, #tpu.memory_space<vmem>>, vector<4x256xf32>
    %334 = vector.broadcast %26 : vector<1x256xf32> to vector<4x256xf32>
    %335 = arith.mulf %333, %334 : vector<4x256xf32>
    %c20_348 = arith.constant 20 : index
    %c0_349 = arith.constant 0 : index
    %336 = vector.load %arg10[%c20_348, %c0_349] : memref<36x256xf32, #tpu.memory_space<vmem>>, vector<4x256xf32>
    tpu.vector_store %arg10[%c20_348, %c0_349], %335 {strides = array<i32>} : memref<36x256xf32, #tpu.memory_space<vmem>>, vector<4x256xf32>,
    %c0_350 = arith.constant 0 : index
    %c143_351 = arith.constant 143 : index
    %337 = vector.load %arg9[%c0_350, %c143_351] : memref<4x512xf32, #tpu.memory_space<vmem>>, vector<4x256xf32>
    %338 = vector.broadcast %22 : vector<1x256xf32> to vector<4x256xf32>
    %339 = arith.mulf %337, %338 : vector<4x256xf32>
    %c24_352 = arith.constant 24 : index
    %c0_353 = arith.constant 0 : index
    %340 = vector.load %arg10[%c24_352, %c0_353] : memref<36x256xf32, #tpu.memory_space<vmem>>, vector<4x256xf32>
    tpu.vector_store %arg10[%c24_352, %c0_353], %339 {strides = array<i32>} : memref<36x256xf32, #tpu.memory_space<vmem>>, vector<4x256xf32>,
    %c0_354 = arith.constant 0 : index
    %c144_355 = arith.constant 144 : index
    %341 = vector.load %arg9[%c0_354, %c144_355] : memref<4x512xf32, #tpu.memory_space<vmem>>, vector<4x256xf32>
    %c28_356 = arith.constant 28 : index
    %c0_357 = arith.constant 0 : index
    %342 = vector.load %arg10[%c28_356, %c0_357] : memref<36x256xf32, #tpu.memory_space<vmem>>, vector<4x256xf32>
    tpu.vector_store %arg10[%c28_356, %c0_357], %341 {strides = array<i32>} : memref<36x256xf32, #tpu.memory_space<vmem>>, vector<4x256xf32>,
    %c0_358 = arith.constant 0 : index
    %c145_359 = arith.constant 145 : index
    %343 = vector.load %arg9[%c0_358, %c145_359] : memref<4x512xf32, #tpu.memory_space<vmem>>, vector<4x256xf32>
    %344 = vector.broadcast %26 : vector<1x256xf32> to vector<4x256xf32>
    %345 = arith.mulf %343, %344 : vector<4x256xf32>
    %c32_360 = arith.constant 32 : index
    %c0_361 = arith.constant 0 : index
    %346 = vector.load %arg10[%c32_360, %c0_361] : memref<36x256xf32, #tpu.memory_space<vmem>>, vector<4x256xf32>
    tpu.vector_store %arg10[%c32_360, %c0_361], %345 {strides = array<i32>} : memref<36x256xf32, #tpu.memory_space<vmem>>, vector<4x256xf32>,
    %c3_362 = arith.constant 3 : index
    %c0_363 = arith.constant 0 : index
    %c0_364 = arith.constant 0 : index
    %347 = vector.load %arg2[%c3_362, %c0_363, %c0_364] : memref<4x4x36xf32, #tpu.memory_space<vmem>>, vector<1x4x36xf32>
    %348 = vector.shape_cast %347 : vector<1x4x36xf32> to vector<4x36xf32>
    %c0_365 = arith.constant 0 : index
    %c0_366 = arith.constant 0 : index
    %349 = vector.load %arg10[%c0_365, %c0_366] : memref<36x256xf32, #tpu.memory_space<vmem>>, vector<36x256xf32>
    %cst_367 = arith.constant dense<0.000000e+00> : vector<4x256xf32>
    %350 = tpu.matmul %348, %349, %cst_367 {dimension_numbers = #tpu.dot_dimension_numbers<[1], [0], [0], [1], [0, 0, 1, 1], [], []>} : vector<4x36xf32>, vector<36x256xf32>, vector<4x256xf32> -> vector<4x256xf32>
    %c3_368 = arith.constant 3 : index
    %c0_369 = arith.constant 0 : index
    %c0_370 = arith.constant 0 : index
    %351 = vector.load %arg3[%c3_368, %c0_369, %c0_370] : memref<4x4x1xf32, #tpu.memory_space<vmem>>, vector<1x4x1xf32>
    %352 = vector.shape_cast %351 : vector<1x4x1xf32> to vector<4x1xf32>
    %353 = vector.broadcast %352 : vector<4x1xf32> to vector<4x256xf32>
    %354 = arith.addf %350, %353 : vector<4x256xf32>
    %cst_371 = arith.constant 0.000000e+00 : f32
    %355 = vector.broadcast %cst_371 : f32 to vector<4x256xf32>
    %356 = arith.maximumf %354, %355 : vector<4x256xf32>
    %c0_372 = arith.constant 0 : index
    %c0_373 = arith.constant 0 : index
    %357 = vector.load %arg10[%c0_372, %c0_373] : memref<36x256xf32, #tpu.memory_space<vmem>>, vector<4x256xf32>
    tpu.vector_store %arg10[%c0_372, %c0_373], %110 {strides = array<i32>} : memref<36x256xf32, #tpu.memory_space<vmem>>, vector<4x256xf32>,
    %c4_374 = arith.constant 4 : index
    %c0_375 = arith.constant 0 : index
    %358 = vector.load %arg10[%c4_374, %c0_375] : memref<36x256xf32, #tpu.memory_space<vmem>>, vector<4x256xf32>
    tpu.vector_store %arg10[%c4_374, %c0_375], %356 {strides = array<i32>} : memref<36x256xf32, #tpu.memory_space<vmem>>, vector<4x256xf32>,
    %c0_376 = arith.constant 0 : index
    %c0_377 = arith.constant 0 : index
    %359 = vector.load %arg4[%c0_376, %c0_377] : memref<4x8xf32, #tpu.memory_space<vmem>>, vector<4x8xf32>
    %c0_378 = arith.constant 0 : index
    %c0_379 = arith.constant 0 : index
    %360 = vector.load %arg10[%c0_378, %c0_379] : memref<36x256xf32, #tpu.memory_space<vmem>>, vector<8x256xf32>
    %cst_380 = arith.constant dense<0.000000e+00> : vector<4x256xf32>
    %361 = tpu.matmul %359, %360, %cst_380 {dimension_numbers = #tpu.dot_dimension_numbers<[1], [0], [0], [1], [0, 0, 1, 1], [], []>} : vector<4x8xf32>, vector<8x256xf32>, vector<4x256xf32> -> vector<4x256xf32>
    %c0_381 = arith.constant 0 : index
    %c0_382 = arith.constant 0 : index
    %362 = vector.load %arg5[%c0_381, %c0_382] : memref<4x1xf32, #tpu.memory_space<vmem>>, vector<4x1xf32>
    %363 = vector.broadcast %362 : vector<4x1xf32> to vector<4x256xf32>
    %364 = arith.addf %361, %363 : vector<4x256xf32>
    %cst_383 = arith.constant 0.000000e+00 : f32
    %365 = vector.broadcast %cst_383 : f32 to vector<4x256xf32>
    %366 = arith.maximumf %364, %365 : vector<4x256xf32>
    %c0_384 = arith.constant 0 : index
    %c0_385 = arith.constant 0 : index
    %367 = vector.load %arg6[%c0_384, %c0_385] : memref<4x4xf32, #tpu.memory_space<vmem>>, vector<4x4xf32>
    %cst_386 = arith.constant dense<0.000000e+00> : vector<4x256xf32>
    %368 = tpu.matmul %367, %28, %cst_386 {dimension_numbers = #tpu.dot_dimension_numbers<[1], [0], [0], [1], [0, 0, 1, 1], [], []>} : vector<4x4xf32>, vector<4x256xf32>, vector<4x256xf32> -> vector<4x256xf32>
    %c0_387 = arith.constant 0 : index
    %c0_388 = arith.constant 0 : index
    %369 = vector.load %arg7[%c0_387, %c0_388] : memref<4x1xf32, #tpu.memory_space<vmem>>, vector<4x1xf32>
    %370 = vector.broadcast %369 : vector<4x1xf32> to vector<4x256xf32>
    %371 = arith.addf %368, %370 : vector<4x256xf32>
    %372 = arith.addf %366, %371 : vector<4x256xf32>
    %c0_389 = arith.constant 0 : index
    %c0_390 = arith.constant 0 : index
    %c0_391 = arith.constant 0 : index
    %373 = vector.load %arg8[%c0_389, %c0_390, %c0_391] : memref<1x4x256xf32, #tpu.memory_space<vmem>>, vector<1x4x256xf32>
    %374 = vector.shape_cast %373 : vector<1x4x256xf32> to vector<4x256xf32>
    %375 = vector.shape_cast %372 : vector<4x256xf32> to vector<1x4x256xf32>
    tpu.vector_store %arg8[%c0_389, %c0_390, %c0_391], %375 {strides = array<i32>} : memref<1x4x256xf32, #tpu.memory_space<vmem>>, vector<1x4x256xf32>,
    return
  }
  func.func @transform_0(%arg0: i32) -> (i32, i32, i32) {
    %c0_i32 = arith.constant 0 : i32
    %c0_i32_0 = arith.constant 0 : i32
    %c0_i32_1 = arith.constant 0 : i32
    return %arg0, %c0_i32, %c0_i32_0 : i32, i32, i32
  }
  func.func @transform_1(%arg0: i32) -> (i32, i32, i32) {
    %c0_i32 = arith.constant 0 : i32
    %c0_i32_0 = arith.constant 0 : i32
    %c0_i32_1 = arith.constant 0 : i32
    %c0_i32_2 = arith.constant 0 : i32
    return %c0_i32, %c0_i32_0, %c0_i32_1 : i32, i32, i32
  }
  func.func @transform_2(%arg0: i32) -> (i32, i32, i32) {
    %c0_i32 = arith.constant 0 : i32
    %c0_i32_0 = arith.constant 0 : i32
    %c0_i32_1 = arith.constant 0 : i32
    %c0_i32_2 = arith.constant 0 : i32
    return %c0_i32, %c0_i32_0, %c0_i32_1 : i32, i32, i32
  }
  func.func @transform_3(%arg0: i32) -> (i32, i32) {
    %c0_i32 = arith.constant 0 : i32
    %c0_i32_0 = arith.constant 0 : i32
    %c0_i32_1 = arith.constant 0 : i32
    return %c0_i32, %c0_i32_0 : i32, i32
  }
  func.func @transform_4(%arg0: i32) -> (i32, i32) {
    %c0_i32 = arith.constant 0 : i32
    %c0_i32_0 = arith.constant 0 : i32
    %c0_i32_1 = arith.constant 0 : i32
    return %c0_i32, %c0_i32_0 : i32, i32
  }
  func.func @transform_5(%arg0: i32) -> (i32, i32) {
    %c0_i32 = arith.constant 0 : i32
    %c0_i32_0 = arith.constant 0 : i32
    %c0_i32_1 = arith.constant 0 : i32
    return %c0_i32, %c0_i32_0 : i32, i32
  }
  func.func @transform_6(%arg0: i32) -> (i32, i32) {
    %c0_i32 = arith.constant 0 : i32
    %c0_i32_0 = arith.constant 0 : i32
    %c0_i32_1 = arith.constant 0 : i32
    return %c0_i32, %c0_i32_0 : i32, i32
  }
  func.func @transform_7(%arg0: i32) -> (i32, i32, i32) {
    %c0_i32 = arith.constant 0 : i32
    %c0_i32_0 = arith.constant 0 : i32
    %c0_i32_1 = arith.constant 0 : i32
    return %arg0, %c0_i32, %c0_i32_0 : i32, i32, i32
  }
}

</mosaic_0001>

<llo_original>
// kernel: tpu_custom_call.1
$region0: #{tpu_custom_call.1}
  #allocation0 [shape = 'u32[]', space=smem, size = 0x4, offset = 0x4, fixed_abs, tag = 'smem constant byte address 0x4 - core index']
  #allocation1 [shape = 'u32[144,128]{1,0:T(1,128)}', space=vmem, size = 0x12000, scoped, tag = 'internal scratch']
  #allocation2 [shape = 'f32[4,512]{1,0:T(4,128)}', space=vmem, size = 0x2000, scoped, tag = 'scratch operand']
  #allocation3 [shape = 'f32[36,256]{1,0:T(8,128)}', space=vmem, size = 0xa000, scoped, tag = 'scratch operand']
  %s0 = inlined_call_operand.vmem [shape: f32[2,4,256], index: 0, kind: input, shape index: {}]
  %s1 = inlined_call_operand.hbm [shape: f32[4,4,36], index: 1, kind: input, shape index: {}]
  %s2 = inlined_call_operand.vmem [shape: f32[4,4,1], index: 2, kind: input, shape index: {}]
  %s3 = inlined_call_operand.vmem [shape: f32[4,8], index: 3, kind: input, shape index: {}]
  %s4 = inlined_call_operand.vmem [shape: f32[4,1], index: 4, kind: input, shape index: {}]
  %s5 = inlined_call_operand.vmem [shape: f32[4,4], index: 5, kind: input, shape index: {}]
  %s6 = inlined_call_operand.vmem [shape: f32[4,1], index: 6, kind: input, shape index: {}]
  %s7 = inlined_call_operand.hbm [shape: f32[2,4,256], index: 7, kind: output, shape index: {}]
  %s8 = sld [smem:[#allocation0]]
  $region65: #{tpu_custom_call.1} parent=0
    _
  %s10 = ssub.s32 1, %s8
  %s11 = scalar_select 0, %s10, %s8
  $region1: #{tpu_custom_call.1} parent=0
    #allocation4 [shape = 'u8[8192]{0}', space=vmem, size = 0x2000, scoped, tag = 'input window, operand 1, single buffered']
    #allocation5 [shape = 's32[2]{0}', space=sflag, size = 0x8, scoped, tag = 'scoped memory for tpu_custom_call.1']
    #allocation6 [shape = 's32[2]{0}', space=sflag, size = 0x8, scoped, tag = 'scoped memory for tpu_custom_call.1']
    #allocation7 [shape = 'u8[8192]{0}', space=vmem, size = 0x2000, scoped, tag = 'output window, operand 0']
    %12 = vsyncpa [#allocation5], 0
    %13 = vsyncpa [#allocation6], 0
    %s14 = scalar_lea.sflag [#allocation6], 1
    %15 = vsyncpa %s14, 0
    loop: start=0, step=1, limit=4
    $region2: #{tpu_custom_call.1} parent=1 // loop_pre_header
      _
    $region3: #{tpu_custom_call.1} parent=1 // loop_header
      %s17 = sphi 0, %s21
      %p18 = scmp.ge.s32.totalorder %s17, 4
      %s27 = sphi 0, %s29
      %s30 = sphi 0, %s27
      %s31 = sphi 0, %s30
      %s47 = sphi 0, %s31
      %s51 = sphi 0, %s51
      %s53 = sphi 0, %s51
      %s54 = sphi 0, %s53
      %s68 = sphi 0, %s54
      %s72 = sphi 0, %s72
      %s74 = sphi 0, %s72
      %s75 = sphi 0, %s74
      %s89 = sphi 0, %s75
      %s93 = sphi 0, %s93
      %s95 = sphi 0, %s93
      %s96 = sphi 0, %s95
      %s110 = sphi 0, %s96
      %s114 = sphi 0, %s114
      %s116 = sphi 0, %s114
      %s117 = sphi 0, %s116
      %s131 = sphi 0, %s117
      %s135 = sphi 0, %s135
      %s137 = sphi 0, %s135
      %s138 = sphi 0, %s137
      %s152 = sphi 0, %s138
      %s156 = sphi 0, %s156
      %s158 = sphi 0, %s156
      %s159 = sphi 0, %s158
      %s173 = sphi 0, %s159
      %s179 = sphi 0, %s181
      %s182 = sphi 0, %s179
      %s183 = sphi 0, %s182
      %s199 = sphi 0, %s183
    $region4: #{tpu_custom_call.1} parent=1 // loop_header_branch
      %20 = sbr.rel (%p18) target = $region8
    $region5: #{tpu_custom_call.1} parent=1 // loop_body
      %s22 = ssub.s32 %s17, 1
      %s23 = ssub.s32 %s17, 2
      %s24 = sadd.s32 %s17, 1
      %s25 = ssub.s32 %s17, %s24
      %p26 = scmp.eq.s32.totalorder %s25, 0
      %s28 = sadd.s32 %s27, 1
      %s29 = scalar_select %p26, %s27, %s28
      %p32 = pneg %p26
      %p33 = scmp.eq.s32.totalorder %s17, 1
      %p34 = por %p32, %p33
      %p35 = scmp.ne.s32.totalorder %s27, %s30
      %p36 = scmp.eq.s32.totalorder %s17, 0
      %p37 = por %p35, %p36
      %p38 = scmp.ne.s32.totalorder %s27, %s30
      %p39 = scmp.eq.s32.totalorder %s22, 1
      %p40 = por %p38, %p39
      %p41 = scmp.ne.s32.totalorder %s30, %s31
      %p42 = scmp.eq.s32.totalorder %s22, 0
      %p43 = por %p41, %p42
      %p44 = scmp.ne.s32.totalorder %s30, %s31
      %p45 = scmp.eq.s32.totalorder %s23, 1
      %p46 = por %p44, %p45
      %p48 = scmp.ne.s32.totalorder %s31, %s47
      %p49 = scmp.eq.s32.totalorder %s23, 0
      %p50 = por %p48, %p49
      %s52 = sadd.s32 %s51, 1
      %p55 = scmp.eq.s32.totalorder %s17, 1
      %p56 = scmp.ne.s32.totalorder %s51, %s53
      %p57 = scmp.eq.s32.totalorder %s17, 0
      %p58 = por %p56, %p57
      %p59 = scmp.ne.s32.totalorder %s51, %s53
      %p60 = scmp.eq.s32.totalorder %s22, 1
      %p61 = por %p59, %p60
      %p62 = scmp.ne.s32.totalorder %s53, %s54
      %p63 = scmp.eq.s32.totalorder %s22, 0
      %p64 = por %p62, %p63
      %p65 = scmp.ne.s32.totalorder %s53, %s54
      %p66 = scmp.eq.s32.totalorder %s23, 1
      %p67 = por %p65, %p66
      %p69 = scmp.ne.s32.totalorder %s54, %s68
      %p70 = scmp.eq.s32.totalorder %s23, 0
      %p71 = por %p69, %p70
      %s73 = sadd.s32 %s72, 1
      %p76 = scmp.eq.s32.totalorder %s17, 1
      %p77 = scmp.ne.s32.totalorder %s72, %s74
      %p78 = scmp.eq.s32.totalorder %s17, 0
      %p79 = por %p77, %p78
      %p80 = scmp.ne.s32.totalorder %s72, %s74
      %p81 = scmp.eq.s32.totalorder %s22, 1
      %p82 = por %p80, %p81
      %p83 = scmp.ne.s32.totalorder %s74, %s75
      %p84 = scmp.eq.s32.totalorder %s22, 0
      %p85 = por %p83, %p84
      %p86 = scmp.ne.s32.totalorder %s74, %s75
      %p87 = scmp.eq.s32.totalorder %s23, 1
      %p88 = por %p86, %p87
      %p90 = scmp.ne.s32.totalorder %s75, %s89
      %p91 = scmp.eq.s32.totalorder %s23, 0
      %p92 = por %p90, %p91
      %s94 = sadd.s32 %s93, 1
      %p97 = scmp.eq.s32.totalorder %s17, 1
      %p98 = scmp.ne.s32.totalorder %s93, %s95
      %p99 = scmp.eq.s32.totalorder %s17, 0
      %p100 = por %p98, %p99
      %p101 = scmp.ne.s32.totalorder %s93, %s95
      %p102 = scmp.eq.s32.totalorder %s22, 1
      %p103 = por %p101, %p102
      %p104 = scmp.ne.s32.totalorder %s95, %s96
      %p105 = scmp.eq.s32.totalorder %s22, 0
      %p106 = por %p104, %p105
      %p107 = scmp.ne.s32.totalorder %s95, %s96
      %p108 = scmp.eq.s32.totalorder %s23, 1
      %p109 = por %p107, %p108
      %p111 = scmp.ne.s32.totalorder %s96, %s110
      %p112 = scmp.eq.s32.totalorder %s23, 0
      %p113 = por %p111, %p112
      %s115 = sadd.s32 %s114, 1
      %p118 = scmp.eq.s32.totalorder %s17, 1
      %p119 = scmp.ne.s32.totalorder %s114, %s116
      %p120 = scmp.eq.s32.totalorder %s17, 0
      %p121 = por %p119, %p120
      %p122 = scmp.ne.s32.totalorder %s114, %s116
      %p123 = scmp.eq.s32.totalorder %s22, 1
      %p124 = por %p122, %p123
      %p125 = scmp.ne.s32.totalorder %s116, %s117
      %p126 = scmp.eq.s32.totalorder %s22, 0
      %p127 = por %p125, %p126
      %p128 = scmp.ne.s32.totalorder %s116, %s117
      %p129 = scmp.eq.s32.totalorder %s23, 1
      %p130 = por %p128, %p129
      %p132 = scmp.ne.s32.totalorder %s117, %s131
      %p133 = scmp.eq.s32.totalorder %s23, 0
      %p134 = por %p132, %p133
      %s136 = sadd.s32 %s135, 1
      %p139 = scmp.eq.s32.totalorder %s17, 1
      %p140 = scmp.ne.s32.totalorder %s135, %s137
      %p141 = scmp.eq.s32.totalorder %s17, 0
      %p142 = por %p140, %p141
      %p143 = scmp.ne.s32.totalorder %s135, %s137
      %p144 = scmp.eq.s32.totalorder %s22, 1
      %p145 = por %p143, %p144
      %p146 = scmp.ne.s32.totalorder %s137, %s138
      %p147 = scmp.eq.s32.totalorder %s22, 0
      %p148 = por %p146, %p147
      %p149 = scmp.ne.s32.totalorder %s137, %s138
      %p150 = scmp.eq.s32.totalorder %s23, 1
      %p151 = por %p149, %p150
      %p153 = scmp.ne.s32.totalorder %s138, %s152
      %p154 = scmp.eq.s32.totalorder %s23, 0
      %p155 = por %p153, %p154
      %s157 = sadd.s32 %s156, 1
      %p160 = scmp.eq.s32.totalorder %s17, 1
      %p161 = scmp.ne.s32.totalorder %s156, %s158
      %p162 = scmp.eq.s32.totalorder %s17, 0
      %p163 = por %p161, %p162
      %p164 = scmp.ne.s32.totalorder %s156, %s158
      %p165 = scmp.eq.s32.totalorder %s22, 1
      %p166 = por %p164, %p165
      %p167 = scmp.ne.s32.totalorder %s158, %s159
      %p168 = scmp.eq.s32.totalorder %s22, 0
      %p169 = por %p167, %p168
      %p170 = scmp.ne.s32.totalorder %s158, %s159
      %p171 = scmp.eq.s32.totalorder %s23, 1
      %p172 = por %p170, %p171
      %p174 = scmp.ne.s32.totalorder %s159, %s173
      %p175 = scmp.eq.s32.totalorder %s23, 0
      %p176 = por %p174, %p175
      %s177 = ssub.s32 %s17, %s24
      %p178 = scmp.eq.s32.totalorder %s177, 0
      %s180 = sadd.s32 %s179, 1
      %s181 = scalar_select %p178, %s179, %s180
      %p184 = pneg %p178
      %p185 = scmp.eq.s32.totalorder %s17, 1
      %p186 = por %p184, %p185
      %p187 = scmp.ne.s32.totalorder %s179, %s182
      %p188 = scmp.eq.s32.totalorder %s17, 0
      %p189 = por %p187, %p188
      %p190 = scmp.ne.s32.totalorder %s179, %s182
      %p191 = scmp.eq.s32.totalorder %s22, 1
      %p192 = por %p190, %p191
      %p193 = scmp.ne.s32.totalorder %s182, %s183
      %p194 = scmp.eq.s32.totalorder %s22, 0
      %p195 = por %p193, %p194
      %p196 = scmp.ne.s32.totalorder %s182, %s183
      %p197 = scmp.eq.s32.totalorder %s23, 1
      %p198 = por %p196, %p197
      %p200 = scmp.ne.s32.totalorder %s183, %s199
      %p201 = scmp.eq.s32.totalorder %s23, 0
      %p202 = por %p200, %p201
      %p203 = scmp.le.s32.totalorder 1, %s17
      %p204 = scmp.lt.s32.totalorder %s17, 3
      %p205 = pnand %p203, %p204
      %p206 = pneg %p205
      // Predicated region
      $region9: #{tpu_custom_call.1} parent=5 // pred_check
        _
      $region10: #{tpu_custom_call.1} parent=5 // pred_check_branch
        %208 = sbr.rel (%p205) target = $region12
      $region11: #{tpu_custom_call.1} parent=5 // pred_region
        %s209 = ssub.s32 %s17, 1
        // Predicated region
        $region13: #{tpu_custom_call.1} parent=11 // pred_check
          %p210 = pneg %p64
        $region14: #{tpu_custom_call.1} parent=11 // pred_check_branch
          %212 = sbr.rel (%p210) target = $region16
        $region15: #{tpu_custom_call.1} parent=11 // pred_region
          %s214 = ssub.s32 256, 256
          %215 = vsyncadd [#allocation5], %s214
          %s216 = sshll.u32 [#allocation4], 4
          %s217 = int_to_ptr.vmem [resolvable:$true] %s216
          %222 = dma.hbm_to_vmem [thread:$0]  %s1, 256, %s217, [#allocation5], 64, 64, 4
        $region16: #{tpu_custom_call.1} parent=11 // pred_fallthru
          _
        // Predicated region
        $region17: #{tpu_custom_call.1} parent=11 // pred_check
          %p223 = pneg %p85
        $region18: #{tpu_custom_call.1} parent=11 // pred_check_branch
          %225 = sbr.rel (%p223) target = $region20
        $region19: #{tpu_custom_call.1} parent=11 // pred_region
          _
        $region20: #{tpu_custom_call.1} parent=11 // pred_fallthru
          _
        // Predicated region
        $region21: #{tpu_custom_call.1} parent=11 // pred_check
          %p226 = pneg %p106
        $region22: #{tpu_custom_call.1} parent=11 // pred_check_branch
          %228 = sbr.rel (%p226) target = $region24
        $region23: #{tpu_custom_call.1} parent=11 // pred_region
          _
        $region24: #{tpu_custom_call.1} parent=11 // pred_fallthru
          _
        // Predicated region
        $region25: #{tpu_custom_call.1} parent=11 // pred_check
          %p229 = pneg %p127
        $region26: #{tpu_custom_call.1} parent=11 // pred_check_branch
          %231 = sbr.rel (%p229) target = $region28
        $region27: #{tpu_custom_call.1} parent=11 // pred_region
          _
        $region28: #{tpu_custom_call.1} parent=11 // pred_fallthru
          _
        // Predicated region
        $region29: #{tpu_custom_call.1} parent=11 // pred_check
          %p232 = pneg %p148
        $region30: #{tpu_custom_call.1} parent=11 // pred_check_branch
          %234 = sbr.rel (%p232) target = $region32
        $region31: #{tpu_custom_call.1} parent=11 // pred_region
          _
        $region32: #{tpu_custom_call.1} parent=11 // pred_fallthru
          _
        // Predicated region
        $region33: #{tpu_custom_call.1} parent=11 // pred_check
          %p235 = pneg %p169
        $region34: #{tpu_custom_call.1} parent=11 // pred_check_branch
          %237 = sbr.rel (%p235) target = $region36
        $region35: #{tpu_custom_call.1} parent=11 // pred_region
          _
        $region36: #{tpu_custom_call.1} parent=11 // pred_fallthru
          _
      $region12: #{tpu_custom_call.1} parent=5 // pred_fallthru
        _
      %p238 = scmp.lt.s32.totalorder %s17, 2
      // Predicated region
      $region37: #{tpu_custom_call.1} parent=5 // pred_check
        %p239 = pneg %p238
      $region38: #{tpu_custom_call.1} parent=5 // pred_check_branch
        %241 = sbr.rel (%p239) target = $region40
      $region39: #{tpu_custom_call.1} parent=5 // pred_region
        // Predicated region
        $region41: #{tpu_custom_call.1} parent=39 // pred_check
          %p242 = pneg %p37
        $region42: #{tpu_custom_call.1} parent=39 // pred_check_branch
          %244 = sbr.rel (%p242) target = $region44
        $region43: #{tpu_custom_call.1} parent=39 // pred_region
          %p245 = scmp.lt.s32.totalorder %s17, 1
          %s246 = scalar_select %p245, %s17, 1
          %s247 = smul.addr %s246, 2
          %s248 = smul.addr %s247, 4
          %s249 = scalar_lea.vmem %s0, %s248
        $region44: #{tpu_custom_call.1} parent=39 // pred_fallthru
          _
      $region40: #{tpu_custom_call.1} parent=5 // pred_fallthru
        _
      %p250 = scmp.le.s32.totalorder 1, %s17
      %p251 = scmp.lt.s32.totalorder %s17, 3
      %p252 = pnand %p250, %p251
      %p253 = pneg %p252
      // Predicated region
      $region45: #{tpu_custom_call.1} parent=5 // pred_check
        _
      $region46: #{tpu_custom_call.1} parent=5 // pred_check_branch
        %255 = sbr.rel (%p252) target = $region48
      $region47: #{tpu_custom_call.1} parent=5 // pred_region
        %s256 = ssub.s32 %s17, 1
        // Predicated region
        $region49: #{tpu_custom_call.1} parent=47 // pred_check
          %p257 = pneg %p64
        $region50: #{tpu_custom_call.1} parent=47 // pred_check_branch
          %259 = sbr.rel (%p257) target = $region52
        $region51: #{tpu_custom_call.1} parent=47 // pred_region
          %260 = dma.done [#allocation5], 256
        $region52: #{tpu_custom_call.1} parent=47 // pred_fallthru
          _
        %p261 = scmp.lt.s32.totalorder %s22, 1
        %s262 = scalar_select %p261, %s22, 1
        %s263 = smul.addr %s262, 2
        %s264 = smul.addr %s263, 4
        %s265 = scalar_lea.vmem %s0, %s264
        %p266 = pneg %p43
        %p267 = pneg %p40
        %p268 = pneg %p64
        %p269 = pneg %p61
        %p270 = pneg %p85
        %p271 = pneg %p82
        %p272 = pneg %p106
        %p273 = pneg %p103
        %p274 = pneg %p127
        %p275 = pneg %p124
        %p276 = pneg %p148
        %p277 = pneg %p145
        %p278 = pneg %p169
        %p279 = pneg %p166
        %p280 = pneg %p195
        %p281 = pneg %p192
        %s282 = sand.u32 %s182, 1
        %s283 = scalar_lea.sflag [#allocation6], %s282
        %s284 = sand.u32 %s182, 1
        %s285 = smul.addr %s284, 8
        %s286 = scalar_lea.vmem [#allocation7], %s285
        %p287 = scmp.lt.s32.totalorder %s22, 1
        %s288 = scalar_select %p287, %s22, 1
        %s289 = smul.addr %s288, 2
        %s290 = smul.addr %s289, 4
        %s291 = scalar_lea.vmem %s0, %s290
        %292 = vst [vmem:[#allocation2] sm:$0xff] 0.0
        %293 = vst [vmem:[#allocation2 + $0x8] sm:$0xff] 0.0
        %v294 = vlaneseq
        %v295 = vand.u32 %v294, 127
        %v296 = vadd.s32 %v295, 128
        %vm297 = vcmp.lt.s32.totalorder %v295, 0
        %v298 = vsub.s32 0, %v295
        %v299 = vsel %vm297, %v298, %v295
        %v300 = vshrl.u32 %v299, 4
        %v301 = vand.u32 %v299, 15
        %v302 = vsub.s32 0, %v301
        %v303 = vsel %vm297, %v302, %v301
        %vm304 = vcmp.lt.s32.totalorder %v296, 0
        %v305 = vsub.s32 0, %v296
        %v306 = vsel %vm304, %v305, %v296
        %v307 = vshrl.u32 %v306, 4
        %v308 = vand.u32 %v306, 15
        %v309 = vsub.s32 0, %v308
        %v310 = vsel %vm304, %v309, %v308
        %vm311 = vcmp.ne.s32.totalorder %v303, 0
        %vm312 = vcmp.ne.s32.totalorder %v310, 0
        %vm313 = vcmp.lt.s32.totalorder %v303, 0
        %vm314 = vcmp.lt.s32.totalorder %v310, 0
        %vm315 = vmand %vm313, %vm311
        %vm316 = vmand %vm314, %vm312
        %v317 = vadd.s32 %v303, 16
        %v318 = vadd.s32 %v310, 16
        %v319 = vsel %vm315, %v317, %v303
        %v320 = vsel %vm316, %v318, %v310
        %vm321 = vcmp.ge.s32.totalorder %v319, 1
        %vm322 = vcmp.ge.s32.totalorder %v320, 1
        %v323 = vsel %vm321, 1, 0
        %v324 = vsel %vm322, 1, 0
        %v325 = vcvt.s32.f32 %v323
        %v326 = vcvt.s32.f32 %v324
        %vm327 = vcmp.le.s32.totalorder %v319, 14
        %vm328 = vcmp.le.s32.totalorder %v320, 14
        %v329 = vsel %vm327, 1, 0
        %v330 = vsel %vm328, 1, 0
        %v331 = vcvt.s32.f32 %v329
        %v332 = vcvt.s32.f32 %v330
        %v333 = vld [vmem:[%s291] sm:$0xff]
        %334 = vst [vmem:[#allocation2 + $0x4] sm:$0xff] %v333
        %v335 = vld [vmem:[#allocation2] sm:$0xff]
        %v336 = vld [vmem:[#allocation2 + $0x8] sm:$0xf]
        %v339 = vcombine.low %v325, %v326
        %340 = vrot.lane.b32.xlu0 %v339, 111
        %v341 = vpop.permute.xlu0 %340
        %v342 = vrot.slane %v341, 4
        %vm343 = vcmask 908288
        %v344 = vsel %vm343, %v342, %v341
        %v347 = vmul.f32 %v335, %v344
        %v348 = vmul.f32 %v336, %v342
        %v351 = vcombine.high %v347, %v347
        %352 = vrot.lane.b32.xlu0 %v347, 17
        %v353 = vpop.permute.xlu0 %352
        %354 = vrot.lane.b32.xlu0 %v351, 17
        %v355 = vpop.permute.xlu0 %354
        %356 = vrot.lane.b32.xlu0 %v348, 17
        %v357 = vpop.permute.xlu0 %356
        %vm358 = vcmask 138240
        %v359 = vsel %vm358, %v353, %v355
        %v360 = vsel %vm358, %v355, %v357
        %363 = vst [vmem:[#allocation3] sm:$0xf] %v359
        %364 = vst [vmem:[#allocation3 + $0x8] sm:$0xf] %v360
        %v365 = vld [vmem:[#allocation2] sm:$0xff]
        %v366 = vld [vmem:[#allocation2 + $0x8] sm:$0xf]
        %v369 = vcombine.low %v365, %v365
        %v370 = vcombine.low %v366, %v366
        %371 = vrot.lane.b32.xlu0 %v369, 16
        %v372 = vpop.permute.xlu0 %371
        %373 = vrot.lane.b32.xlu0 %v365, 16
        %v374 = vpop.permute.xlu0 %373
        %375 = vrot.lane.b32.xlu0 %v370, 16
        %v376 = vpop.permute.xlu0 %375
        %vm377 = vcmask 130048
        %v378 = vsel %vm377, %v372, %v374
        %v379 = vsel %vm377, %v374, %v376
        %382 = vst [vmem:[#allocation3] sm:$0xf0] %v378
        %383 = vst [vmem:[#allocation3 + $0x8] sm:$0xf0] %v379
        %v384 = vld [vmem:[#allocation2] sm:$0xff]
        %v385 = vld [vmem:[#allocation2 + $0x8] sm:$0xf]
        %v388 = vcombine.low %v331, %v332
        %389 = vrot.lane.b32.xlu0 %v388, 113
        %v390 = vpop.permute.xlu0 %389
        %v391 = vrot.slane %v390, 4
        %vm392 = vcmask 924672
        %v393 = vsel %vm392, %v391, %v390
        %v396 = vmul.f32 %v384, %v393
        %v397 = vmul.f32 %v385, %v391
        %v400 = vcombine.high %v396, %v396
        %401 = vrot.lane.b32.xlu0 %v396, 15
        %v402 = vpop.permute.xlu0 %401
        %403 = vrot.lane.b32.xlu0 %v400, 15
        %v404 = vpop.permute.xlu0 %403
        %405 = vrot.lane.b32.xlu0 %v397, 15
        %v406 = vpop.permute.xlu0 %405
        %vm407 = vcmask 121856
        %v408 = vsel %vm407, %v402, %v404
        %v409 = vsel %vm407, %v404, %v406
        %412 = vst [vmem:[#allocation3 + $0x10] sm:$0xf] %v408
        %413 = vst [vmem:[#allocation3 + $0x18] sm:$0xf] %v409
        %v414 = vld [vmem:[#allocation2] sm:$0xff]
        %v415 = vld [vmem:[#allocation2 + $0x8] sm:$0xf]
        %416 = vrot.lane.b32.xlu0 %v339, 127
        %v417 = vpop.permute.xlu0 %416
        %v418 = vrot.slane %v417, 4
        %vm419 = vcmask 1039360
        %v420 = vsel %vm419, %v418, %v417
        %v423 = vmul.f32 %v414, %v420
        %v424 = vmul.f32 %v415, %v418
        %v427 = vcombine.low %v423, %v423
        %v428 = vcombine.low %v424, %v424
        %429 = vrot.lane.b32.xlu0 %v427, 1
        %v430 = vpop.permute.xlu0 %429
        %431 = vrot.lane.b32.xlu0 %v423, 1
        %v432 = vpop.permute.xlu0 %431
        %433 = vrot.lane.b32.xlu0 %v428, 1
        %v434 = vpop.permute.xlu0 %433
        %vm435 = vcmask 7168
        %v436 = vsel %vm435, %v430, %v432
        %v437 = vsel %vm435, %v432, %v434
        %440 = vst [vmem:[#allocation3 + $0x10] sm:$0xf0] %v436
        %441 = vst [vmem:[#allocation3 + $0x18] sm:$0xf0] %v437
        %v442 = vld [vmem:[#allocation2 + $0x4] sm:$0xff]
        %v444 = vcombine.high %v442, %v442
        %446 = vst [vmem:[#allocation3 + $0x20] sm:$0xf] %v442
        %447 = vst [vmem:[#allocation3 + $0x28] sm:$0xf] %v444
        %v448 = vld [vmem:[#allocation2 + $0x4] sm:$0xff]
        %v449 = vld [vmem:[#allocation2 + $0xc] sm:$0xf]
        %450 = vrot.lane.b32.xlu0 %v388, 1
        %v451 = vpop.permute.xlu0 %450
        %v452 = vrot.slane %v451, 4
        %v453 = vsel %vm435, %v452, %v451
        %v456 = vmul.f32 %v448, %v453
        %v457 = vmul.f32 %v449, %v452
        %v460 = vcombine.low %v456, %v456
        %v461 = vcombine.low %v457, %v457
        %462 = vrot.lane.b32.xlu0 %v460, 127
        %v463 = vpop.permute.xlu0 %462
        %464 = vrot.lane.b32.xlu0 %v456, 127
        %v465 = vpop.permute.xlu0 %464
        %466 = vrot.lane.b32.xlu0 %v461, 127
        %v467 = vpop.permute.xlu0 %466
        %v468 = vsel %vm419, %v463, %v465
        %v469 = vsel %vm419, %v465, %v467
        %472 = vst [vmem:[#allocation3 + $0x20] sm:$0xf0] %v468
        %473 = vst [vmem:[#allocation3 + $0x28] sm:$0xf0] %v469
        %v474 = vld [vmem:[#allocation2 + $0x4] sm:$0xff]
        %v475 = vld [vmem:[#allocation2 + $0xc] sm:$0xf]
        %476 = vrot.lane.b32.xlu0 %v339, 15
        %v477 = vpop.permute.xlu0 %476
        %v478 = vrot.slane %v477, 4
        %v479 = vsel %vm407, %v478, %v477
        %v482 = vmul.f32 %v474, %v479
        %v483 = vmul.f32 %v475, %v478
        %v486 = vcombine.high %v482, %v482
        %487 = vrot.lane.b32.xlu0 %v482, 113
        %v488 = vpop.permute.xlu0 %487
        %489 = vrot.lane.b32.xlu0 %v486, 113
        %v490 = vpop.permute.xlu0 %489
        %491 = vrot.lane.b32.xlu0 %v483, 113
        %v492 = vpop.permute.xlu0 %491
        %v493 = vsel %vm392, %v488, %v490
        %v494 = vsel %vm392, %v490, %v492
        %497 = vst [vmem:[#allocation3 + $0x30] sm:$0xf] %v493
        %498 = vst [vmem:[#allocation3 + $0x38] sm:$0xf] %v494
        %v499 = vld [vmem:[#allocation2 + $0x4] sm:$0xff]
        %v500 = vld [vmem:[#allocation2 + $0xc] sm:$0xf]
        %v503 = vcombine.low %v499, %v499
        %v504 = vcombine.low %v500, %v500
        %505 = vrot.lane.b32.xlu0 %v503, 112
        %v506 = vpop.permute.xlu0 %505
        %507 = vrot.lane.b32.xlu0 %v499, 112
        %v508 = vpop.permute.xlu0 %507
        %509 = vrot.lane.b32.xlu0 %v504, 112
        %v510 = vpop.permute.xlu0 %509
        %vm511 = vcmask 916480
        %v512 = vsel %vm511, %v506, %v508
        %v513 = vsel %vm511, %v508, %v510
        %516 = vst [vmem:[#allocation3 + $0x30] sm:$0xf0] %v512
        %517 = vst [vmem:[#allocation3 + $0x38] sm:$0xf0] %v513
        %v518 = vld [vmem:[#allocation2 + $0x4] sm:$0xff]
        %v519 = vld [vmem:[#allocation2 + $0xc] sm:$0xf]
        %520 = vrot.lane.b32.xlu0 %v388, 17
        %v521 = vpop.permute.xlu0 %520
        %v522 = vrot.slane %v521, 4
        %v523 = vsel %vm358, %v522, %v521
        %v526 = vmul.f32 %v518, %v523
        %v527 = vmul.f32 %v519, %v522
        %v530 = vcombine.high %v526, %v526
        %531 = vrot.lane.b32.xlu0 %v526, 111
        %v532 = vpop.permute.xlu0 %531
        %533 = vrot.lane.b32.xlu0 %v530, 111
        %v534 = vpop.permute.xlu0 %533
        %535 = vrot.lane.b32.xlu0 %v527, 111
        %v536 = vpop.permute.xlu0 %535
        %v537 = vsel %vm343, %v532, %v534
        %v538 = vsel %vm343, %v534, %v536
        %541 = vst [vmem:[#allocation3 + $0x40] sm:$0xf] %v537
        %542 = vst [vmem:[#allocation3 + $0x48] sm:$0xf] %v538
        %v543 = vld [vmem:[#allocation4] sm:$0xf]
        %v544 = vld [vmem:[#allocation3] sm:$0xff]
        %v545 = vld [vmem:[#allocation3 + $0x8] sm:$0xff]
        %v546 = vld [vmem:[#allocation3 + $0x10] sm:$0xff]
        %v547 = vld [vmem:[#allocation3 + $0x18] sm:$0xff]
        %v548 = vld [vmem:[#allocation3 + $0x20] sm:$0xff]
        %v549 = vld [vmem:[#allocation3 + $0x28] sm:$0xff]
        %v550 = vld [vmem:[#allocation3 + $0x30] sm:$0xff]
        %v551 = vld [vmem:[#allocation3 + $0x38] sm:$0xff]
        %v552 = vld [vmem:[#allocation3 + $0x40] sm:$0xf]
        %v553 = vld [vmem:[#allocation3 + $0x48] sm:$0xf]
        %v554 = vld [vmem:[%s2] sm:$0xf]
        %556 = vset.pattern.permute.xlu0 0
        %557 = vperm.xlu0 %556, %v554
        %v558 = vpop.permute.xlu0 %557
        %vm560 = vcmask 293888
        %v562 = vsel %vm560, %v543, 0
        %vm564 = vcmask 1043456
        %v566 = vsel %vm564, %v552, 0
        %v569 = vsel %vm564, %v553, 0
        %571 = vmatprep.subr.mxu0 0.0
        %572 = vmatpush1.msra.mxu0 0.0
        %573 = vmatprep.subr.mxu0 0.0
        %574 = vmatpush1.msra.mxu0 0.0
        %575 = vmatprep.subr.mxu0 0.0
        %576 = vmatpush1.msra.mxu0 0.0
        %577 = vmatprep.subr.mxu0 0.0
        %578 = vmatpush1.msra.mxu0 0.0
        %579 = vmatprep.subr.mxu0 0.0
        %580 = vmatpush1.msra.mxu0 0.0
        %581 = vmatprep.subr.mxu0 0.0
        %582 = vmatpush1.msra.mxu0 0.0
        %583 = vmatprep.subr.mxu0 0.0
        %584 = vmatpush1.msra.mxu0 0.0
        %585 = vmatprep.subr.mxu0 0.0
        %586 = vmatpush1.msra.mxu0 0.0
        %587 = vmatprep.subr.mxu0 0.0
        %588 = vmatpush1.msra.mxu0 0.0
        %589 = vmatprep.subr.mxu0 0.0
        %590 = vmatpush1.msra.mxu0 0.0
        %591 = vmatprep.subr.mxu0 0.0
        %592 = vmatpush1.msra.mxu0 0.0
        %593 = vmatprep.subr.mxu0 %v569
        %594 = vmatpush1.msra.mxu0 %v566
        %595 = vmatprep.subr.mxu0 %v551
        %596 = vmatpush1.msra.mxu0 %v550
        %597 = vmatprep.subr.mxu0 %v549
        %598 = vmatpush1.msra.mxu0 %v548
        %599 = vmatprep.subr.mxu0 %v547
        %600 = vmatpush1.msra.mxu0 %v546
        %601 = vmatprep.subr.mxu0 %v545
        %602 = vmatpush1.msra.mxu0 %v544
        %603 = vmatprep.subr.mxu0 0.0
        %604 = vmatpush2.msra.mxu0 0.0
        %605 = vmatprep.subr.mxu0 0.0
        %606 = vmatpush2.msra.mxu0 0.0
        %607 = vmatprep.subr.mxu0 0.0
        %608 = vmatpush2.msra.mxu0 0.0
        %609 = vmatprep.subr.mxu0 0.0
        %610 = vmatpush2.msra.mxu0 0.0
        %611 = vmatprep.subr.mxu0 0.0
        %612 = vmatpush2.msra.mxu0 0.0
        %613 = vmatprep.subr.mxu0 0.0
        %614 = vmatpush2.msra.mxu0 0.0
        %615 = vmatprep.subr.mxu0 0.0
        %616 = vmatpush2.msra.mxu0 0.0
        %617 = vmatprep.subr.mxu0 0.0
        %618 = vmatpush2.msra.mxu0 0.0
        %619 = vmatprep.subr.mxu0 0.0
        %620 = vmatpush2.msra.mxu0 0.0
        %621 = vmatprep.subr.mxu0 0.0
        %622 = vmatpush2.msra.mxu0 0.0
        %623 = vmatprep.subr.mxu0 0.0
        %624 = vmatpush2.msra.mxu0 0.0
        %625 = vmatprep.subr.mxu0 0.0
        %626 = vmatpush2.msra.mxu0 0.0
        %627 = vmatprep.subr.mxu0 0.0
        %628 = vmatpush2.msra.mxu0 0.0
        %629 = vmatprep.subr.mxu0 0.0
        %630 = vmatpush2.msra.mxu0 0.0
        %631 = vmatprep.subr.mxu0 0.0
        %632 = vmatpush2.msra.mxu0 0.0
        %633 = vmatprep.subr.mxu0 0.0
        %634 = vmatpush2.msra.mxu0 0.0
        %635 = vmatprep.mubr.f32.mxu0 0.0
        %636 = vmatmul.mubr.f32.gmra.mxu0 %v562
        %v637 = vpop.f32.mrf.mxu0
        %v638 = vadd.f32 %v558, %v637
        %v639 = vpop.f32.mrf.mxu0
        %v640 = vadd.f32 %v558, %v639
        %641 = vdwg.mxu0
        %v642 = vmax.f32 %v638, 0.0
        %v643 = vmax.f32 %v640, 0.0
        %v646 = vcombine.low %v642, %v643
        %648 = vst [vmem:[#allocation2 + $0x4] sm:$0xff] %v646
        %v649 = vld [vmem:[#allocation2] sm:$0xff]
        %v650 = vld [vmem:[#allocation2 + $0x8] sm:$0xf]
        %v651 = vmul.f32 %v649, %v344
        %v652 = vmul.f32 %v650, %v342
        %v655 = vcombine.high %v651, %v651
        %656 = vrot.lane.b32.xlu0 %v651, 17
        %v657 = vpop.permute.xlu0 %656
        %658 = vrot.lane.b32.xlu0 %v655, 17
        %v659 = vpop.permute.xlu0 %658
        %660 = vrot.lane.b32.xlu0 %v652, 17
        %v661 = vpop.permute.xlu0 %660
        %v662 = vsel %vm358, %v657, %v659
        %v663 = vsel %vm358, %v659, %v661
        %666 = vst [vmem:[#allocation3] sm:$0xf] %v662
        %667 = vst [vmem:[#allocation3 + $0x8] sm:$0xf] %v663
        %v668 = vld [vmem:[#allocation2] sm:$0xff]
        %v669 = vld [vmem:[#allocation2 + $0x8] sm:$0xf]
        %v672 = vcombine.low %v668, %v668
        %v673 = vcombine.low %v669, %v669
        %674 = vrot.lane.b32.xlu0 %v672, 16
        %v675 = vpop.permute.xlu0 %674
        %676 = vrot.lane.b32.xlu0 %v668, 16
        %v677 = vpop.permute.xlu0 %676
        %678 = vrot.lane.b32.xlu0 %v673, 16
        %v679 = vpop.permute.xlu0 %678
        %v680 = vsel %vm377, %v675, %v677
        %v681 = vsel %vm377, %v677, %v679
        %684 = vst [vmem:[#allocation3] sm:$0xf0] %v680
        %685 = vst [vmem:[#allocation3 + $0x8] sm:$0xf0] %v681
        %v686 = vld [vmem:[#allocation2] sm:$0xff]
        %v687 = vld [vmem:[#allocation2 + $0x8] sm:$0xf]
        %v688 = vmul.f32 %v686, %v393
        %v689 = vmul.f32 %v687, %v391
        %v692 = vcombine.high %v688, %v688
        %693 = vrot.lane.b32.xlu0 %v688, 15
        %v694 = vpop.permute.xlu0 %693
        %695 = vrot.lane.b32.xlu0 %v692, 15
        %v696 = vpop.permute.xlu0 %695
        %697 = vrot.lane.b32.xlu0 %v689, 15
        %v698 = vpop.permute.xlu0 %697
        %v699 = vsel %vm407, %v694, %v696
        %v700 = vsel %vm407, %v696, %v698
        %703 = vst [vmem:[#allocation3 + $0x10] sm:$0xf] %v699
        %704 = vst [vmem:[#allocation3 + $0x18] sm:$0xf] %v700
        %v705 = vld [vmem:[#allocation2] sm:$0xff]
        %v706 = vld [vmem:[#allocation2 + $0x8] sm:$0xf]
        %v707 = vmul.f32 %v705, %v420
        %v708 = vmul.f32 %v706, %v418
        %v711 = vcombine.low %v707, %v707
        %v712 = vcombine.low %v708, %v708
        %713 = vrot.lane.b32.xlu0 %v711, 1
        %v714 = vpop.permute.xlu0 %713
        %715 = vrot.lane.b32.xlu0 %v707, 1
        %v716 = vpop.permute.xlu0 %715
        %717 = vrot.lane.b32.xlu0 %v712, 1
        %v718 = vpop.permute.xlu0 %717
        %v719 = vsel %vm435, %v714, %v716
        %v720 = vsel %vm435, %v716, %v718
        %723 = vst [vmem:[#allocation3 + $0x10] sm:$0xf0] %v719
        %724 = vst [vmem:[#allocation3 + $0x18] sm:$0xf0] %v720
        %v725 = vld [vmem:[#allocation2 + $0x4] sm:$0xff]
        %v727 = vcombine.high %v725, %v725
        %729 = vst [vmem:[#allocation3 + $0x20] sm:$0xf] %v725
        %730 = vst [vmem:[#allocation3 + $0x28] sm:$0xf] %v727
        %v731 = vld [vmem:[#allocation2 + $0x4] sm:$0xff]
        %v732 = vld [vmem:[#allocation2 + $0xc] sm:$0xf]
        %v733 = vmul.f32 %v731, %v453
        %v734 = vmul.f32 %v732, %v452
        %v737 = vcombine.low %v733, %v733
        %v738 = vcombine.low %v734, %v734
        %739 = vrot.lane.b32.xlu0 %v737, 127
        %v740 = vpop.permute.xlu0 %739
        %741 = vrot.lane.b32.xlu0 %v733, 127
        %v742 = vpop.permute.xlu0 %741
        %743 = vrot.lane.b32.xlu0 %v738, 127
        %v744 = vpop.permute.xlu0 %743
        %v745 = vsel %vm419, %v740, %v742
        %v746 = vsel %vm419, %v742, %v744
        %749 = vst [vmem:[#allocation3 + $0x20] sm:$0xf0] %v745
        %750 = vst [vmem:[#allocation3 + $0x28] sm:$0xf0] %v746
        %v751 = vld [vmem:[#allocation2 + $0x4] sm:$0xff]
        %v752 = vld [vmem:[#allocation2 + $0xc] sm:$0xf]
        %v753 = vmul.f32 %v751, %v479
        %v754 = vmul.f32 %v752, %v478
        %v757 = vcombine.high %v753, %v753
        %758 = vrot.lane.b32.xlu0 %v753, 113
        %v759 = vpop.permute.xlu0 %758
        %760 = vrot.lane.b32.xlu0 %v757, 113
        %v761 = vpop.permute.xlu0 %760
        %762 = vrot.lane.b32.xlu0 %v754, 113
        %v763 = vpop.permute.xlu0 %762
        %v764 = vsel %vm392, %v759, %v761
        %v765 = vsel %vm392, %v761, %v763
        %768 = vst [vmem:[#allocation3 + $0x30] sm:$0xf] %v764
        %769 = vst [vmem:[#allocation3 + $0x38] sm:$0xf] %v765
        %v770 = vld [vmem:[#allocation2 + $0x4] sm:$0xff]
        %v771 = vld [vmem:[#allocation2 + $0xc] sm:$0xf]
        %v774 = vcombine.low %v770, %v770
        %v775 = vcombine.low %v771, %v771
        %776 = vrot.lane.b32.xlu0 %v774, 112
        %v777 = vpop.permute.xlu0 %776
        %778 = vrot.lane.b32.xlu0 %v770, 112
        %v779 = vpop.permute.xlu0 %778
        %780 = vrot.lane.b32.xlu0 %v775, 112
        %v781 = vpop.permute.xlu0 %780
        %v782 = vsel %vm511, %v777, %v779
        %v783 = vsel %vm511, %v779, %v781
        %786 = vst [vmem:[#allocation3 + $0x30] sm:$0xf0] %v782
        %787 = vst [vmem:[#allocation3 + $0x38] sm:$0xf0] %v783
        %v788 = vld [vmem:[#allocation2 + $0x4] sm:$0xff]
        %v789 = vld [vmem:[#allocation2 + $0xc] sm:$0xf]
        %v790 = vmul.f32 %v788, %v523
        %v791 = vmul.f32 %v789, %v522
        %v794 = vcombine.high %v790, %v790
        %795 = vrot.lane.b32.xlu0 %v790, 111
        %v796 = vpop.permute.xlu0 %795
        %797 = vrot.lane.b32.xlu0 %v794, 111
        %v798 = vpop.permute.xlu0 %797
        %799 = vrot.lane.b32.xlu0 %v791, 111
        %v800 = vpop.permute.xlu0 %799
        %v801 = vsel %vm343, %v796, %v798
        %v802 = vsel %vm343, %v798, %v800
        %805 = vst [vmem:[#allocation3 + $0x40] sm:$0xf] %v801
        %806 = vst [vmem:[#allocation3 + $0x48] sm:$0xf] %v802
        %s807 = scalar_lea.vmem [#allocation4], 4
        %v808 = vld [vmem:[%s807] sm:$0xf]
        %v809 = vld [vmem:[#allocation3] sm:$0xff]
        %v810 = vld [vmem:[#allocation3 + $0x8] sm:$0xff]
        %v811 = vld [vmem:[#allocation3 + $0x10] sm:$0xff]
        %v812 = vld [vmem:[#allocation3 + $0x18] sm:$0xff]
        %v813 = vld [vmem:[#allocation3 + $0x20] sm:$0xff]
        %v814 = vld [vmem:[#allocation3 + $0x28] sm:$0xff]
        %v815 = vld [vmem:[#allocation3 + $0x30] sm:$0xff]
        %v816 = vld [vmem:[#allocation3 + $0x38] sm:$0xff]
        %v817 = vld [vmem:[#allocation3 + $0x40] sm:$0xf]
        %v818 = vld [vmem:[#allocation3 + $0x48] sm:$0xf]
        %s819 = scalar_lea.vmem %s2, 4
        %v820 = vld [vmem:[%s819] sm:$0xf]
        %822 = vset.pattern.permute.xlu0 0
        %823 = vperm.xlu0 %822, %v820
        %v824 = vpop.permute.xlu0 %823
        %v827 = vsel %vm560, %v808, 0
        %v830 = vsel %vm564, %v817, 0
        %v833 = vsel %vm564, %v818, 0
        %835 = vmatprep.subr.mxu0 0.0
        %836 = vmatpush1.msra.mxu0 0.0
        %837 = vmatprep.subr.mxu0 0.0
        %838 = vmatpush1.msra.mxu0 0.0
        %839 = vmatprep.subr.mxu0 0.0
        %840 = vmatpush1.msra.mxu0 0.0
        %841 = vmatprep.subr.mxu0 0.0
        %842 = vmatpush1.msra.mxu0 0.0
        %843 = vmatprep.subr.mxu0 0.0
        %844 = vmatpush1.msra.mxu0 0.0
        %845 = vmatprep.subr.mxu0 0.0
        %846 = vmatpush1.msra.mxu0 0.0
        %847 = vmatprep.subr.mxu0 0.0
        %848 = vmatpush1.msra.mxu0 0.0
        %849 = vmatprep.subr.mxu0 0.0
        %850 = vmatpush1.msra.mxu0 0.0
        %851 = vmatprep.subr.mxu0 0.0
        %852 = vmatpush1.msra.mxu0 0.0
        %853 = vmatprep.subr.mxu0 0.0
        %854 = vmatpush1.msra.mxu0 0.0
        %855 = vmatprep.subr.mxu0 0.0
        %856 = vmatpush1.msra.mxu0 0.0
        %857 = vmatprep.subr.mxu0 %v833
        %858 = vmatpush1.msra.mxu0 %v830
        %859 = vmatprep.subr.mxu0 %v816
        %860 = vmatpush1.msra.mxu0 %v815
        %861 = vmatprep.subr.mxu0 %v814
        %862 = vmatpush1.msra.mxu0 %v813
        %863 = vmatprep.subr.mxu0 %v812
        %864 = vmatpush1.msra.mxu0 %v811
        %865 = vmatprep.subr.mxu0 %v810
        %866 = vmatpush1.msra.mxu0 %v809
        %867 = vmatprep.subr.mxu0 0.0
        %868 = vmatpush2.msra.mxu0 0.0
        %869 = vmatprep.subr.mxu0 0.0
        %870 = vmatpush2.msra.mxu0 0.0
        %871 = vmatprep.subr.mxu0 0.0
        %872 = vmatpush2.msra.mxu0 0.0
        %873 = vmatprep.subr.mxu0 0.0
        %874 = vmatpush2.msra.mxu0 0.0
        %875 = vmatprep.subr.mxu0 0.0
        %876 = vmatpush2.msra.mxu0 0.0
        %877 = vmatprep.subr.mxu0 0.0
        %878 = vmatpush2.msra.mxu0 0.0
        %879 = vmatprep.subr.mxu0 0.0
        %880 = vmatpush2.msra.mxu0 0.0
        %881 = vmatprep.subr.mxu0 0.0
        %882 = vmatpush2.msra.mxu0 0.0
        %883 = vmatprep.subr.mxu0 0.0
        %884 = vmatpush2.msra.mxu0 0.0
        %885 = vmatprep.subr.mxu0 0.0
        %886 = vmatpush2.msra.mxu0 0.0
        %887 = vmatprep.subr.mxu0 0.0
        %888 = vmatpush2.msra.mxu0 0.0
        %889 = vmatprep.subr.mxu0 0.0
        %890 = vmatpush2.msra.mxu0 0.0
        %891 = vmatprep.subr.mxu0 0.0
        %892 = vmatpush2.msra.mxu0 0.0
        %893 = vmatprep.subr.mxu0 0.0
        %894 = vmatpush2.msra.mxu0 0.0
        %895 = vmatprep.subr.mxu0 0.0
        %896 = vmatpush2.msra.mxu0 0.0
        %897 = vmatprep.subr.mxu0 0.0
        %898 = vmatpush2.msra.mxu0 0.0
        %899 = vmatprep.mubr.f32.mxu0 0.0
        %900 = vmatmul.mubr.f32.gmra.mxu0 %v827
        %v901 = vpop.f32.mrf.mxu0
        %v902 = vadd.f32 %v824, %v901
        %v903 = vpop.f32.mrf.mxu0
        %v904 = vadd.f32 %v824, %v903
        %905 = vdwg.mxu0
        %v906 = vmax.f32 %v902, 0.0
        %v907 = vmax.f32 %v904, 0.0
        %908 = vst [vmem:[#allocation2 + $0x4] sm:$0xff] %v333
        %v909 = vld [vmem:[#allocation2] sm:$0xff]
        %v910 = vld [vmem:[#allocation2 + $0x8] sm:$0xf]
        %v911 = vmul.f32 %v909, %v344
        %v912 = vmul.f32 %v910, %v342
        %v915 = vcombine.high %v911, %v911
        %916 = vrot.lane.b32.xlu0 %v911, 17
        %v917 = vpop.permute.xlu0 %916
        %918 = vrot.lane.b32.xlu0 %v915, 17
        %v919 = vpop.permute.xlu0 %918
        %920 = vrot.lane.b32.xlu0 %v912, 17
        %v921 = vpop.permute.xlu0 %920
        %v922 = vsel %vm358, %v917, %v919
        %v923 = vsel %vm358, %v919, %v921
        %926 = vst [vmem:[#allocation3] sm:$0xf] %v922
        %927 = vst [vmem:[#allocation3 + $0x8] sm:$0xf] %v923
        %v928 = vld [vmem:[#allocation2] sm:$0xff]
        %v929 = vld [vmem:[#allocation2 + $0x8] sm:$0xf]
        %v932 = vcombine.low %v928, %v928
        %v933 = vcombine.low %v929, %v929
        %934 = vrot.lane.b32.xlu0 %v932, 16
        %v935 = vpop.permute.xlu0 %934
        %936 = vrot.lane.b32.xlu0 %v928, 16
        %v937 = vpop.permute.xlu0 %936
        %938 = vrot.lane.b32.xlu0 %v933, 16
        %v939 = vpop.permute.xlu0 %938
        %v940 = vsel %vm377, %v935, %v937
        %v941 = vsel %vm377, %v937, %v939
        %944 = vst [vmem:[#allocation3] sm:$0xf0] %v940
        %945 = vst [vmem:[#allocation3 + $0x8] sm:$0xf0] %v941
        %v946 = vld [vmem:[#allocation2] sm:$0xff]
        %v947 = vld [vmem:[#allocation2 + $0x8] sm:$0xf]
        %v948 = vmul.f32 %v946, %v393
        %v949 = vmul.f32 %v947, %v391
        %v952 = vcombine.high %v948, %v948
        %953 = vrot.lane.b32.xlu0 %v948, 15
        %v954 = vpop.permute.xlu0 %953
        %955 = vrot.lane.b32.xlu0 %v952, 15
        %v956 = vpop.permute.xlu0 %955
        %957 = vrot.lane.b32.xlu0 %v949, 15
        %v958 = vpop.permute.xlu0 %957
        %v959 = vsel %vm407, %v954, %v956
        %v960 = vsel %vm407, %v956, %v958
        %963 = vst [vmem:[#allocation3 + $0x10] sm:$0xf] %v959
        %964 = vst [vmem:[#allocation3 + $0x18] sm:$0xf] %v960
        %v965 = vld [vmem:[#allocation2] sm:$0xff]
        %v966 = vld [vmem:[#allocation2 + $0x8] sm:$0xf]
        %v967 = vmul.f32 %v965, %v420
        %v968 = vmul.f32 %v966, %v418
        %v971 = vcombine.low %v967, %v967
        %v972 = vcombine.low %v968, %v968
        %973 = vrot.lane.b32.xlu0 %v971, 1
        %v974 = vpop.permute.xlu0 %973
        %975 = vrot.lane.b32.xlu0 %v967, 1
        %v976 = vpop.permute.xlu0 %975
        %977 = vrot.lane.b32.xlu0 %v972, 1
        %v978 = vpop.permute.xlu0 %977
        %v979 = vsel %vm435, %v974, %v976
        %v980 = vsel %vm435, %v976, %v978
        %983 = vst [vmem:[#allocation3 + $0x10] sm:$0xf0] %v979
        %984 = vst [vmem:[#allocation3 + $0x18] sm:$0xf0] %v980
        %v985 = vld [vmem:[#allocation2 + $0x4] sm:$0xff]
        %v987 = vcombine.high %v985, %v985
        %989 = vst [vmem:[#allocation3 + $0x20] sm:$0xf] %v985
        %990 = vst [vmem:[#allocation3 + $0x28] sm:$0xf] %v987
        %v991 = vld [vmem:[#allocation2 + $0x4] sm:$0xff]
        %v992 = vld [vmem:[#allocation2 + $0xc] sm:$0xf]
        %v993 = vmul.f32 %v991, %v453
        %v994 = vmul.f32 %v992, %v452
        %v997 = vcombine.low %v993, %v993
        %v998 = vcombine.low %v994, %v994
        %999 = vrot.lane.b32.xlu0 %v997, 127
        %v1000 = vpop.permute.xlu0 %999
        %1001 = vrot.lane.b32.xlu0 %v993, 127
        %v1002 = vpop.permute.xlu0 %1001
        %1003 = vrot.lane.b32.xlu0 %v998, 127
        %v1004 = vpop.permute.xlu0 %1003
        %v1005 = vsel %vm419, %v1000, %v1002
        %v1006 = vsel %vm419, %v1002, %v1004
        %1009 = vst [vmem:[#allocation3 + $0x20] sm:$0xf0] %v1005
        %1010 = vst [vmem:[#allocation3 + $0x28] sm:$0xf0] %v1006
        %v1011 = vld [vmem:[#allocation2 + $0x4] sm:$0xff]
        %v1012 = vld [vmem:[#allocation2 + $0xc] sm:$0xf]
        %v1013 = vmul.f32 %v1011, %v479
        %v1014 = vmul.f32 %v1012, %v478
        %v1017 = vcombine.high %v1013, %v1013
        %1018 = vrot.lane.b32.xlu0 %v1013, 113
        %v1019 = vpop.permute.xlu0 %1018
        %1020 = vrot.lane.b32.xlu0 %v1017, 113
        %v1021 = vpop.permute.xlu0 %1020
        %1022 = vrot.lane.b32.xlu0 %v1014, 113
        %v1023 = vpop.permute.xlu0 %1022
        %v1024 = vsel %vm392, %v1019, %v1021
        %v1025 = vsel %vm392, %v1021, %v1023
        %1028 = vst [vmem:[#allocation3 + $0x30] sm:$0xf] %v1024
        %1029 = vst [vmem:[#allocation3 + $0x38] sm:$0xf] %v1025
        %v1030 = vld [vmem:[#allocation2 + $0x4] sm:$0xff]
        %v1031 = vld [vmem:[#allocation2 + $0xc] sm:$0xf]
        %v1034 = vcombine.low %v1030, %v1030
        %v1035 = vcombine.low %v1031, %v1031
        %1036 = vrot.lane.b32.xlu0 %v1034, 112
        %v1037 = vpop.permute.xlu0 %1036
        %1038 = vrot.lane.b32.xlu0 %v1030, 112
        %v1039 = vpop.permute.xlu0 %1038
        %1040 = vrot.lane.b32.xlu0 %v1035, 112
        %v1041 = vpop.permute.xlu0 %1040
        %v1042 = vsel %vm511, %v1037, %v1039
        %v1043 = vsel %vm511, %v1039, %v1041
        %1046 = vst [vmem:[#allocation3 + $0x30] sm:$0xf0] %v1042
        %1047 = vst [vmem:[#allocation3 + $0x38] sm:$0xf0] %v1043
        %v1048 = vld [vmem:[#allocation2 + $0x4] sm:$0xff]
        %v1049 = vld [vmem:[#allocation2 + $0xc] sm:$0xf]
        %v1050 = vmul.f32 %v1048, %v523
        %v1051 = vmul.f32 %v1049, %v522
        %v1054 = vcombine.high %v1050, %v1050
        %1055 = vrot.lane.b32.xlu0 %v1050, 111
        %v1056 = vpop.permute.xlu0 %1055
        %1057 = vrot.lane.b32.xlu0 %v1054, 111
        %v1058 = vpop.permute.xlu0 %1057
        %1059 = vrot.lane.b32.xlu0 %v1051, 111
        %v1060 = vpop.permute.xlu0 %1059
        %v1061 = vsel %vm343, %v1056, %v1058
        %v1062 = vsel %vm343, %v1058, %v1060
        %1065 = vst [vmem:[#allocation3 + $0x40] sm:$0xf] %v1061
        %1066 = vst [vmem:[#allocation3 + $0x48] sm:$0xf] %v1062
        %s1067 = scalar_lea.vmem [#allocation4], 8
        %v1068 = vld [vmem:[%s1067] sm:$0xf]
        %v1069 = vld [vmem:[#allocation3] sm:$0xff]
        %v1070 = vld [vmem:[#allocation3 + $0x8] sm:$0xff]
        %v1071 = vld [vmem:[#allocation3 + $0x10] sm:$0xff]
        %v1072 = vld [vmem:[#allocation3 + $0x18] sm:$0xff]
        %v1073 = vld [vmem:[#allocation3 + $0x20] sm:$0xff]
        %v1074 = vld [vmem:[#allocation3 + $0x28] sm:$0xff]
        %v1075 = vld [vmem:[#allocation3 + $0x30] sm:$0xff]
        %v1076 = vld [vmem:[#allocation3 + $0x38] sm:$0xff]
        %v1077 = vld [vmem:[#allocation3 + $0x40] sm:$0xf]
        %v1078 = vld [vmem:[#allocation3 + $0x48] sm:$0xf]
        %s1079 = scalar_lea.vmem %s2, 8
        %v1080 = vld [vmem:[%s1079] sm:$0xf]
        %1082 = vset.pattern.permute.xlu0 0
        %1083 = vperm.xlu0 %1082, %v1080
        %v1084 = vpop.permute.xlu0 %1083
        %v1087 = vsel %vm560, %v1068, 0
        %v1090 = vsel %vm564, %v1077, 0
        %v1093 = vsel %vm564, %v1078, 0
        %1095 = vmatprep.subr.mxu0 0.0
        %1096 = vmatpush1.msra.mxu0 0.0
        %1097 = vmatprep.subr.mxu0 0.0
        %1098 = vmatpush1.msra.mxu0 0.0
        %1099 = vmatprep.subr.mxu0 0.0
        %1100 = vmatpush1.msra.mxu0 0.0
        %1101 = vmatprep.subr.mxu0 0.0
        %1102 = vmatpush1.msra.mxu0 0.0
        %1103 = vmatprep.subr.mxu0 0.0
        %1104 = vmatpush1.msra.mxu0 0.0
        %1105 = vmatprep.subr.mxu0 0.0
        %1106 = vmatpush1.msra.mxu0 0.0
        %1107 = vmatprep.subr.mxu0 0.0
        %1108 = vmatpush1.msra.mxu0 0.0
        %1109 = vmatprep.subr.mxu0 0.0
        %1110 = vmatpush1.msra.mxu0 0.0
        %1111 = vmatprep.subr.mxu0 0.0
        %1112 = vmatpush1.msra.mxu0 0.0
        %1113 = vmatprep.subr.mxu0 0.0
        %1114 = vmatpush1.msra.mxu0 0.0
        %1115 = vmatprep.subr.mxu0 0.0
        %1116 = vmatpush1.msra.mxu0 0.0
        %1117 = vmatprep.subr.mxu0 %v1093
        %1118 = vmatpush1.msra.mxu0 %v1090
        %1119 = vmatprep.subr.mxu0 %v1076
        %1120 = vmatpush1.msra.mxu0 %v1075
        %1121 = vmatprep.subr.mxu0 %v1074
        %1122 = vmatpush1.msra.mxu0 %v1073
        %1123 = vmatprep.subr.mxu0 %v1072
        %1124 = vmatpush1.msra.mxu0 %v1071
        %1125 = vmatprep.subr.mxu0 %v1070
        %1126 = vmatpush1.msra.mxu0 %v1069
        %1127 = vmatprep.subr.mxu0 0.0
        %1128 = vmatpush2.msra.mxu0 0.0
        %1129 = vmatprep.subr.mxu0 0.0
        %1130 = vmatpush2.msra.mxu0 0.0
        %1131 = vmatprep.subr.mxu0 0.0
        %1132 = vmatpush2.msra.mxu0 0.0
        %1133 = vmatprep.subr.mxu0 0.0
        %1134 = vmatpush2.msra.mxu0 0.0
        %1135 = vmatprep.subr.mxu0 0.0
        %1136 = vmatpush2.msra.mxu0 0.0
        %1137 = vmatprep.subr.mxu0 0.0
        %1138 = vmatpush2.msra.mxu0 0.0
        %1139 = vmatprep.subr.mxu0 0.0
        %1140 = vmatpush2.msra.mxu0 0.0
        %1141 = vmatprep.subr.mxu0 0.0
        %1142 = vmatpush2.msra.mxu0 0.0
        %1143 = vmatprep.subr.mxu0 0.0
        %1144 = vmatpush2.msra.mxu0 0.0
        %1145 = vmatprep.subr.mxu0 0.0
        %1146 = vmatpush2.msra.mxu0 0.0
        %1147 = vmatprep.subr.mxu0 0.0
        %1148 = vmatpush2.msra.mxu0 0.0
        %1149 = vmatprep.subr.mxu0 0.0
        %1150 = vmatpush2.msra.mxu0 0.0
        %1151 = vmatprep.subr.mxu0 0.0
        %1152 = vmatpush2.msra.mxu0 0.0
        %1153 = vmatprep.subr.mxu0 0.0
        %1154 = vmatpush2.msra.mxu0 0.0
        %1155 = vmatprep.subr.mxu0 0.0
        %1156 = vmatpush2.msra.mxu0 0.0
        %1157 = vmatprep.subr.mxu0 0.0
        %1158 = vmatpush2.msra.mxu0 0.0
        %1159 = vmatprep.mubr.f32.mxu0 0.0
        %1160 = vmatmul.mubr.f32.gmra.mxu0 %v1087
        %v1161 = vpop.f32.mrf.mxu0
        %v1162 = vadd.f32 %v1084, %v1161
        %v1163 = vpop.f32.mrf.mxu0
        %v1164 = vadd.f32 %v1084, %v1163
        %1165 = vdwg.mxu0
        %v1166 = vmax.f32 %v1162, 0.0
        %v1167 = vmax.f32 %v1164, 0.0
        %v1170 = vcombine.low %v1166, %v1167
        %1172 = vst [vmem:[#allocation2 + $0x4] sm:$0xff] %v1170
        %v1173 = vld [vmem:[#allocation2] sm:$0xff]
        %v1174 = vld [vmem:[#allocation2 + $0x8] sm:$0xf]
        %v1175 = vmul.f32 %v1173, %v344
        %v1176 = vmul.f32 %v1174, %v342
        %v1179 = vcombine.high %v1175, %v1175
        %1180 = vrot.lane.b32.xlu0 %v1175, 17
        %v1181 = vpop.permute.xlu0 %1180
        %1182 = vrot.lane.b32.xlu0 %v1179, 17
        %v1183 = vpop.permute.xlu0 %1182
        %1184 = vrot.lane.b32.xlu0 %v1176, 17
        %v1185 = vpop.permute.xlu0 %1184
        %v1186 = vsel %vm358, %v1181, %v1183
        %v1187 = vsel %vm358, %v1183, %v1185
        %1190 = vst [vmem:[#allocation3] sm:$0xf] %v1186
        %1191 = vst [vmem:[#allocation3 + $0x8] sm:$0xf] %v1187
        %v1192 = vld [vmem:[#allocation2] sm:$0xff]
        %v1193 = vld [vmem:[#allocation2 + $0x8] sm:$0xf]
        %v1196 = vcombine.low %v1192, %v1192
        %v1197 = vcombine.low %v1193, %v1193
        %1198 = vrot.lane.b32.xlu0 %v1196, 16
        %v1199 = vpop.permute.xlu0 %1198
        %1200 = vrot.lane.b32.xlu0 %v1192, 16
        %v1201 = vpop.permute.xlu0 %1200
        %1202 = vrot.lane.b32.xlu0 %v1197, 16
        %v1203 = vpop.permute.xlu0 %1202
        %v1204 = vsel %vm377, %v1199, %v1201
        %v1205 = vsel %vm377, %v1201, %v1203
        %1208 = vst [vmem:[#allocation3] sm:$0xf0] %v1204
        %1209 = vst [vmem:[#allocation3 + $0x8] sm:$0xf0] %v1205
        %v1210 = vld [vmem:[#allocation2] sm:$0xff]
        %v1211 = vld [vmem:[#allocation2 + $0x8] sm:$0xf]
        %v1212 = vmul.f32 %v1210, %v393
        %v1213 = vmul.f32 %v1211, %v391
        %v1216 = vcombine.high %v1212, %v1212
        %1217 = vrot.lane.b32.xlu0 %v1212, 15
        %v1218 = vpop.permute.xlu0 %1217
        %1219 = vrot.lane.b32.xlu0 %v1216, 15
        %v1220 = vpop.permute.xlu0 %1219
        %1221 = vrot.lane.b32.xlu0 %v1213, 15
        %v1222 = vpop.permute.xlu0 %1221
        %v1223 = vsel %vm407, %v1218, %v1220
        %v1224 = vsel %vm407, %v1220, %v1222
        %1227 = vst [vmem:[#allocation3 + $0x10] sm:$0xf] %v1223
        %1228 = vst [vmem:[#allocation3 + $0x18] sm:$0xf] %v1224
        %v1229 = vld [vmem:[#allocation2] sm:$0xff]
        %v1230 = vld [vmem:[#allocation2 + $0x8] sm:$0xf]
        %v1231 = vmul.f32 %v1229, %v420
        %v1232 = vmul.f32 %v1230, %v418
        %v1235 = vcombine.low %v1231, %v1231
        %v1236 = vcombine.low %v1232, %v1232
        %1237 = vrot.lane.b32.xlu0 %v1235, 1
        %v1238 = vpop.permute.xlu0 %1237
        %1239 = vrot.lane.b32.xlu0 %v1231, 1
        %v1240 = vpop.permute.xlu0 %1239
        %1241 = vrot.lane.b32.xlu0 %v1236, 1
        %v1242 = vpop.permute.xlu0 %1241
        %v1243 = vsel %vm435, %v1238, %v1240
        %v1244 = vsel %vm435, %v1240, %v1242
        %1247 = vst [vmem:[#allocation3 + $0x10] sm:$0xf0] %v1243
        %1248 = vst [vmem:[#allocation3 + $0x18] sm:$0xf0] %v1244
        %v1249 = vld [vmem:[#allocation2 + $0x4] sm:$0xff]
        %v1251 = vcombine.high %v1249, %v1249
        %1253 = vst [vmem:[#allocation3 + $0x20] sm:$0xf] %v1249
        %1254 = vst [vmem:[#allocation3 + $0x28] sm:$0xf] %v1251
        %v1255 = vld [vmem:[#allocation2 + $0x4] sm:$0xff]
        %v1256 = vld [vmem:[#allocation2 + $0xc] sm:$0xf]
        %v1257 = vmul.f32 %v1255, %v453
        %v1258 = vmul.f32 %v1256, %v452
        %v1261 = vcombine.low %v1257, %v1257
        %v1262 = vcombine.low %v1258, %v1258
        %1263 = vrot.lane.b32.xlu0 %v1261, 127
        %v1264 = vpop.permute.xlu0 %1263
        %1265 = vrot.lane.b32.xlu0 %v1257, 127
        %v1266 = vpop.permute.xlu0 %1265
        %1267 = vrot.lane.b32.xlu0 %v1262, 127
        %v1268 = vpop.permute.xlu0 %1267
        %v1269 = vsel %vm419, %v1264, %v1266
        %v1270 = vsel %vm419, %v1266, %v1268
        %1273 = vst [vmem:[#allocation3 + $0x20] sm:$0xf0] %v1269
        %1274 = vst [vmem:[#allocation3 + $0x28] sm:$0xf0] %v1270
        %v1275 = vld [vmem:[#allocation2 + $0x4] sm:$0xff]
        %v1276 = vld [vmem:[#allocation2 + $0xc] sm:$0xf]
        %v1277 = vmul.f32 %v1275, %v479
        %v1278 = vmul.f32 %v1276, %v478
        %v1281 = vcombine.high %v1277, %v1277
        %1282 = vrot.lane.b32.xlu0 %v1277, 113
        %v1283 = vpop.permute.xlu0 %1282
        %1284 = vrot.lane.b32.xlu0 %v1281, 113
        %v1285 = vpop.permute.xlu0 %1284
        %1286 = vrot.lane.b32.xlu0 %v1278, 113
        %v1287 = vpop.permute.xlu0 %1286
        %v1288 = vsel %vm392, %v1283, %v1285
        %v1289 = vsel %vm392, %v1285, %v1287
        %1292 = vst [vmem:[#allocation3 + $0x30] sm:$0xf] %v1288
        %1293 = vst [vmem:[#allocation3 + $0x38] sm:$0xf] %v1289
        %v1294 = vld [vmem:[#allocation2 + $0x4] sm:$0xff]
        %v1295 = vld [vmem:[#allocation2 + $0xc] sm:$0xf]
        %v1298 = vcombine.low %v1294, %v1294
        %v1299 = vcombine.low %v1295, %v1295
        %1300 = vrot.lane.b32.xlu0 %v1298, 112
        %v1301 = vpop.permute.xlu0 %1300
        %1302 = vrot.lane.b32.xlu0 %v1294, 112
        %v1303 = vpop.permute.xlu0 %1302
        %1304 = vrot.lane.b32.xlu0 %v1299, 112
        %v1305 = vpop.permute.xlu0 %1304
        %v1306 = vsel %vm511, %v1301, %v1303
        %v1307 = vsel %vm511, %v1303, %v1305
        %1310 = vst [vmem:[#allocation3 + $0x30] sm:$0xf0] %v1306
        %1311 = vst [vmem:[#allocation3 + $0x38] sm:$0xf0] %v1307
        %v1312 = vld [vmem:[#allocation2 + $0x4] sm:$0xff]
        %v1313 = vld [vmem:[#allocation2 + $0xc] sm:$0xf]
        %v1314 = vmul.f32 %v1312, %v523
        %v1315 = vmul.f32 %v1313, %v522
        %v1318 = vcombine.high %v1314, %v1314
        %1319 = vrot.lane.b32.xlu0 %v1314, 111
        %v1320 = vpop.permute.xlu0 %1319
        %1321 = vrot.lane.b32.xlu0 %v1318, 111
        %v1322 = vpop.permute.xlu0 %1321
        %1323 = vrot.lane.b32.xlu0 %v1315, 111
        %v1324 = vpop.permute.xlu0 %1323
        %v1325 = vsel %vm343, %v1320, %v1322
        %v1326 = vsel %vm343, %v1322, %v1324
        %1329 = vst [vmem:[#allocation3 + $0x40] sm:$0xf] %v1325
        %1330 = vst [vmem:[#allocation3 + $0x48] sm:$0xf] %v1326
        %v1331 = vld [vmem:[%s1067] sm:$0xf]
        %v1332 = vld [vmem:[#allocation3] sm:$0xff]
        %v1333 = vld [vmem:[#allocation3 + $0x8] sm:$0xff]
        %v1334 = vld [vmem:[#allocation3 + $0x10] sm:$0xff]
        %v1335 = vld [vmem:[#allocation3 + $0x18] sm:$0xff]
        %v1336 = vld [vmem:[#allocation3 + $0x20] sm:$0xff]
        %v1337 = vld [vmem:[#allocation3 + $0x28] sm:$0xff]
        %v1338 = vld [vmem:[#allocation3 + $0x30] sm:$0xff]
        %v1339 = vld [vmem:[#allocation3 + $0x38] sm:$0xff]
        %v1340 = vld [vmem:[#allocation3 + $0x40] sm:$0xf]
        %v1341 = vld [vmem:[#allocation3 + $0x48] sm:$0xf]
        %v1342 = vld [vmem:[%s1079] sm:$0xf]
        %1344 = vset.pattern.permute.xlu0 0
        %1345 = vperm.xlu0 %1344, %v1342
        %v1346 = vpop.permute.xlu0 %1345
        %v1349 = vsel %vm560, %v1331, 0
        %v1352 = vsel %vm564, %v1340, 0
        %v1355 = vsel %vm564, %v1341, 0
        %1357 = vmatprep.subr.mxu0 0.0
        %1358 = vmatpush1.msra.mxu0 0.0
        %1359 = vmatprep.subr.mxu0 0.0
        %1360 = vmatpush1.msra.mxu0 0.0
        %1361 = vmatprep.subr.mxu0 0.0
        %1362 = vmatpush1.msra.mxu0 0.0
        %1363 = vmatprep.subr.mxu0 0.0
        %1364 = vmatpush1.msra.mxu0 0.0
        %1365 = vmatprep.subr.mxu0 0.0
        %1366 = vmatpush1.msra.mxu0 0.0
        %1367 = vmatprep.subr.mxu0 0.0
        %1368 = vmatpush1.msra.mxu0 0.0
        %1369 = vmatprep.subr.mxu0 0.0
        %1370 = vmatpush1.msra.mxu0 0.0
        %1371 = vmatprep.subr.mxu0 0.0
        %1372 = vmatpush1.msra.mxu0 0.0
        %1373 = vmatprep.subr.mxu0 0.0
        %1374 = vmatpush1.msra.mxu0 0.0
        %1375 = vmatprep.subr.mxu0 0.0
        %1376 = vmatpush1.msra.mxu0 0.0
        %1377 = vmatprep.subr.mxu0 0.0
        %1378 = vmatpush1.msra.mxu0 0.0
        %1379 = vmatprep.subr.mxu0 %v1355
        %1380 = vmatpush1.msra.mxu0 %v1352
        %1381 = vmatprep.subr.mxu0 %v1339
        %1382 = vmatpush1.msra.mxu0 %v1338
        %1383 = vmatprep.subr.mxu0 %v1337
        %1384 = vmatpush1.msra.mxu0 %v1336
        %1385 = vmatprep.subr.mxu0 %v1335
        %1386 = vmatpush1.msra.mxu0 %v1334
        %1387 = vmatprep.subr.mxu0 %v1333
        %1388 = vmatpush1.msra.mxu0 %v1332
        %1389 = vmatprep.subr.mxu0 0.0
        %1390 = vmatpush2.msra.mxu0 0.0
        %1391 = vmatprep.subr.mxu0 0.0
        %1392 = vmatpush2.msra.mxu0 0.0
        %1393 = vmatprep.subr.mxu0 0.0
        %1394 = vmatpush2.msra.mxu0 0.0
        %1395 = vmatprep.subr.mxu0 0.0
        %1396 = vmatpush2.msra.mxu0 0.0
        %1397 = vmatprep.subr.mxu0 0.0
        %1398 = vmatpush2.msra.mxu0 0.0
        %1399 = vmatprep.subr.mxu0 0.0
        %1400 = vmatpush2.msra.mxu0 0.0
        %1401 = vmatprep.subr.mxu0 0.0
        %1402 = vmatpush2.msra.mxu0 0.0
        %1403 = vmatprep.subr.mxu0 0.0
        %1404 = vmatpush2.msra.mxu0 0.0
        %1405 = vmatprep.subr.mxu0 0.0
        %1406 = vmatpush2.msra.mxu0 0.0
        %1407 = vmatprep.subr.mxu0 0.0
        %1408 = vmatpush2.msra.mxu0 0.0
        %1409 = vmatprep.subr.mxu0 0.0
        %1410 = vmatpush2.msra.mxu0 0.0
        %1411 = vmatprep.subr.mxu0 0.0
        %1412 = vmatpush2.msra.mxu0 0.0
        %1413 = vmatprep.subr.mxu0 0.0
        %1414 = vmatpush2.msra.mxu0 0.0
        %1415 = vmatprep.subr.mxu0 0.0
        %1416 = vmatpush2.msra.mxu0 0.0
        %1417 = vmatprep.subr.mxu0 0.0
        %1418 = vmatpush2.msra.mxu0 0.0
        %1419 = vmatprep.subr.mxu0 0.0
        %1420 = vmatpush2.msra.mxu0 0.0
        %1421 = vmatprep.mubr.f32.mxu0 0.0
        %1422 = vmatmul.mubr.f32.gmra.mxu0 %v1349
        %v1423 = vpop.f32.mrf.mxu0
        %v1424 = vadd.f32 %v1346, %v1423
        %v1425 = vpop.f32.mrf.mxu0
        %v1426 = vadd.f32 %v1346, %v1425
        %1427 = vdwg.mxu0
        %v1428 = vmax.f32 %v1424, 0.0
        %v1429 = vmax.f32 %v1426, 0.0
        %v1432 = vcombine.low %v1428, %v1429
        %1434 = vst [vmem:[#allocation2 + $0x4] sm:$0xff] %v1432
        %v1435 = vld [vmem:[#allocation2] sm:$0xff]
        %v1436 = vld [vmem:[#allocation2 + $0x8] sm:$0xf]
        %v1437 = vmul.f32 %v1435, %v344
        %v1438 = vmul.f32 %v1436, %v342
        %v1441 = vcombine.high %v1437, %v1437
        %1442 = vrot.lane.b32.xlu0 %v1437, 17
        %v1443 = vpop.permute.xlu0 %1442
        %1444 = vrot.lane.b32.xlu0 %v1441, 17
        %v1445 = vpop.permute.xlu0 %1444
        %1446 = vrot.lane.b32.xlu0 %v1438, 17
        %v1447 = vpop.permute.xlu0 %1446
        %v1448 = vsel %vm358, %v1443, %v1445
        %v1449 = vsel %vm358, %v1445, %v1447
        %1452 = vst [vmem:[#allocation3] sm:$0xf] %v1448
        %1453 = vst [vmem:[#allocation3 + $0x8] sm:$0xf] %v1449
        %v1454 = vld [vmem:[#allocation2] sm:$0xff]
        %v1455 = vld [vmem:[#allocation2 + $0x8] sm:$0xf]
        %v1458 = vcombine.low %v1454, %v1454
        %v1459 = vcombine.low %v1455, %v1455
        %1460 = vrot.lane.b32.xlu0 %v1458, 16
        %v1461 = vpop.permute.xlu0 %1460
        %1462 = vrot.lane.b32.xlu0 %v1454, 16
        %v1463 = vpop.permute.xlu0 %1462
        %1464 = vrot.lane.b32.xlu0 %v1459, 16
        %v1465 = vpop.permute.xlu0 %1464
        %v1466 = vsel %vm377, %v1461, %v1463
        %v1467 = vsel %vm377, %v1463, %v1465
        %1470 = vst [vmem:[#allocation3] sm:$0xf0] %v1466
        %1471 = vst [vmem:[#allocation3 + $0x8] sm:$0xf0] %v1467
        %v1472 = vld [vmem:[#allocation2] sm:$0xff]
        %v1473 = vld [vmem:[#allocation2 + $0x8] sm:$0xf]
        %v1474 = vmul.f32 %v1472, %v393
        %v1475 = vmul.f32 %v1473, %v391
        %v1478 = vcombine.high %v1474, %v1474
        %1479 = vrot.lane.b32.xlu0 %v1474, 15
        %v1480 = vpop.permute.xlu0 %1479
        %1481 = vrot.lane.b32.xlu0 %v1478, 15
        %v1482 = vpop.permute.xlu0 %1481
        %1483 = vrot.lane.b32.xlu0 %v1475, 15
        %v1484 = vpop.permute.xlu0 %1483
        %v1485 = vsel %vm407, %v1480, %v1482
        %v1486 = vsel %vm407, %v1482, %v1484
        %1489 = vst [vmem:[#allocation3 + $0x10] sm:$0xf] %v1485
        %1490 = vst [vmem:[#allocation3 + $0x18] sm:$0xf] %v1486
        %v1491 = vld [vmem:[#allocation2] sm:$0xff]
        %v1492 = vld [vmem:[#allocation2 + $0x8] sm:$0xf]
        %v1493 = vmul.f32 %v1491, %v420
        %v1494 = vmul.f32 %v1492, %v418
        %v1497 = vcombine.low %v1493, %v1493
        %v1498 = vcombine.low %v1494, %v1494
        %1499 = vrot.lane.b32.xlu0 %v1497, 1
        %v1500 = vpop.permute.xlu0 %1499
        %1501 = vrot.lane.b32.xlu0 %v1493, 1
        %v1502 = vpop.permute.xlu0 %1501
        %1503 = vrot.lane.b32.xlu0 %v1498, 1
        %v1504 = vpop.permute.xlu0 %1503
        %v1505 = vsel %vm435, %v1500, %v1502
        %v1506 = vsel %vm435, %v1502, %v1504
        %1509 = vst [vmem:[#allocation3 + $0x10] sm:$0xf0] %v1505
        %1510 = vst [vmem:[#allocation3 + $0x18] sm:$0xf0] %v1506
        %v1511 = vld [vmem:[#allocation2 + $0x4] sm:$0xff]
        %v1513 = vcombine.high %v1511, %v1511
        %1515 = vst [vmem:[#allocation3 + $0x20] sm:$0xf] %v1511
        %1516 = vst [vmem:[#allocation3 + $0x28] sm:$0xf] %v1513
        %v1517 = vld [vmem:[#allocation2 + $0x4] sm:$0xff]
        %v1518 = vld [vmem:[#allocation2 + $0xc] sm:$0xf]
        %v1519 = vmul.f32 %v1517, %v453
        %v1520 = vmul.f32 %v1518, %v452
        %v1523 = vcombine.low %v1519, %v1519
        %v1524 = vcombine.low %v1520, %v1520
        %1525 = vrot.lane.b32.xlu0 %v1523, 127
        %v1526 = vpop.permute.xlu0 %1525
        %1527 = vrot.lane.b32.xlu0 %v1519, 127
        %v1528 = vpop.permute.xlu0 %1527
        %1529 = vrot.lane.b32.xlu0 %v1524, 127
        %v1530 = vpop.permute.xlu0 %1529
        %v1531 = vsel %vm419, %v1526, %v1528
        %v1532 = vsel %vm419, %v1528, %v1530
        %1535 = vst [vmem:[#allocation3 + $0x20] sm:$0xf0] %v1531
        %1536 = vst [vmem:[#allocation3 + $0x28] sm:$0xf0] %v1532
        %v1537 = vld [vmem:[#allocation2 + $0x4] sm:$0xff]
        %v1538 = vld [vmem:[#allocation2 + $0xc] sm:$0xf]
        %v1539 = vmul.f32 %v1537, %v479
        %v1540 = vmul.f32 %v1538, %v478
        %v1543 = vcombine.high %v1539, %v1539
        %1544 = vrot.lane.b32.xlu0 %v1539, 113
        %v1545 = vpop.permute.xlu0 %1544
        %1546 = vrot.lane.b32.xlu0 %v1543, 113
        %v1547 = vpop.permute.xlu0 %1546
        %1548 = vrot.lane.b32.xlu0 %v1540, 113
        %v1549 = vpop.permute.xlu0 %1548
        %v1550 = vsel %vm392, %v1545, %v1547
        %v1551 = vsel %vm392, %v1547, %v1549
        %1554 = vst [vmem:[#allocation3 + $0x30] sm:$0xf] %v1550
        %1555 = vst [vmem:[#allocation3 + $0x38] sm:$0xf] %v1551
        %v1556 = vld [vmem:[#allocation2 + $0x4] sm:$0xff]
        %v1557 = vld [vmem:[#allocation2 + $0xc] sm:$0xf]
        %v1560 = vcombine.low %v1556, %v1556
        %v1561 = vcombine.low %v1557, %v1557
        %1562 = vrot.lane.b32.xlu0 %v1560, 112
        %v1563 = vpop.permute.xlu0 %1562
        %1564 = vrot.lane.b32.xlu0 %v1556, 112
        %v1565 = vpop.permute.xlu0 %1564
        %1566 = vrot.lane.b32.xlu0 %v1561, 112
        %v1567 = vpop.permute.xlu0 %1566
        %v1568 = vsel %vm511, %v1563, %v1565
        %v1569 = vsel %vm511, %v1565, %v1567
        %1572 = vst [vmem:[#allocation3 + $0x30] sm:$0xf0] %v1568
        %1573 = vst [vmem:[#allocation3 + $0x38] sm:$0xf0] %v1569
        %v1574 = vld [vmem:[#allocation2 + $0x4] sm:$0xff]
        %v1575 = vld [vmem:[#allocation2 + $0xc] sm:$0xf]
        %v1576 = vmul.f32 %v1574, %v523
        %v1577 = vmul.f32 %v1575, %v522
        %v1580 = vcombine.high %v1576, %v1576
        %1581 = vrot.lane.b32.xlu0 %v1576, 111
        %v1582 = vpop.permute.xlu0 %1581
        %1583 = vrot.lane.b32.xlu0 %v1580, 111
        %v1584 = vpop.permute.xlu0 %1583
        %1585 = vrot.lane.b32.xlu0 %v1577, 111
        %v1586 = vpop.permute.xlu0 %1585
        %v1587 = vsel %vm343, %v1582, %v1584
        %v1588 = vsel %vm343, %v1584, %v1586
        %1591 = vst [vmem:[#allocation3 + $0x40] sm:$0xf] %v1587
        %1592 = vst [vmem:[#allocation3 + $0x48] sm:$0xf] %v1588
        %v1593 = vld [vmem:[%s1067] sm:$0xf]
        %v1594 = vld [vmem:[#allocation3] sm:$0xff]
        %v1595 = vld [vmem:[#allocation3 + $0x8] sm:$0xff]
        %v1596 = vld [vmem:[#allocation3 + $0x10] sm:$0xff]
        %v1597 = vld [vmem:[#allocation3 + $0x18] sm:$0xff]
        %v1598 = vld [vmem:[#allocation3 + $0x20] sm:$0xff]
        %v1599 = vld [vmem:[#allocation3 + $0x28] sm:$0xff]
        %v1600 = vld [vmem:[#allocation3 + $0x30] sm:$0xff]
        %v1601 = vld [vmem:[#allocation3 + $0x38] sm:$0xff]
        %v1602 = vld [vmem:[#allocation3 + $0x40] sm:$0xf]
        %v1603 = vld [vmem:[#allocation3 + $0x48] sm:$0xf]
        %v1604 = vld [vmem:[%s1079] sm:$0xf]
        %1606 = vset.pattern.permute.xlu0 0
        %1607 = vperm.xlu0 %1606, %v1604
        %v1608 = vpop.permute.xlu0 %1607
        %v1611 = vsel %vm560, %v1593, 0
        %v1614 = vsel %vm564, %v1602, 0
        %v1617 = vsel %vm564, %v1603, 0
        %1619 = vmatprep.subr.mxu0 0.0
        %1620 = vmatpush1.msra.mxu0 0.0
        %1621 = vmatprep.subr.mxu0 0.0
        %1622 = vmatpush1.msra.mxu0 0.0
        %1623 = vmatprep.subr.mxu0 0.0
        %1624 = vmatpush1.msra.mxu0 0.0
        %1625 = vmatprep.subr.mxu0 0.0
        %1626 = vmatpush1.msra.mxu0 0.0
        %1627 = vmatprep.subr.mxu0 0.0
        %1628 = vmatpush1.msra.mxu0 0.0
        %1629 = vmatprep.subr.mxu0 0.0
        %1630 = vmatpush1.msra.mxu0 0.0
        %1631 = vmatprep.subr.mxu0 0.0
        %1632 = vmatpush1.msra.mxu0 0.0
        %1633 = vmatprep.subr.mxu0 0.0
        %1634 = vmatpush1.msra.mxu0 0.0
        %1635 = vmatprep.subr.mxu0 0.0
        %1636 = vmatpush1.msra.mxu0 0.0
        %1637 = vmatprep.subr.mxu0 0.0
        %1638 = vmatpush1.msra.mxu0 0.0
        %1639 = vmatprep.subr.mxu0 0.0
        %1640 = vmatpush1.msra.mxu0 0.0
        %1641 = vmatprep.subr.mxu0 %v1617
        %1642 = vmatpush1.msra.mxu0 %v1614
        %1643 = vmatprep.subr.mxu0 %v1601
        %1644 = vmatpush1.msra.mxu0 %v1600
        %1645 = vmatprep.subr.mxu0 %v1599
        %1646 = vmatpush1.msra.mxu0 %v1598
        %1647 = vmatprep.subr.mxu0 %v1597
        %1648 = vmatpush1.msra.mxu0 %v1596
        %1649 = vmatprep.subr.mxu0 %v1595
        %1650 = vmatpush1.msra.mxu0 %v1594
        %1651 = vmatprep.subr.mxu0 0.0
        %1652 = vmatpush2.msra.mxu0 0.0
        %1653 = vmatprep.subr.mxu0 0.0
        %1654 = vmatpush2.msra.mxu0 0.0
        %1655 = vmatprep.subr.mxu0 0.0
        %1656 = vmatpush2.msra.mxu0 0.0
        %1657 = vmatprep.subr.mxu0 0.0
        %1658 = vmatpush2.msra.mxu0 0.0
        %1659 = vmatprep.subr.mxu0 0.0
        %1660 = vmatpush2.msra.mxu0 0.0
        %1661 = vmatprep.subr.mxu0 0.0
        %1662 = vmatpush2.msra.mxu0 0.0
        %1663 = vmatprep.subr.mxu0 0.0
        %1664 = vmatpush2.msra.mxu0 0.0
        %1665 = vmatprep.subr.mxu0 0.0
        %1666 = vmatpush2.msra.mxu0 0.0
        %1667 = vmatprep.subr.mxu0 0.0
        %1668 = vmatpush2.msra.mxu0 0.0
        %1669 = vmatprep.subr.mxu0 0.0
        %1670 = vmatpush2.msra.mxu0 0.0
        %1671 = vmatprep.subr.mxu0 0.0
        %1672 = vmatpush2.msra.mxu0 0.0
        %1673 = vmatprep.subr.mxu0 0.0
        %1674 = vmatpush2.msra.mxu0 0.0
        %1675 = vmatprep.subr.mxu0 0.0
        %1676 = vmatpush2.msra.mxu0 0.0
        %1677 = vmatprep.subr.mxu0 0.0
        %1678 = vmatpush2.msra.mxu0 0.0
        %1679 = vmatprep.subr.mxu0 0.0
        %1680 = vmatpush2.msra.mxu0 0.0
        %1681 = vmatprep.subr.mxu0 0.0
        %1682 = vmatpush2.msra.mxu0 0.0
        %1683 = vmatprep.mubr.f32.mxu0 0.0
        %1684 = vmatmul.mubr.f32.gmra.mxu0 %v1611
        %v1685 = vpop.f32.mrf.mxu0
        %v1686 = vadd.f32 %v1608, %v1685
        %v1687 = vpop.f32.mrf.mxu0
        %v1688 = vadd.f32 %v1608, %v1687
        %1689 = vdwg.mxu0
        %v1690 = vmax.f32 %v1686, 0.0
        %v1691 = vmax.f32 %v1688, 0.0
        %v1694 = vcombine.low %v1690, %v1691
        %1696 = vst [vmem:[#allocation2 + $0x4] sm:$0xff] %v1694
        %v1697 = vld [vmem:[#allocation2] sm:$0xff]
        %v1698 = vld [vmem:[#allocation2 + $0x8] sm:$0xf]
        %v1699 = vmul.f32 %v1697, %v344
        %v1700 = vmul.f32 %v1698, %v342
        %v1703 = vcombine.high %v1699, %v1699
        %1704 = vrot.lane.b32.xlu0 %v1699, 17
        %v1705 = vpop.permute.xlu0 %1704
        %1706 = vrot.lane.b32.xlu0 %v1703, 17
        %v1707 = vpop.permute.xlu0 %1706
        %1708 = vrot.lane.b32.xlu0 %v1700, 17
        %v1709 = vpop.permute.xlu0 %1708
        %v1710 = vsel %vm358, %v1705, %v1707
        %v1711 = vsel %vm358, %v1707, %v1709
        %1714 = vst [vmem:[#allocation3] sm:$0xf] %v1710
        %1715 = vst [vmem:[#allocation3 + $0x8] sm:$0xf] %v1711
        %v1716 = vld [vmem:[#allocation2] sm:$0xff]
        %v1717 = vld [vmem:[#allocation2 + $0x8] sm:$0xf]
        %v1720 = vcombine.low %v1716, %v1716
        %v1721 = vcombine.low %v1717, %v1717
        %1722 = vrot.lane.b32.xlu0 %v1720, 16
        %v1723 = vpop.permute.xlu0 %1722
        %1724 = vrot.lane.b32.xlu0 %v1716, 16
        %v1725 = vpop.permute.xlu0 %1724
        %1726 = vrot.lane.b32.xlu0 %v1721, 16
        %v1727 = vpop.permute.xlu0 %1726
        %v1728 = vsel %vm377, %v1723, %v1725
        %v1729 = vsel %vm377, %v1725, %v1727
        %1732 = vst [vmem:[#allocation3] sm:$0xf0] %v1728
        %1733 = vst [vmem:[#allocation3 + $0x8] sm:$0xf0] %v1729
        %v1734 = vld [vmem:[#allocation2] sm:$0xff]
        %v1735 = vld [vmem:[#allocation2 + $0x8] sm:$0xf]
        %v1736 = vmul.f32 %v1734, %v393
        %v1737 = vmul.f32 %v1735, %v391
        %v1740 = vcombine.high %v1736, %v1736
        %1741 = vrot.lane.b32.xlu0 %v1736, 15
        %v1742 = vpop.permute.xlu0 %1741
        %1743 = vrot.lane.b32.xlu0 %v1740, 15
        %v1744 = vpop.permute.xlu0 %1743
        %1745 = vrot.lane.b32.xlu0 %v1737, 15
        %v1746 = vpop.permute.xlu0 %1745
        %v1747 = vsel %vm407, %v1742, %v1744
        %v1748 = vsel %vm407, %v1744, %v1746
        %1751 = vst [vmem:[#allocation3 + $0x10] sm:$0xf] %v1747
        %1752 = vst [vmem:[#allocation3 + $0x18] sm:$0xf] %v1748
        %v1753 = vld [vmem:[#allocation2] sm:$0xff]
        %v1754 = vld [vmem:[#allocation2 + $0x8] sm:$0xf]
        %v1755 = vmul.f32 %v1753, %v420
        %v1756 = vmul.f32 %v1754, %v418
        %v1759 = vcombine.low %v1755, %v1755
        %v1760 = vcombine.low %v1756, %v1756
        %1761 = vrot.lane.b32.xlu0 %v1759, 1
        %v1762 = vpop.permute.xlu0 %1761
        %1763 = vrot.lane.b32.xlu0 %v1755, 1
        %v1764 = vpop.permute.xlu0 %1763
        %1765 = vrot.lane.b32.xlu0 %v1760, 1
        %v1766 = vpop.permute.xlu0 %1765
        %v1767 = vsel %vm435, %v1762, %v1764
        %v1768 = vsel %vm435, %v1764, %v1766
        %1771 = vst [vmem:[#allocation3 + $0x10] sm:$0xf0] %v1767
        %1772 = vst [vmem:[#allocation3 + $0x18] sm:$0xf0] %v1768
        %v1773 = vld [vmem:[#allocation2 + $0x4] sm:$0xff]
        %v1775 = vcombine.high %v1773, %v1773
        %1777 = vst [vmem:[#allocation3 + $0x20] sm:$0xf] %v1773
        %1778 = vst [vmem:[#allocation3 + $0x28] sm:$0xf] %v1775
        %v1779 = vld [vmem:[#allocation2 + $0x4] sm:$0xff]
        %v1780 = vld [vmem:[#allocation2 + $0xc] sm:$0xf]
        %v1781 = vmul.f32 %v1779, %v453
        %v1782 = vmul.f32 %v1780, %v452
        %v1785 = vcombine.low %v1781, %v1781
        %v1786 = vcombine.low %v1782, %v1782
        %1787 = vrot.lane.b32.xlu0 %v1785, 127
        %v1788 = vpop.permute.xlu0 %1787
        %1789 = vrot.lane.b32.xlu0 %v1781, 127
        %v1790 = vpop.permute.xlu0 %1789
        %1791 = vrot.lane.b32.xlu0 %v1786, 127
        %v1792 = vpop.permute.xlu0 %1791
        %v1793 = vsel %vm419, %v1788, %v1790
        %v1794 = vsel %vm419, %v1790, %v1792
        %1797 = vst [vmem:[#allocation3 + $0x20] sm:$0xf0] %v1793
        %1798 = vst [vmem:[#allocation3 + $0x28] sm:$0xf0] %v1794
        %v1799 = vld [vmem:[#allocation2 + $0x4] sm:$0xff]
        %v1800 = vld [vmem:[#allocation2 + $0xc] sm:$0xf]
        %v1801 = vmul.f32 %v1799, %v479
        %v1802 = vmul.f32 %v1800, %v478
        %v1805 = vcombine.high %v1801, %v1801
        %1806 = vrot.lane.b32.xlu0 %v1801, 113
        %v1807 = vpop.permute.xlu0 %1806
        %1808 = vrot.lane.b32.xlu0 %v1805, 113
        %v1809 = vpop.permute.xlu0 %1808
        %1810 = vrot.lane.b32.xlu0 %v1802, 113
        %v1811 = vpop.permute.xlu0 %1810
        %v1812 = vsel %vm392, %v1807, %v1809
        %v1813 = vsel %vm392, %v1809, %v1811
        %1816 = vst [vmem:[#allocation3 + $0x30] sm:$0xf] %v1812
        %1817 = vst [vmem:[#allocation3 + $0x38] sm:$0xf] %v1813
        %v1818 = vld [vmem:[#allocation2 + $0x4] sm:$0xff]
        %v1819 = vld [vmem:[#allocation2 + $0xc] sm:$0xf]
        %v1822 = vcombine.low %v1818, %v1818
        %v1823 = vcombine.low %v1819, %v1819
        %1824 = vrot.lane.b32.xlu0 %v1822, 112
        %v1825 = vpop.permute.xlu0 %1824
        %1826 = vrot.lane.b32.xlu0 %v1818, 112
        %v1827 = vpop.permute.xlu0 %1826
        %1828 = vrot.lane.b32.xlu0 %v1823, 112
        %v1829 = vpop.permute.xlu0 %1828
        %v1830 = vsel %vm511, %v1825, %v1827
        %v1831 = vsel %vm511, %v1827, %v1829
        %1834 = vst [vmem:[#allocation3 + $0x30] sm:$0xf0] %v1830
        %1835 = vst [vmem:[#allocation3 + $0x38] sm:$0xf0] %v1831
        %v1836 = vld [vmem:[#allocation2 + $0x4] sm:$0xff]
        %v1837 = vld [vmem:[#allocation2 + $0xc] sm:$0xf]
        %v1838 = vmul.f32 %v1836, %v523
        %v1839 = vmul.f32 %v1837, %v522
        %v1842 = vcombine.high %v1838, %v1838
        %1843 = vrot.lane.b32.xlu0 %v1838, 111
        %v1844 = vpop.permute.xlu0 %1843
        %1845 = vrot.lane.b32.xlu0 %v1842, 111
        %v1846 = vpop.permute.xlu0 %1845
        %1847 = vrot.lane.b32.xlu0 %v1839, 111
        %v1848 = vpop.permute.xlu0 %1847
        %v1849 = vsel %vm343, %v1844, %v1846
        %v1850 = vsel %vm343, %v1846, %v1848
        %1853 = vst [vmem:[#allocation3 + $0x40] sm:$0xf] %v1849
        %1854 = vst [vmem:[#allocation3 + $0x48] sm:$0xf] %v1850
        %s1855 = scalar_lea.vmem [#allocation4], 12
        %v1856 = vld [vmem:[%s1855] sm:$0xf]
        %v1857 = vld [vmem:[#allocation3] sm:$0xff]
        %v1858 = vld [vmem:[#allocation3 + $0x8] sm:$0xff]
        %v1859 = vld [vmem:[#allocation3 + $0x10] sm:$0xff]
        %v1860 = vld [vmem:[#allocation3 + $0x18] sm:$0xff]
        %v1861 = vld [vmem:[#allocation3 + $0x20] sm:$0xff]
        %v1862 = vld [vmem:[#allocation3 + $0x28] sm:$0xff]
        %v1863 = vld [vmem:[#allocation3 + $0x30] sm:$0xff]
        %v1864 = vld [vmem:[#allocation3 + $0x38] sm:$0xff]
        %v1865 = vld [vmem:[#allocation3 + $0x40] sm:$0xf]
        %v1866 = vld [vmem:[#allocation3 + $0x48] sm:$0xf]
        %s1867 = scalar_lea.vmem %s2, 12
        %v1868 = vld [vmem:[%s1867] sm:$0xf]
        %1870 = vset.pattern.permute.xlu0 0
        %1871 = vperm.xlu0 %1870, %v1868
        %v1872 = vpop.permute.xlu0 %1871
        %v1875 = vsel %vm560, %v1856, 0
        %v1878 = vsel %vm564, %v1865, 0
        %v1881 = vsel %vm564, %v1866, 0
        %1883 = vmatprep.subr.mxu0 0.0
        %1884 = vmatpush1.msra.mxu0 0.0
        %1885 = vmatprep.subr.mxu0 0.0
        %1886 = vmatpush1.msra.mxu0 0.0
        %1887 = vmatprep.subr.mxu0 0.0
        %1888 = vmatpush1.msra.mxu0 0.0
        %1889 = vmatprep.subr.mxu0 0.0
        %1890 = vmatpush1.msra.mxu0 0.0
        %1891 = vmatprep.subr.mxu0 0.0
        %1892 = vmatpush1.msra.mxu0 0.0
        %1893 = vmatprep.subr.mxu0 0.0
        %1894 = vmatpush1.msra.mxu0 0.0
        %1895 = vmatprep.subr.mxu0 0.0
        %1896 = vmatpush1.msra.mxu0 0.0
        %1897 = vmatprep.subr.mxu0 0.0
        %1898 = vmatpush1.msra.mxu0 0.0
        %1899 = vmatprep.subr.mxu0 0.0
        %1900 = vmatpush1.msra.mxu0 0.0
        %1901 = vmatprep.subr.mxu0 0.0
        %1902 = vmatpush1.msra.mxu0 0.0
        %1903 = vmatprep.subr.mxu0 0.0
        %1904 = vmatpush1.msra.mxu0 0.0
        %1905 = vmatprep.subr.mxu0 %v1881
        %1906 = vmatpush1.msra.mxu0 %v1878
        %1907 = vmatprep.subr.mxu0 %v1864
        %1908 = vmatpush1.msra.mxu0 %v1863
        %1909 = vmatprep.subr.mxu0 %v1862
        %1910 = vmatpush1.msra.mxu0 %v1861
        %1911 = vmatprep.subr.mxu0 %v1860
        %1912 = vmatpush1.msra.mxu0 %v1859
        %1913 = vmatprep.subr.mxu0 %v1858
        %1914 = vmatpush1.msra.mxu0 %v1857
        %1915 = vmatprep.subr.mxu0 0.0
        %1916 = vmatpush2.msra.mxu0 0.0
        %1917 = vmatprep.subr.mxu0 0.0
        %1918 = vmatpush2.msra.mxu0 0.0
        %1919 = vmatprep.subr.mxu0 0.0
        %1920 = vmatpush2.msra.mxu0 0.0
        %1921 = vmatprep.subr.mxu0 0.0
        %1922 = vmatpush2.msra.mxu0 0.0
        %1923 = vmatprep.subr.mxu0 0.0
        %1924 = vmatpush2.msra.mxu0 0.0
        %1925 = vmatprep.subr.mxu0 0.0
        %1926 = vmatpush2.msra.mxu0 0.0
        %1927 = vmatprep.subr.mxu0 0.0
        %1928 = vmatpush2.msra.mxu0 0.0
        %1929 = vmatprep.subr.mxu0 0.0
        %1930 = vmatpush2.msra.mxu0 0.0
        %1931 = vmatprep.subr.mxu0 0.0
        %1932 = vmatpush2.msra.mxu0 0.0
        %1933 = vmatprep.subr.mxu0 0.0
        %1934 = vmatpush2.msra.mxu0 0.0
        %1935 = vmatprep.subr.mxu0 0.0
        %1936 = vmatpush2.msra.mxu0 0.0
        %1937 = vmatprep.subr.mxu0 0.0
        %1938 = vmatpush2.msra.mxu0 0.0
        %1939 = vmatprep.subr.mxu0 0.0
        %1940 = vmatpush2.msra.mxu0 0.0
        %1941 = vmatprep.subr.mxu0 0.0
        %1942 = vmatpush2.msra.mxu0 0.0
        %1943 = vmatprep.subr.mxu0 0.0
        %1944 = vmatpush2.msra.mxu0 0.0
        %1945 = vmatprep.subr.mxu0 0.0
        %1946 = vmatpush2.msra.mxu0 0.0
        %1947 = vmatprep.mubr.f32.mxu0 0.0
        %1948 = vmatmul.mubr.f32.gmra.mxu0 %v1875
        %v1949 = vpop.f32.mrf.mxu0
        %v1950 = vadd.f32 %v1872, %v1949
        %v1951 = vpop.f32.mrf.mxu0
        %v1952 = vadd.f32 %v1872, %v1951
        %1953 = vdwg.mxu0
        %v1954 = vmax.f32 %v1950, 0.0
        %v1955 = vmax.f32 %v1952, 0.0
        %v1958 = vcombine.low %v1954, %v1955
        %1960 = vst [vmem:[#allocation2 + $0x4] sm:$0xff] %v1958
        %v1961 = vld [vmem:[#allocation2] sm:$0xff]
        %v1962 = vld [vmem:[#allocation2 + $0x8] sm:$0xf]
        %v1963 = vmul.f32 %v1961, %v344
        %v1964 = vmul.f32 %v1962, %v342
        %v1967 = vcombine.high %v1963, %v1963
        %1968 = vrot.lane.b32.xlu0 %v1963, 17
        %v1969 = vpop.permute.xlu0 %1968
        %1970 = vrot.lane.b32.xlu0 %v1967, 17
        %v1971 = vpop.permute.xlu0 %1970
        %1972 = vrot.lane.b32.xlu0 %v1964, 17
        %v1973 = vpop.permute.xlu0 %1972
        %v1974 = vsel %vm358, %v1969, %v1971
        %v1975 = vsel %vm358, %v1971, %v1973
        %1978 = vst [vmem:[#allocation3] sm:$0xf] %v1974
        %1979 = vst [vmem:[#allocation3 + $0x8] sm:$0xf] %v1975
        %v1980 = vld [vmem:[#allocation2] sm:$0xff]
        %v1981 = vld [vmem:[#allocation2 + $0x8] sm:$0xf]
        %v1984 = vcombine.low %v1980, %v1980
        %v1985 = vcombine.low %v1981, %v1981
        %1986 = vrot.lane.b32.xlu0 %v1984, 16
        %v1987 = vpop.permute.xlu0 %1986
        %1988 = vrot.lane.b32.xlu0 %v1980, 16
        %v1989 = vpop.permute.xlu0 %1988
        %1990 = vrot.lane.b32.xlu0 %v1985, 16
        %v1991 = vpop.permute.xlu0 %1990
        %v1992 = vsel %vm377, %v1987, %v1989
        %v1993 = vsel %vm377, %v1989, %v1991
        %1996 = vst [vmem:[#allocation3] sm:$0xf0] %v1992
        %1997 = vst [vmem:[#allocation3 + $0x8] sm:$0xf0] %v1993
        %v1998 = vld [vmem:[#allocation2] sm:$0xff]
        %v1999 = vld [vmem:[#allocation2 + $0x8] sm:$0xf]
        %v2000 = vmul.f32 %v1998, %v393
        %v2001 = vmul.f32 %v1999, %v391
        %v2004 = vcombine.high %v2000, %v2000
        %2005 = vrot.lane.b32.xlu0 %v2000, 15
        %v2006 = vpop.permute.xlu0 %2005
        %2007 = vrot.lane.b32.xlu0 %v2004, 15
        %v2008 = vpop.permute.xlu0 %2007
        %2009 = vrot.lane.b32.xlu0 %v2001, 15
        %v2010 = vpop.permute.xlu0 %2009
        %v2011 = vsel %vm407, %v2006, %v2008
        %v2012 = vsel %vm407, %v2008, %v2010
        %2015 = vst [vmem:[#allocation3 + $0x10] sm:$0xf] %v2011
        %2016 = vst [vmem:[#allocation3 + $0x18] sm:$0xf] %v2012
        %v2017 = vld [vmem:[#allocation2] sm:$0xff]
        %v2018 = vld [vmem:[#allocation2 + $0x8] sm:$0xf]
        %v2019 = vmul.f32 %v2017, %v420
        %v2020 = vmul.f32 %v2018, %v418
        %v2023 = vcombine.low %v2019, %v2019
        %v2024 = vcombine.low %v2020, %v2020
        %2025 = vrot.lane.b32.xlu0 %v2023, 1
        %v2026 = vpop.permute.xlu0 %2025
        %2027 = vrot.lane.b32.xlu0 %v2019, 1
        %v2028 = vpop.permute.xlu0 %2027
        %2029 = vrot.lane.b32.xlu0 %v2024, 1
        %v2030 = vpop.permute.xlu0 %2029
        %v2031 = vsel %vm435, %v2026, %v2028
        %v2032 = vsel %vm435, %v2028, %v2030
        %2035 = vst [vmem:[#allocation3 + $0x10] sm:$0xf0] %v2031
        %2036 = vst [vmem:[#allocation3 + $0x18] sm:$0xf0] %v2032
        %v2037 = vld [vmem:[#allocation2 + $0x4] sm:$0xff]
        %v2039 = vcombine.high %v2037, %v2037
        %2041 = vst [vmem:[#allocation3 + $0x20] sm:$0xf] %v2037
        %2042 = vst [vmem:[#allocation3 + $0x28] sm:$0xf] %v2039
        %v2043 = vld [vmem:[#allocation2 + $0x4] sm:$0xff]
        %v2044 = vld [vmem:[#allocation2 + $0xc] sm:$0xf]
        %v2045 = vmul.f32 %v2043, %v453
        %v2046 = vmul.f32 %v2044, %v452
        %v2049 = vcombine.low %v2045, %v2045
        %v2050 = vcombine.low %v2046, %v2046
        %2051 = vrot.lane.b32.xlu0 %v2049, 127
        %v2052 = vpop.permute.xlu0 %2051
        %2053 = vrot.lane.b32.xlu0 %v2045, 127
        %v2054 = vpop.permute.xlu0 %2053
        %2055 = vrot.lane.b32.xlu0 %v2050, 127
        %v2056 = vpop.permute.xlu0 %2055
        %v2057 = vsel %vm419, %v2052, %v2054
        %v2058 = vsel %vm419, %v2054, %v2056
        %2061 = vst [vmem:[#allocation3 + $0x20] sm:$0xf0] %v2057
        %2062 = vst [vmem:[#allocation3 + $0x28] sm:$0xf0] %v2058
        %v2063 = vld [vmem:[#allocation2 + $0x4] sm:$0xff]
        %v2064 = vld [vmem:[#allocation2 + $0xc] sm:$0xf]
        %v2065 = vmul.f32 %v2063, %v479
        %v2066 = vmul.f32 %v2064, %v478
        %v2069 = vcombine.high %v2065, %v2065
        %2070 = vrot.lane.b32.xlu0 %v2065, 113
        %v2071 = vpop.permute.xlu0 %2070
        %2072 = vrot.lane.b32.xlu0 %v2069, 113
        %v2073 = vpop.permute.xlu0 %2072
        %2074 = vrot.lane.b32.xlu0 %v2066, 113
        %v2075 = vpop.permute.xlu0 %2074
        %v2076 = vsel %vm392, %v2071, %v2073
        %v2077 = vsel %vm392, %v2073, %v2075
        %2080 = vst [vmem:[#allocation3 + $0x30] sm:$0xf] %v2076
        %2081 = vst [vmem:[#allocation3 + $0x38] sm:$0xf] %v2077
        %v2082 = vld [vmem:[#allocation2 + $0x4] sm:$0xff]
        %v2083 = vld [vmem:[#allocation2 + $0xc] sm:$0xf]
        %v2086 = vcombine.low %v2082, %v2082
        %v2087 = vcombine.low %v2083, %v2083
        %2088 = vrot.lane.b32.xlu0 %v2086, 112
        %v2089 = vpop.permute.xlu0 %2088
        %2090 = vrot.lane.b32.xlu0 %v2082, 112
        %v2091 = vpop.permute.xlu0 %2090
        %2092 = vrot.lane.b32.xlu0 %v2087, 112
        %v2093 = vpop.permute.xlu0 %2092
        %v2094 = vsel %vm511, %v2089, %v2091
        %v2095 = vsel %vm511, %v2091, %v2093
        %2098 = vst [vmem:[#allocation3 + $0x30] sm:$0xf0] %v2094
        %2099 = vst [vmem:[#allocation3 + $0x38] sm:$0xf0] %v2095
        %v2100 = vld [vmem:[#allocation2 + $0x4] sm:$0xff]
        %v2101 = vld [vmem:[#allocation2 + $0xc] sm:$0xf]
        %v2102 = vmul.f32 %v2100, %v523
        %v2103 = vmul.f32 %v2101, %v522
        %v2106 = vcombine.high %v2102, %v2102
        %2107 = vrot.lane.b32.xlu0 %v2102, 111
        %v2108 = vpop.permute.xlu0 %2107
        %2109 = vrot.lane.b32.xlu0 %v2106, 111
        %v2110 = vpop.permute.xlu0 %2109
        %2111 = vrot.lane.b32.xlu0 %v2103, 111
        %v2112 = vpop.permute.xlu0 %2111
        %v2113 = vsel %vm343, %v2108, %v2110
        %v2114 = vsel %vm343, %v2110, %v2112
        %2117 = vst [vmem:[#allocation3 + $0x40] sm:$0xf] %v2113
        %2118 = vst [vmem:[#allocation3 + $0x48] sm:$0xf] %v2114
        %v2119 = vld [vmem:[%s1855] sm:$0xf]
        %v2120 = vld [vmem:[#allocation3] sm:$0xff]
        %v2121 = vld [vmem:[#allocation3 + $0x8] sm:$0xff]
        %v2122 = vld [vmem:[#allocation3 + $0x10] sm:$0xff]
        %v2123 = vld [vmem:[#allocation3 + $0x18] sm:$0xff]
        %v2124 = vld [vmem:[#allocation3 + $0x20] sm:$0xff]
        %v2125 = vld [vmem:[#allocation3 + $0x28] sm:$0xff]
        %v2126 = vld [vmem:[#allocation3 + $0x30] sm:$0xff]
        %v2127 = vld [vmem:[#allocation3 + $0x38] sm:$0xff]
        %v2128 = vld [vmem:[#allocation3 + $0x40] sm:$0xf]
        %v2129 = vld [vmem:[#allocation3 + $0x48] sm:$0xf]
        %v2130 = vld [vmem:[%s1867] sm:$0xf]
        %2132 = vset.pattern.permute.xlu0 0
        %2133 = vperm.xlu0 %2132, %v2130
        %v2134 = vpop.permute.xlu0 %2133
        %v2137 = vsel %vm560, %v2119, 0
        %v2140 = vsel %vm564, %v2128, 0
        %v2143 = vsel %vm564, %v2129, 0
        %2145 = vmatprep.subr.mxu0 0.0
        %2146 = vmatpush1.msra.mxu0 0.0
        %2147 = vmatprep.subr.mxu0 0.0
        %2148 = vmatpush1.msra.mxu0 0.0
        %2149 = vmatprep.subr.mxu0 0.0
        %2150 = vmatpush1.msra.mxu0 0.0
        %2151 = vmatprep.subr.mxu0 0.0
        %2152 = vmatpush1.msra.mxu0 0.0
        %2153 = vmatprep.subr.mxu0 0.0
        %2154 = vmatpush1.msra.mxu0 0.0
        %2155 = vmatprep.subr.mxu0 0.0
        %2156 = vmatpush1.msra.mxu0 0.0
        %2157 = vmatprep.subr.mxu0 0.0
        %2158 = vmatpush1.msra.mxu0 0.0
        %2159 = vmatprep.subr.mxu0 0.0
        %2160 = vmatpush1.msra.mxu0 0.0
        %2161 = vmatprep.subr.mxu0 0.0
        %2162 = vmatpush1.msra.mxu0 0.0
        %2163 = vmatprep.subr.mxu0 0.0
        %2164 = vmatpush1.msra.mxu0 0.0
        %2165 = vmatprep.subr.mxu0 0.0
        %2166 = vmatpush1.msra.mxu0 0.0
        %2167 = vmatprep.subr.mxu0 %v2143
        %2168 = vmatpush1.msra.mxu0 %v2140
        %2169 = vmatprep.subr.mxu0 %v2127
        %2170 = vmatpush1.msra.mxu0 %v2126
        %2171 = vmatprep.subr.mxu0 %v2125
        %2172 = vmatpush1.msra.mxu0 %v2124
        %2173 = vmatprep.subr.mxu0 %v2123
        %2174 = vmatpush1.msra.mxu0 %v2122
        %2175 = vmatprep.subr.mxu0 %v2121
        %2176 = vmatpush1.msra.mxu0 %v2120
        %2177 = vmatprep.subr.mxu0 0.0
        %2178 = vmatpush2.msra.mxu0 0.0
        %2179 = vmatprep.subr.mxu0 0.0
        %2180 = vmatpush2.msra.mxu0 0.0
        %2181 = vmatprep.subr.mxu0 0.0
        %2182 = vmatpush2.msra.mxu0 0.0
        %2183 = vmatprep.subr.mxu0 0.0
        %2184 = vmatpush2.msra.mxu0 0.0
        %2185 = vmatprep.subr.mxu0 0.0
        %2186 = vmatpush2.msra.mxu0 0.0
        %2187 = vmatprep.subr.mxu0 0.0
        %2188 = vmatpush2.msra.mxu0 0.0
        %2189 = vmatprep.subr.mxu0 0.0
        %2190 = vmatpush2.msra.mxu0 0.0
        %2191 = vmatprep.subr.mxu0 0.0
        %2192 = vmatpush2.msra.mxu0 0.0
        %2193 = vmatprep.subr.mxu0 0.0
        %2194 = vmatpush2.msra.mxu0 0.0
        %2195 = vmatprep.subr.mxu0 0.0
        %2196 = vmatpush2.msra.mxu0 0.0
        %2197 = vmatprep.subr.mxu0 0.0
        %2198 = vmatpush2.msra.mxu0 0.0
        %2199 = vmatprep.subr.mxu0 0.0
        %2200 = vmatpush2.msra.mxu0 0.0
        %2201 = vmatprep.subr.mxu0 0.0
        %2202 = vmatpush2.msra.mxu0 0.0
        %2203 = vmatprep.subr.mxu0 0.0
        %2204 = vmatpush2.msra.mxu0 0.0
        %2205 = vmatprep.subr.mxu0 0.0
        %2206 = vmatpush2.msra.mxu0 0.0
        %2207 = vmatprep.subr.mxu0 0.0
        %2208 = vmatpush2.msra.mxu0 0.0
        %2209 = vmatprep.mubr.f32.mxu0 0.0
        %2210 = vmatmul.mubr.f32.gmra.mxu0 %v2137
        %v2211 = vpop.f32.mrf.mxu0
        %v2212 = vadd.f32 %v2134, %v2211
        %v2213 = vpop.f32.mrf.mxu0
        %v2214 = vadd.f32 %v2134, %v2213
        %2215 = vdwg.mxu0
        %v2216 = vmax.f32 %v2212, 0.0
        %v2217 = vmax.f32 %v2214, 0.0
        %v2220 = vcombine.low %v2216, %v2217
        %2222 = vst [vmem:[#allocation2 + $0x4] sm:$0xff] %v2220
        %v2223 = vld [vmem:[#allocation2] sm:$0xff]
        %v2224 = vld [vmem:[#allocation2 + $0x8] sm:$0xf]
        %v2225 = vmul.f32 %v2223, %v344
        %v2226 = vmul.f32 %v2224, %v342
        %v2229 = vcombine.high %v2225, %v2225
        %2230 = vrot.lane.b32.xlu0 %v2225, 17
        %v2231 = vpop.permute.xlu0 %2230
        %2232 = vrot.lane.b32.xlu0 %v2229, 17
        %v2233 = vpop.permute.xlu0 %2232
        %2234 = vrot.lane.b32.xlu0 %v2226, 17
        %v2235 = vpop.permute.xlu0 %2234
        %v2236 = vsel %vm358, %v2231, %v2233
        %v2237 = vsel %vm358, %v2233, %v2235
        %2240 = vst [vmem:[#allocation3] sm:$0xf] %v2236
        %2241 = vst [vmem:[#allocation3 + $0x8] sm:$0xf] %v2237
        %v2242 = vld [vmem:[#allocation2] sm:$0xff]
        %v2243 = vld [vmem:[#allocation2 + $0x8] sm:$0xf]
        %v2246 = vcombine.low %v2242, %v2242
        %v2247 = vcombine.low %v2243, %v2243
        %2248 = vrot.lane.b32.xlu0 %v2246, 16
        %v2249 = vpop.permute.xlu0 %2248
        %2250 = vrot.lane.b32.xlu0 %v2242, 16
        %v2251 = vpop.permute.xlu0 %2250
        %2252 = vrot.lane.b32.xlu0 %v2247, 16
        %v2253 = vpop.permute.xlu0 %2252
        %v2254 = vsel %vm377, %v2249, %v2251
        %v2255 = vsel %vm377, %v2251, %v2253
        %2258 = vst [vmem:[#allocation3] sm:$0xf0] %v2254
        %2259 = vst [vmem:[#allocation3 + $0x8] sm:$0xf0] %v2255
        %v2260 = vld [vmem:[#allocation2] sm:$0xff]
        %v2261 = vld [vmem:[#allocation2 + $0x8] sm:$0xf]
        %v2262 = vmul.f32 %v2260, %v393
        %v2263 = vmul.f32 %v2261, %v391
        %v2266 = vcombine.high %v2262, %v2262
        %2267 = vrot.lane.b32.xlu0 %v2262, 15
        %v2268 = vpop.permute.xlu0 %2267
        %2269 = vrot.lane.b32.xlu0 %v2266, 15
        %v2270 = vpop.permute.xlu0 %2269
        %2271 = vrot.lane.b32.xlu0 %v2263, 15
        %v2272 = vpop.permute.xlu0 %2271
        %v2273 = vsel %vm407, %v2268, %v2270
        %v2274 = vsel %vm407, %v2270, %v2272
        %2277 = vst [vmem:[#allocation3 + $0x10] sm:$0xf] %v2273
        %2278 = vst [vmem:[#allocation3 + $0x18] sm:$0xf] %v2274
        %v2279 = vld [vmem:[#allocation2] sm:$0xff]
        %v2280 = vld [vmem:[#allocation2 + $0x8] sm:$0xf]
        %v2281 = vmul.f32 %v2279, %v420
        %v2282 = vmul.f32 %v2280, %v418
        %v2285 = vcombine.low %v2281, %v2281
        %v2286 = vcombine.low %v2282, %v2282
        %2287 = vrot.lane.b32.xlu0 %v2285, 1
        %v2288 = vpop.permute.xlu0 %2287
        %2289 = vrot.lane.b32.xlu0 %v2281, 1
        %v2290 = vpop.permute.xlu0 %2289
        %2291 = vrot.lane.b32.xlu0 %v2286, 1
        %v2292 = vpop.permute.xlu0 %2291
        %v2293 = vsel %vm435, %v2288, %v2290
        %v2294 = vsel %vm435, %v2290, %v2292
        %2297 = vst [vmem:[#allocation3 + $0x10] sm:$0xf0] %v2293
        %2298 = vst [vmem:[#allocation3 + $0x18] sm:$0xf0] %v2294
        %v2299 = vld [vmem:[#allocation2 + $0x4] sm:$0xff]
        %v2301 = vcombine.high %v2299, %v2299
        %2303 = vst [vmem:[#allocation3 + $0x20] sm:$0xf] %v2299
        %2304 = vst [vmem:[#allocation3 + $0x28] sm:$0xf] %v2301
        %v2305 = vld [vmem:[#allocation2 + $0x4] sm:$0xff]
        %v2306 = vld [vmem:[#allocation2 + $0xc] sm:$0xf]
        %v2307 = vmul.f32 %v2305, %v453
        %v2308 = vmul.f32 %v2306, %v452
        %v2311 = vcombine.low %v2307, %v2307
        %v2312 = vcombine.low %v2308, %v2308
        %2313 = vrot.lane.b32.xlu0 %v2311, 127
        %v2314 = vpop.permute.xlu0 %2313
        %2315 = vrot.lane.b32.xlu0 %v2307, 127
        %v2316 = vpop.permute.xlu0 %2315
        %2317 = vrot.lane.b32.xlu0 %v2312, 127
        %v2318 = vpop.permute.xlu0 %2317
        %v2319 = vsel %vm419, %v2314, %v2316
        %v2320 = vsel %vm419, %v2316, %v2318
        %2323 = vst [vmem:[#allocation3 + $0x20] sm:$0xf0] %v2319
        %2324 = vst [vmem:[#allocation3 + $0x28] sm:$0xf0] %v2320
        %v2325 = vld [vmem:[#allocation2 + $0x4] sm:$0xff]
        %v2326 = vld [vmem:[#allocation2 + $0xc] sm:$0xf]
        %v2327 = vmul.f32 %v2325, %v479
        %v2328 = vmul.f32 %v2326, %v478
        %v2331 = vcombine.high %v2327, %v2327
        %2332 = vrot.lane.b32.xlu0 %v2327, 113
        %v2333 = vpop.permute.xlu0 %2332
        %2334 = vrot.lane.b32.xlu0 %v2331, 113
        %v2335 = vpop.permute.xlu0 %2334
        %2336 = vrot.lane.b32.xlu0 %v2328, 113
        %v2337 = vpop.permute.xlu0 %2336
        %v2338 = vsel %vm392, %v2333, %v2335
        %v2339 = vsel %vm392, %v2335, %v2337
        %2342 = vst [vmem:[#allocation3 + $0x30] sm:$0xf] %v2338
        %2343 = vst [vmem:[#allocation3 + $0x38] sm:$0xf] %v2339
        %v2344 = vld [vmem:[#allocation2 + $0x4] sm:$0xff]
        %v2345 = vld [vmem:[#allocation2 + $0xc] sm:$0xf]
        %v2348 = vcombine.low %v2344, %v2344
        %v2349 = vcombine.low %v2345, %v2345
        %2350 = vrot.lane.b32.xlu0 %v2348, 112
        %v2351 = vpop.permute.xlu0 %2350
        %2352 = vrot.lane.b32.xlu0 %v2344, 112
        %v2353 = vpop.permute.xlu0 %2352
        %2354 = vrot.lane.b32.xlu0 %v2349, 112
        %v2355 = vpop.permute.xlu0 %2354
        %v2356 = vsel %vm511, %v2351, %v2353
        %v2357 = vsel %vm511, %v2353, %v2355
        %2360 = vst [vmem:[#allocation3 + $0x30] sm:$0xf0] %v2356
        %2361 = vst [vmem:[#allocation3 + $0x38] sm:$0xf0] %v2357
        %v2362 = vld [vmem:[#allocation2 + $0x4] sm:$0xff]
        %v2363 = vld [vmem:[#allocation2 + $0xc] sm:$0xf]
        %v2364 = vmul.f32 %v2362, %v523
        %v2365 = vmul.f32 %v2363, %v522
        %v2368 = vcombine.high %v2364, %v2364
        %2369 = vrot.lane.b32.xlu0 %v2364, 111
        %v2370 = vpop.permute.xlu0 %2369
        %2371 = vrot.lane.b32.xlu0 %v2368, 111
        %v2372 = vpop.permute.xlu0 %2371
        %2373 = vrot.lane.b32.xlu0 %v2365, 111
        %v2374 = vpop.permute.xlu0 %2373
        %v2375 = vsel %vm343, %v2370, %v2372
        %v2376 = vsel %vm343, %v2372, %v2374
        %2379 = vst [vmem:[#allocation3 + $0x40] sm:$0xf] %v2375
        %2380 = vst [vmem:[#allocation3 + $0x48] sm:$0xf] %v2376
        %v2381 = vld [vmem:[%s1855] sm:$0xf]
        %v2382 = vld [vmem:[#allocation3] sm:$0xff]
        %v2383 = vld [vmem:[#allocation3 + $0x8] sm:$0xff]
        %v2384 = vld [vmem:[#allocation3 + $0x10] sm:$0xff]
        %v2385 = vld [vmem:[#allocation3 + $0x18] sm:$0xff]
        %v2386 = vld [vmem:[#allocation3 + $0x20] sm:$0xff]
        %v2387 = vld [vmem:[#allocation3 + $0x28] sm:$0xff]
        %v2388 = vld [vmem:[#allocation3 + $0x30] sm:$0xff]
        %v2389 = vld [vmem:[#allocation3 + $0x38] sm:$0xff]
        %v2390 = vld [vmem:[#allocation3 + $0x40] sm:$0xf]
        %v2391 = vld [vmem:[#allocation3 + $0x48] sm:$0xf]
        %v2392 = vld [vmem:[%s1867] sm:$0xf]
        %2394 = vset.pattern.permute.xlu0 0
        %2395 = vperm.xlu0 %2394, %v2392
        %v2396 = vpop.permute.xlu0 %2395
        %v2399 = vsel %vm560, %v2381, 0
        %v2402 = vsel %vm564, %v2390, 0
        %v2405 = vsel %vm564, %v2391, 0
        %2407 = vmatprep.subr.mxu0 0.0
        %2408 = vmatpush1.msra.mxu0 0.0
        %2409 = vmatprep.subr.mxu0 0.0
        %2410 = vmatpush1.msra.mxu0 0.0
        %2411 = vmatprep.subr.mxu0 0.0
        %2412 = vmatpush1.msra.mxu0 0.0
        %2413 = vmatprep.subr.mxu0 0.0
        %2414 = vmatpush1.msra.mxu0 0.0
        %2415 = vmatprep.subr.mxu0 0.0
        %2416 = vmatpush1.msra.mxu0 0.0
        %2417 = vmatprep.subr.mxu0 0.0
        %2418 = vmatpush1.msra.mxu0 0.0
        %2419 = vmatprep.subr.mxu0 0.0
        %2420 = vmatpush1.msra.mxu0 0.0
        %2421 = vmatprep.subr.mxu0 0.0
        %2422 = vmatpush1.msra.mxu0 0.0
        %2423 = vmatprep.subr.mxu0 0.0
        %2424 = vmatpush1.msra.mxu0 0.0
        %2425 = vmatprep.subr.mxu0 0.0
        %2426 = vmatpush1.msra.mxu0 0.0
        %2427 = vmatprep.subr.mxu0 0.0
        %2428 = vmatpush1.msra.mxu0 0.0
        %2429 = vmatprep.subr.mxu0 %v2405
        %2430 = vmatpush1.msra.mxu0 %v2402
        %2431 = vmatprep.subr.mxu0 %v2389
        %2432 = vmatpush1.msra.mxu0 %v2388
        %2433 = vmatprep.subr.mxu0 %v2387
        %2434 = vmatpush1.msra.mxu0 %v2386
        %2435 = vmatprep.subr.mxu0 %v2385
        %2436 = vmatpush1.msra.mxu0 %v2384
        %2437 = vmatprep.subr.mxu0 %v2383
        %2438 = vmatpush1.msra.mxu0 %v2382
        %2439 = vmatprep.subr.mxu0 0.0
        %2440 = vmatpush2.msra.mxu0 0.0
        %2441 = vmatprep.subr.mxu0 0.0
        %2442 = vmatpush2.msra.mxu0 0.0
        %2443 = vmatprep.subr.mxu0 0.0
        %2444 = vmatpush2.msra.mxu0 0.0
        %2445 = vmatprep.subr.mxu0 0.0
        %2446 = vmatpush2.msra.mxu0 0.0
        %2447 = vmatprep.subr.mxu0 0.0
        %2448 = vmatpush2.msra.mxu0 0.0
        %2449 = vmatprep.subr.mxu0 0.0
        %2450 = vmatpush2.msra.mxu0 0.0
        %2451 = vmatprep.subr.mxu0 0.0
        %2452 = vmatpush2.msra.mxu0 0.0
        %2453 = vmatprep.subr.mxu0 0.0
        %2454 = vmatpush2.msra.mxu0 0.0
        %2455 = vmatprep.subr.mxu0 0.0
        %2456 = vmatpush2.msra.mxu0 0.0
        %2457 = vmatprep.subr.mxu0 0.0
        %2458 = vmatpush2.msra.mxu0 0.0
        %2459 = vmatprep.subr.mxu0 0.0
        %2460 = vmatpush2.msra.mxu0 0.0
        %2461 = vmatprep.subr.mxu0 0.0
        %2462 = vmatpush2.msra.mxu0 0.0
        %2463 = vmatprep.subr.mxu0 0.0
        %2464 = vmatpush2.msra.mxu0 0.0
        %2465 = vmatprep.subr.mxu0 0.0
        %2466 = vmatpush2.msra.mxu0 0.0
        %2467 = vmatprep.subr.mxu0 0.0
        %2468 = vmatpush2.msra.mxu0 0.0
        %2469 = vmatprep.subr.mxu0 0.0
        %2470 = vmatpush2.msra.mxu0 0.0
        %2471 = vmatprep.mubr.f32.mxu0 0.0
        %2472 = vmatmul.mubr.f32.gmra.mxu0 %v2399
        %v2473 = vpop.f32.mrf.mxu0
        %v2474 = vadd.f32 %v2396, %v2473
        %v2475 = vpop.f32.mrf.mxu0
        %v2476 = vadd.f32 %v2396, %v2475
        %2477 = vdwg.mxu0
        %v2478 = vmax.f32 %v2474, 0.0
        %v2479 = vmax.f32 %v2476, 0.0
        %2480 = vst [vmem:[#allocation3] sm:$0xf] %v906
        %2481 = vst [vmem:[#allocation3 + $0x8] sm:$0xf] %v907
        %v2484 = vrot.slane %v2478, 4
        %v2485 = vrot.slane %v2479, 4
        %2488 = vst [vmem:[#allocation3] sm:$0xf0] %v2484
        %2489 = vst [vmem:[#allocation3 + $0x8] sm:$0xf0] %v2485
        %v2490 = vld [vmem:[%s3] sm:$0xf]
        %v2491 = vld [vmem:[#allocation3] sm:$0xff]
        %v2492 = vld [vmem:[#allocation3 + $0x8] sm:$0xff]
        %v2493 = vld [vmem:[%s4] sm:$0xf]
        %2495 = vset.pattern.permute.xlu0 0
        %2496 = vperm.xlu0 %2495, %v2493
        %v2497 = vpop.permute.xlu0 %2496
        %vm2499 = vcmask 64512
        %v2501 = vsel %vm2499, %v2490, 0
        %2503 = vmatprep.subr.mxu0 0.0
        %2504 = vmatpush1.msra.mxu0 0.0
        %2505 = vmatprep.subr.mxu0 0.0
        %2506 = vmatpush1.msra.mxu0 0.0
        %2507 = vmatprep.subr.mxu0 0.0
        %2508 = vmatpush1.msra.mxu0 0.0
        %2509 = vmatprep.subr.mxu0 0.0
        %2510 = vmatpush1.msra.mxu0 0.0
        %2511 = vmatprep.subr.mxu0 0.0
        %2512 = vmatpush1.msra.mxu0 0.0
        %2513 = vmatprep.subr.mxu0 0.0
        %2514 = vmatpush1.msra.mxu0 0.0
        %2515 = vmatprep.subr.mxu0 0.0
        %2516 = vmatpush1.msra.mxu0 0.0
        %2517 = vmatprep.subr.mxu0 0.0
        %2518 = vmatpush1.msra.mxu0 0.0
        %2519 = vmatprep.subr.mxu0 0.0
        %2520 = vmatpush1.msra.mxu0 0.0
        %2521 = vmatprep.subr.mxu0 0.0
        %2522 = vmatpush1.msra.mxu0 0.0
        %2523 = vmatprep.subr.mxu0 0.0
        %2524 = vmatpush1.msra.mxu0 0.0
        %2525 = vmatprep.subr.mxu0 0.0
        %2526 = vmatpush1.msra.mxu0 0.0
        %2527 = vmatprep.subr.mxu0 0.0
        %2528 = vmatpush1.msra.mxu0 0.0
        %2529 = vmatprep.subr.mxu0 0.0
        %2530 = vmatpush1.msra.mxu0 0.0
        %2531 = vmatprep.subr.mxu0 0.0
        %2532 = vmatpush1.msra.mxu0 0.0
        %2533 = vmatprep.subr.mxu0 %v2492
        %2534 = vmatpush1.msra.mxu0 %v2491
        %2535 = vmatprep.subr.mxu0 0.0
        %2536 = vmatpush2.msra.mxu0 0.0
        %2537 = vmatprep.subr.mxu0 0.0
        %2538 = vmatpush2.msra.mxu0 0.0
        %2539 = vmatprep.subr.mxu0 0.0
        %2540 = vmatpush2.msra.mxu0 0.0
        %2541 = vmatprep.subr.mxu0 0.0
        %2542 = vmatpush2.msra.mxu0 0.0
        %2543 = vmatprep.subr.mxu0 0.0
        %2544 = vmatpush2.msra.mxu0 0.0
        %2545 = vmatprep.subr.mxu0 0.0
        %2546 = vmatpush2.msra.mxu0 0.0
        %2547 = vmatprep.subr.mxu0 0.0
        %2548 = vmatpush2.msra.mxu0 0.0
        %2549 = vmatprep.subr.mxu0 0.0
        %2550 = vmatpush2.msra.mxu0 0.0
        %2551 = vmatprep.subr.mxu0 0.0
        %2552 = vmatpush2.msra.mxu0 0.0
        %2553 = vmatprep.subr.mxu0 0.0
        %2554 = vmatpush2.msra.mxu0 0.0
        %2555 = vmatprep.subr.mxu0 0.0
        %2556 = vmatpush2.msra.mxu0 0.0
        %2557 = vmatprep.subr.mxu0 0.0
        %2558 = vmatpush2.msra.mxu0 0.0
        %2559 = vmatprep.subr.mxu0 0.0
        %2560 = vmatpush2.msra.mxu0 0.0
        %2561 = vmatprep.subr.mxu0 0.0
        %2562 = vmatpush2.msra.mxu0 0.0
        %2563 = vmatprep.subr.mxu0 0.0
        %2564 = vmatpush2.msra.mxu0 0.0
        %2565 = vmatprep.subr.mxu0 0.0
        %2566 = vmatpush2.msra.mxu0 0.0
        %2567 = vmatprep.mubr.f32.mxu0 0.0
        %2568 = vmatmul.mubr.f32.gmra.mxu0 %v2501
        %v2569 = vpop.f32.mrf.mxu0
        %v2570 = vadd.f32 %v2497, %v2569
        %v2571 = vpop.f32.mrf.mxu0
        %v2572 = vadd.f32 %v2497, %v2571
        %2573 = vdwg.mxu0
        %v2574 = vmax.f32 %v2570, 0.0
        %v2575 = vmax.f32 %v2572, 0.0
        %v2576 = vld [vmem:[%s5] sm:$0xf]
        %v2577 = vld [vmem:[%s6] sm:$0xf]
        %2579 = vset.pattern.permute.xlu0 0
        %2580 = vperm.xlu0 %2579, %v2577
        %v2581 = vpop.permute.xlu0 %2580
        %v2584 = vcombine.high %v333, %v333
        %vm2585 = vcmask 31744
        %v2587 = vsel %vm2585, %v2576, 0
        %v2589 = vsel %vm564, %v333, 0
        %v2591 = vsel %vm564, %v2584, 0
        %2593 = vmatprep.subr.mxu0 0.0
        %2594 = vmatpush1.msra.mxu0 0.0
        %2595 = vmatprep.subr.mxu0 0.0
        %2596 = vmatpush1.msra.mxu0 0.0
        %2597 = vmatprep.subr.mxu0 0.0
        %2598 = vmatpush1.msra.mxu0 0.0
        %2599 = vmatprep.subr.mxu0 0.0
        %2600 = vmatpush1.msra.mxu0 0.0
        %2601 = vmatprep.subr.mxu0 0.0
        %2602 = vmatpush1.msra.mxu0 0.0
        %2603 = vmatprep.subr.mxu0 0.0
        %2604 = vmatpush1.msra.mxu0 0.0
        %2605 = vmatprep.subr.mxu0 0.0
        %2606 = vmatpush1.msra.mxu0 0.0
        %2607 = vmatprep.subr.mxu0 0.0
        %2608 = vmatpush1.msra.mxu0 0.0
        %2609 = vmatprep.subr.mxu0 0.0
        %2610 = vmatpush1.msra.mxu0 0.0
        %2611 = vmatprep.subr.mxu0 0.0
        %2612 = vmatpush1.msra.mxu0 0.0
        %2613 = vmatprep.subr.mxu0 0.0
        %2614 = vmatpush1.msra.mxu0 0.0
        %2615 = vmatprep.subr.mxu0 0.0
        %2616 = vmatpush1.msra.mxu0 0.0
        %2617 = vmatprep.subr.mxu0 0.0
        %2618 = vmatpush1.msra.mxu0 0.0
        %2619 = vmatprep.subr.mxu0 0.0
        %2620 = vmatpush1.msra.mxu0 0.0
        %2621 = vmatprep.subr.mxu0 0.0
        %2622 = vmatpush1.msra.mxu0 0.0
        %2623 = vmatprep.subr.mxu0 %v2591
        %2624 = vmatpush1.msra.mxu0 %v2589
        %2625 = vmatprep.subr.mxu0 0.0
        %2626 = vmatpush2.msra.mxu0 0.0
        %2627 = vmatprep.subr.mxu0 0.0
        %2628 = vmatpush2.msra.mxu0 0.0
        %2629 = vmatprep.subr.mxu0 0.0
        %2630 = vmatpush2.msra.mxu0 0.0
        %2631 = vmatprep.subr.mxu0 0.0
        %2632 = vmatpush2.msra.mxu0 0.0
        %2633 = vmatprep.subr.mxu0 0.0
        %2634 = vmatpush2.msra.mxu0 0.0
        %2635 = vmatprep.subr.mxu0 0.0
        %2636 = vmatpush2.msra.mxu0 0.0
        %2637 = vmatprep.subr.mxu0 0.0
        %2638 = vmatpush2.msra.mxu0 0.0
        %2639 = vmatprep.subr.mxu0 0.0
        %2640 = vmatpush2.msra.mxu0 0.0
        %2641 = vmatprep.subr.mxu0 0.0
        %2642 = vmatpush2.msra.mxu0 0.0
        %2643 = vmatprep.subr.mxu0 0.0
        %2644 = vmatpush2.msra.mxu0 0.0
        %2645 = vmatprep.subr.mxu0 0.0
        %2646 = vmatpush2.msra.mxu0 0.0
        %2647 = vmatprep.subr.mxu0 0.0
        %2648 = vmatpush2.msra.mxu0 0.0
        %2649 = vmatprep.subr.mxu0 0.0
        %2650 = vmatpush2.msra.mxu0 0.0
        %2651 = vmatprep.subr.mxu0 0.0
        %2652 = vmatpush2.msra.mxu0 0.0
        %2653 = vmatprep.subr.mxu0 0.0
        %2654 = vmatpush2.msra.mxu0 0.0
        %2655 = vmatprep.subr.mxu0 0.0
        %2656 = vmatpush2.msra.mxu0 0.0
        %2657 = vmatprep.mubr.f32.mxu0 0.0
        %2658 = vmatmul.mubr.f32.gmra.mxu0 %v2587
        %v2659 = vpop.f32.mrf.mxu0
        %v2660 = vadd.f32 %v2581, %v2659
        %v2661 = vpop.f32.mrf.mxu0
        %v2662 = vadd.f32 %v2581, %v2661
        %2663 = vdwg.mxu0
        %v2664 = vadd.f32 %v2574, %v2660
        %v2665 = vadd.f32 %v2575, %v2662
        %v2668 = vcombine.low %v2664, %v2665
        %2670 = vst [vmem:[%s286] sm:$0xff] %v2668
        %s2671 = sand.u32 %s182, 1
        %s2672 = scalar_lea.sflag [#allocation6], %s2671
        %s2673 = sand.u32 %s182, 1
        %s2674 = smul.addr %s2673, 8
        %s2675 = scalar_lea.vmem [#allocation7], %s2674
        // Predicated region
        $region53: #{tpu_custom_call.1} parent=47 // pred_check
          %p2676 = pneg %p192
        $region54: #{tpu_custom_call.1} parent=47 // pred_check_branch
          %2678 = sbr.rel (%p2676) target = $region56
        $region55: #{tpu_custom_call.1} parent=47 // pred_region
          %s2680 = ssub.s32 128, 128
          %2681 = vsyncadd %s2672, %s2680
          %s2682 = smul.addr %s22, 2
          %s2683 = smul.addr %s2682, 64
          %s2684 = scalar_lea.hbm %s7, %s2683
          %s2686 = sshll.u32 %s2675, 4
          %s2687 = int_to_ptr.vmem [resolvable:$true] %s2686
          %2689 = dma.vmem_to_hbm [thread:$0]  %s2687, 128, %s2684, %s2672
        $region56: #{tpu_custom_call.1} parent=47 // pred_fallthru
          _
      $region48: #{tpu_custom_call.1} parent=5 // pred_fallthru
        _
      %p2690 = scmp.le.s32.totalorder 2, %s17
      // Predicated region
      $region57: #{tpu_custom_call.1} parent=5 // pred_check
        %p2691 = pneg %p2690
      $region58: #{tpu_custom_call.1} parent=5 // pred_check_branch
        %2693 = sbr.rel (%p2691) target = $region60
      $region59: #{tpu_custom_call.1} parent=5 // pred_region
        %s2694 = ssub.s32 %s17, 2
        // Predicated region
        $region61: #{tpu_custom_call.1} parent=59 // pred_check
          %p2695 = pneg %p198
        $region62: #{tpu_custom_call.1} parent=59 // pred_check_branch
          %2697 = sbr.rel (%p2695) target = $region64
        $region63: #{tpu_custom_call.1} parent=59 // pred_region
          %s2698 = sand.u32 %s183, 1
          %s2699 = scalar_lea.sflag [#allocation6], %s2698
          %s2700 = sand.u32 %s183, 1
          %s2701 = smul.addr %s2700, 8
          %s2702 = scalar_lea.vmem [#allocation7], %s2701
          %2703 = dma.done %s2699, 128
        $region64: #{tpu_custom_call.1} parent=59 // pred_fallthru
          _
      $region60: #{tpu_custom_call.1} parent=5 // pred_fallthru
        _
    $region6: #{tpu_custom_call.1} parent=1 // loop_footer
      %s21 = sadd.s32 1, %s17
    $region7: #{tpu_custom_call.1} parent=1 // loop_footer_branch
      %16 = sbr.rel target = $region3
    $region8: #{tpu_custom_call.1} parent=1 // loop_exit
      _
    %2704 = vsyncpa [#allocation5], 1
    %s2705 = scalar_lea.sflag [#allocation5], 1
    %2706 = vsyncpa %s2705, 1
    %2707 = vsyncpa [#allocation6], 1
    %s2708 = scalar_lea.sflag [#allocation6], 1
    %2709 = vsyncpa %s2708, 1

</llo_original>
